<compile_context>
chip_gen: v7x
topology: tpu7x:2x2x1
jax: 0.10.0
libtpu: 0.0.40
codegen_flags: <defaults>
</compile_context>

<pallas_src>
import functools
import math

import jax
import jax.numpy as jnp
from jax.experimental import pallas as pl
from jax.experimental.pallas import tpu as pltpu

# ----------------------------- small ViT config ------------------------------
BATCH = 2
IN_CH = 3
IMG = 16
PATCH = 8
HIDDEN = 32
N_HEADS = 4
HEAD_DIM = HIDDEN // N_HEADS
MLP_DIM = 4 * HIDDEN                 # 128
N_LAYERS = 2
N_PATCHES = (IMG // PATCH) ** 2      # 4
SEQ = N_PATCHES + 1                  # 5 (CLS + patches)
SEQ_PAD = 8                          # pad tokens to the 8-sublane granule
CPP = IN_CH * PATCH * PATCH          # 192 (conv-as-matmul contraction dim)
QKV_DIM = 3 * HIDDEN                 # 96
LN_EPS = 1e-12                       # HF ViT layer_norm_eps
HEAD_PAD = 128                       # fused classifier-head lane width

NUM_CLASSES = {
    "gender": 5,
    "article_type": 10,
    "color": 8,
    "season": 4,
    "usage": 6,
}

# column offsets of each head inside the fused / padded logits slab
HEAD_OFFSETS = {}
_off = 0
for _name, _nc in NUM_CLASSES.items():
    HEAD_OFFSETS[_name] = (_off, _off + _nc)
    _off += _nc
TOTAL_CLASSES = _off  # 33 (<= HEAD_PAD)


# ------------------------------ fused ViT kernel ------------------------------
def _vit_kernel(
    patches_ref,            # (SEQ_PAD, CPP)         per-batch padded patches
    patch_w_ref,            # (CPP, HIDDEN)
    base_ref,               # (SEQ_PAD, HIDDEN)      cls/pos/patch-bias baseline
    ln1_g_ref, ln1_b_ref,   # (N_LAYERS, HIDDEN)
    w_qkv_ref,              # (N_LAYERS, HIDDEN, QKV_DIM)
    b_qkv_ref,              # (N_LAYERS, QKV_DIM)
    w_o_ref,                # (N_LAYERS, HIDDEN, HIDDEN)
    b_o_ref,                # (N_LAYERS, HIDDEN)
    ln2_g_ref, ln2_b_ref,   # (N_LAYERS, HIDDEN)
    w_fc1_ref,              # (N_LAYERS, HIDDEN, MLP_DIM)
    b_fc1_ref,              # (N_LAYERS, MLP_DIM)
    w_fc2_ref,              # (N_LAYERS, MLP_DIM, HIDDEN)
    b_fc2_ref,              # (N_LAYERS, HIDDEN)
    ln_f_g_ref, ln_f_b_ref, # (1, HIDDEN)
    head_w_ref,             # (HIDDEN, HEAD_PAD)
    head_b_ref,             # (1, HEAD_PAD)
    out_ref,                # (SEQ_PAD, HEAD_PAD)    only row 0 is meaningful
):
    f32 = jnp.float32

    def layer_norm(x, g, b):
        mu = jnp.mean(x, axis=-1, keepdims=True)
        xc = x - mu
        var = jnp.mean(xc * xc, axis=-1, keepdims=True)
        return xc * jax.lax.rsqrt(var + LN_EPS) * g + b

    # key-padding mask: key positions >= SEQ get a large negative score bias.
    col = jax.lax.broadcasted_iota(jnp.int32, (SEQ_PAD, SEQ_PAD), 1)
    neg_mask = jnp.where(col < SEQ, 0.0, -1e30).astype(f32)

    scale = f32(1.0 / math.sqrt(HEAD_DIM))
    inv_sqrt2 = f32(0.7071067811865476)

    # --- patch embedding + CLS/pos (pad/cls rows of `patches` are zero, so the
    #     bias / cls / position terms come entirely from `base`) ---
    h = jnp.dot(patches_ref[...], patch_w_ref[...],
                preferred_element_type=f32) + base_ref[...]        # (SEQ_PAD, H)

    # --- encoder layers (statically unrolled, everything stays in VMEM) ---
    for l in range(N_LAYERS):
        # pre-LN -> fused QKV projection
        hn = layer_norm(h, ln1_g_ref[l:l + 1, :], ln1_b_ref[l:l + 1, :])
        qkv = jnp.dot(hn, w_qkv_ref[l], preferred_element_type=f32)
        qkv = qkv + b_qkv_ref[l:l + 1, :]                          # (SEQ_PAD, 3H)

        # multi-head attention, heads unrolled (tiny 8x8 tiles, all in vregs)
        ctx_heads = []
        for hh in range(N_HEADS):
            q = qkv[:, hh * HEAD_DIM:(hh + 1) * HEAD_DIM]
            k = qkv[:, HIDDEN + hh * HEAD_DIM:HIDDEN + (hh + 1) * HEAD_DIM]
            v = qkv[:, 2 * HIDDEN + hh * HEAD_DIM:2 * HIDDEN + (hh + 1) * HEAD_DIM]
            s = jax.lax.dot_general(
                q, k, (((1,), (1,)), ((), ())),
                preferred_element_type=f32) * scale + neg_mask     # (S, S)
            s = s - jnp.max(s, axis=-1, keepdims=True)
            p = jnp.exp(s)
            p = p / jnp.sum(p, axis=-1, keepdims=True)
            ctx_heads.append(jnp.dot(p, v, preferred_element_type=f32))
        ctx = jnp.concatenate(ctx_heads, axis=1)                   # (SEQ_PAD, H)

        attn_out = jnp.dot(ctx, w_o_ref[l], preferred_element_type=f32)
        h = h + attn_out + b_o_ref[l:l + 1, :]

        # pre-LN -> MLP (exact erf GELU, matches HF "gelu")
        hn2 = layer_norm(h, ln2_g_ref[l:l + 1, :], ln2_b_ref[l:l + 1, :])
        m = jnp.dot(hn2, w_fc1_ref[l], preferred_element_type=f32)
        m = m + b_fc1_ref[l:l + 1, :]                              # (SEQ_PAD, MLP)
        m = 0.5 * m * (1.0 + jax.lax.erf(m * inv_sqrt2))
        h = h + jnp.dot(m, w_fc2_ref[l], preferred_element_type=f32) \
              + b_fc2_ref[l:l + 1, :]

    # --- final LayerNorm -> CLS token -> fused classifier heads ---
    last = layer_norm(h, ln_f_g_ref[...], ln_f_b_ref[...])
    cls_tok = last[0:1, :]                                         # (1, HIDDEN)
    logits = jnp.dot(cls_tok, head_w_ref[...],
                     preferred_element_type=f32) + head_b_ref[...] # (1, HEAD_PAD)

    # lane-dense, sublane-aligned (8,128) store; host reads row 0 only.
    out_ref[...] = jnp.broadcast_to(logits, (SEQ_PAD, HEAD_PAD))


# --------------------------- parameter construction --------------------------
def init_params(key):
    """Synthetic weights, same structure as the PyTorch module (scaled down)."""
    def nrm(k, shape, scale=0.02):
        return (scale * jax.random.normal(k, shape)).astype(jnp.float32)

    keys = iter(jax.random.split(key, 256))
    p = {}
    conv_w = nrm(next(keys), (HIDDEN, IN_CH, PATCH, PATCH))
    p["patch_w"] = conv_w.reshape(HIDDEN, CPP).T          # (CPP, HIDDEN)
    p["patch_b"] = jnp.zeros((HIDDEN,), jnp.float32)
    p["cls"] = nrm(next(keys), (1, 1, HIDDEN))
    p["pos"] = nrm(next(keys), (1, SEQ, HIDDEN))

    layers = []
    for _ in range(N_LAYERS):
        layers.append({
            "ln1_g": jnp.ones((HIDDEN,), jnp.float32),
            "ln1_b": jnp.zeros((HIDDEN,), jnp.float32),
            "wq": nrm(next(keys), (HIDDEN, HIDDEN)),
            "bq": jnp.zeros((HIDDEN,), jnp.float32),
            "wk": nrm(next(keys), (HIDDEN, HIDDEN)),
            "bk": jnp.zeros((HIDDEN,), jnp.float32),
            "wv": nrm(next(keys), (HIDDEN, HIDDEN)),
            "bv": jnp.zeros((HIDDEN,), jnp.float32),
            "wo": nrm(next(keys), (HIDDEN, HIDDEN)),
            "bo": jnp.zeros((HIDDEN,), jnp.float32),
            "ln2_g": jnp.ones((HIDDEN,), jnp.float32),
            "ln2_b": jnp.zeros((HIDDEN,), jnp.float32),
            "w_fc1": nrm(next(keys), (HIDDEN, MLP_DIM)),
            "b_fc1": jnp.zeros((MLP_DIM,), jnp.float32),
            "w_fc2": nrm(next(keys), (MLP_DIM, HIDDEN)),
            "b_fc2": jnp.zeros((HIDDEN,), jnp.float32),
        })
    p["layers"] = layers

    p["ln_f_g"] = jnp.ones((HIDDEN,), jnp.float32)
    p["ln_f_b"] = jnp.zeros((HIDDEN,), jnp.float32)

    for name, nc in NUM_CLASSES.items():
        p[f"head_{name}_w"] = nrm(next(keys), (HIDDEN, nc))
        p[f"head_{name}_b"] = jnp.zeros((nc,), jnp.float32)
    return p


def pack_params(p):
    """Fuse / pad / stack parameters into the layout the kernel consumes."""
    packed = {"patch_w": p["patch_w"]}

    # baseline token tensor: row0 = cls + pos[0]; rows 1..SEQ-1 = pos + patch_b;
    # pad rows stay zero.
    pos = p["pos"][0]                                     # (SEQ, HIDDEN)
    base = jnp.zeros((SEQ_PAD, HIDDEN), jnp.float32)
    base = base.at[0, :].set(p["cls"].reshape(HIDDEN) + pos[0])
    base = base.at[1:SEQ, :].set(pos[1:SEQ] + p["patch_b"][None, :])
    packed["base"] = base

    def stack(fn):
        return jnp.stack([fn(layer) for layer in p["layers"]], axis=0)

    packed["ln1_g"] = stack(lambda l: l["ln1_g"])
    packed["ln1_b"] = stack(lambda l: l["ln1_b"])
    packed["w_qkv"] = stack(
        lambda l: jnp.concatenate([l["wq"], l["wk"], l["wv"]], axis=1))
    packed["b_qkv"] = stack(
        lambda l: jnp.concatenate([l["bq"], l["bk"], l["bv"]], axis=0))
    packed["w_o"] = stack(lambda l: l["wo"])
    packed["b_o"] = stack(lambda l: l["bo"])
    packed["ln2_g"] = stack(lambda l: l["ln2_g"])
    packed["ln2_b"] = stack(lambda l: l["ln2_b"])
    packed["w_fc1"] = stack(lambda l: l["w_fc1"])
    packed["b_fc1"] = stack(lambda l: l["b_fc1"])
    packed["w_fc2"] = stack(lambda l: l["w_fc2"])
    packed["b_fc2"] = stack(lambda l: l["b_fc2"])
    packed["ln_f_g"] = p["ln_f_g"].reshape(1, HIDDEN)
    packed["ln_f_b"] = p["ln_f_b"].reshape(1, HIDDEN)

    head_w = jnp.zeros((HIDDEN, HEAD_PAD), jnp.float32)
    head_b = jnp.zeros((1, HEAD_PAD), jnp.float32)
    for name, (a, b) in HEAD_OFFSETS.items():
        head_w = head_w.at[:, a:b].set(p[f"head_{name}_w"])
        head_b = head_b.at[0, a:b].set(p[f"head_{name}_b"])
    packed["head_w"] = head_w
    packed["head_b"] = head_b
    return packed


# -------------------------------- forward pass --------------------------------
@jax.jit
def vit_model_forward(x, pp):
    """x: (B, C, H, W) float32 NCHW -> dict of logits (matches the torch module)."""
    B, C, H, W = x.shape
    nh, nw = H // PATCH, W // PATCH

    # Conv2d(kernel=P, stride=P) == patchify + matmul; (c, kh, kw) flatten order
    # matches torch conv-weight flattening; token order matches HF flatten(2).T.
    patches = (
        x.reshape(B, C, nh, PATCH, nw, PATCH)
        .transpose(0, 2, 4, 1, 3, 5)
        .reshape(B, nh * nw, CPP)
    )
    # pad token axis to SEQ_PAD; row 0 (CLS) and pad rows are zero.
    patches_pad = jnp.zeros((B, SEQ_PAD, CPP), jnp.float32)
    patches_pad = patches_pad.at[:, 1:1 + N_PATCHES, :].set(patches)

    const2 = lambda blk: pl.BlockSpec(blk, lambda b: (0, 0))
    const3 = lambda blk: pl.BlockSpec(blk, lambda b: (0, 0, 0))

    out = pl.pallas_call(
        _vit_kernel,
        out_shape=jax.ShapeDtypeStruct((B, SEQ_PAD, HEAD_PAD), jnp.float32),
        grid=(B,),
        in_specs=[
            pl.BlockSpec((None, SEQ_PAD, CPP), lambda b: (b, 0, 0)),  # patches
            const2((CPP, HIDDEN)),                                    # patch_w
            const2((SEQ_PAD, HIDDEN)),                                # base
            const2((N_LAYERS, HIDDEN)),                               # ln1_g
            const2((N_LAYERS, HIDDEN)),                               # ln1_b
            const3((N_LAYERS, HIDDEN, QKV_DIM)),                      # w_qkv
            const2((N_LAYERS, QKV_DIM)),                              # b_qkv
            const3((N_LAYERS, HIDDEN, HIDDEN)),                       # w_o
            const2((N_LAYERS, HIDDEN)),                               # b_o
            const2((N_LAYERS, HIDDEN)),                               # ln2_g
            const2((N_LAYERS, HIDDEN)),                               # ln2_b
            const3((N_LAYERS, HIDDEN, MLP_DIM)),                      # w_fc1
            const2((N_LAYERS, MLP_DIM)),                              # b_fc1
            const3((N_LAYERS, MLP_DIM, HIDDEN)),                      # w_fc2
            const2((N_LAYERS, HIDDEN)),                               # b_fc2
            const2((1, HIDDEN)),                                      # ln_f_g
            const2((1, HIDDEN)),                                      # ln_f_b
            const2((HIDDEN, HEAD_PAD)),                               # head_w
            const2((1, HEAD_PAD)),                                    # head_b
        ],
        out_specs=pl.BlockSpec((None, SEQ_PAD, HEAD_PAD), lambda b: (b, 0, 0)),
        compiler_params=pltpu.CompilerParams(
            dimension_semantics=("parallel",)),   # v7x: one batch per TensorCore
    )(
        patches_pad, pp["patch_w"], pp["base"],
        pp["ln1_g"], pp["ln1_b"], pp["w_qkv"], pp["b_qkv"], pp["w_o"], pp["b_o"],
        pp["ln2_g"], pp["ln2_b"], pp["w_fc1"], pp["b_fc1"], pp["w_fc2"], pp["b_fc2"],
        pp["ln_f_g"], pp["ln_f_b"], pp["head_w"], pp["head_b"],
    )

    logits = out[:, 0, :]                                   # (B, HEAD_PAD)
    return {name: logits[:, a:b] for name, (a, b) in HEAD_OFFSETS.items()}


# ------------------------------------ main ------------------------------------
if __name__ == "__main__":
    root = jax.random.PRNGKey(0)
    k_x, k_p = jax.random.split(root)

    x = jax.random.normal(k_x, (BATCH, IN_CH, IMG, IMG), dtype=jnp.float32)
    params = init_params(k_p)
    packed = pack_params(params)

    out = vit_model_forward(x, packed)
    out = jax.block_until_ready(out)

    # basic shape / sanity checks
    for name, nc in NUM_CLASSES.items():
        assert out[name].shape == (BATCH, nc), (name, out[name].shape)
        assert bool(jnp.all(jnp.isfinite(out[name]))), name

    print("KERNEL_OK")
</pallas_src>

<mosaic_0001>
module attributes {stable_mosaic.version = 11 : i64} {
  func.func @_vit_kernel(%arg0: i32, %arg1: memref<1x8x192xf32, #tpu.memory_space<vmem>>, %arg2: memref<192x32xf32, #tpu.memory_space<vmem>>, %arg3: memref<8x32xf32, #tpu.memory_space<vmem>>, %arg4: memref<2x32xf32, #tpu.memory_space<vmem>>, %arg5: memref<2x32xf32, #tpu.memory_space<vmem>>, %arg6: memref<2x32x96xf32, #tpu.memory_space<vmem>>, %arg7: memref<2x96xf32, #tpu.memory_space<vmem>>, %arg8: memref<2x32x32xf32, #tpu.memory_space<vmem>>, %arg9: memref<2x32xf32, #tpu.memory_space<vmem>>, %arg10: memref<2x32xf32, #tpu.memory_space<vmem>>, %arg11: memref<2x32xf32, #tpu.memory_space<vmem>>, %arg12: memref<2x32x128xf32, #tpu.memory_space<vmem>>, %arg13: memref<2x128xf32, #tpu.memory_space<vmem>>, %arg14: memref<2x128x32xf32, #tpu.memory_space<vmem>>, %arg15: memref<2x32xf32, #tpu.memory_space<vmem>>, %arg16: memref<1x32xf32, #tpu.memory_space<vmem>>, %arg17: memref<1x32xf32, #tpu.memory_space<vmem>>, %arg18: memref<32x128xf32, #tpu.memory_space<vmem>>, %arg19: memref<1x128xf32, #tpu.memory_space<vmem>>, %arg20: memref<1x8x128xf32, #tpu.memory_space<vmem>>) attributes {dimension_semantics = [#tpu.dimension_semantics<parallel>], iteration_bounds = array<i64: 2>, scalar_prefetch = 0 : i64, scratch_operands = 0 : i64, tpu.core_type = #tpu.core_type<tc>, window_params = [{transform_indices = @transform_0, window_bounds = array<i64: 1, 8, 192>}, {pipeline_mode = #tpu.pipeline_mode<synchronous>, transform_indices = @transform_1, window_bounds = array<i64: 192, 32>}, {pipeline_mode = #tpu.pipeline_mode<synchronous>, transform_indices = @transform_2, window_bounds = array<i64: 8, 32>}, {pipeline_mode = #tpu.pipeline_mode<synchronous>, transform_indices = @transform_3, window_bounds = array<i64: 2, 32>}, {pipeline_mode = #tpu.pipeline_mode<synchronous>, transform_indices = @transform_4, window_bounds = array<i64: 2, 32>}, {pipeline_mode = #tpu.pipeline_mode<synchronous>, transform_indices = @transform_5, window_bounds = array<i64: 2, 32, 96>}, {pipeline_mode = #tpu.pipeline_mode<synchronous>, transform_indices = @transform_6, window_bounds = array<i64: 2, 96>}, {pipeline_mode = #tpu.pipeline_mode<synchronous>, transform_indices = @transform_7, window_bounds = array<i64: 2, 32, 32>}, {pipeline_mode = #tpu.pipeline_mode<synchronous>, transform_indices = @transform_8, window_bounds = array<i64: 2, 32>}, {pipeline_mode = #tpu.pipeline_mode<synchronous>, transform_indices = @transform_9, window_bounds = array<i64: 2, 32>}, {pipeline_mode = #tpu.pipeline_mode<synchronous>, transform_indices = @transform_10, window_bounds = array<i64: 2, 32>}, {pipeline_mode = #tpu.pipeline_mode<synchronous>, transform_indices = @transform_11, window_bounds = array<i64: 2, 32, 128>}, {pipeline_mode = #tpu.pipeline_mode<synchronous>, transform_indices = @transform_12, window_bounds = array<i64: 2, 128>}, {pipeline_mode = #tpu.pipeline_mode<synchronous>, transform_indices = @transform_13, window_bounds = array<i64: 2, 128, 32>}, {pipeline_mode = #tpu.pipeline_mode<synchronous>, transform_indices = @transform_14, window_bounds = array<i64: 2, 32>}, {pipeline_mode = #tpu.pipeline_mode<synchronous>, transform_indices = @transform_15, window_bounds = array<i64: 1, 32>}, {pipeline_mode = #tpu.pipeline_mode<synchronous>, transform_indices = @transform_16, window_bounds = array<i64: 1, 32>}, {pipeline_mode = #tpu.pipeline_mode<synchronous>, transform_indices = @transform_17, window_bounds = array<i64: 32, 128>}, {pipeline_mode = #tpu.pipeline_mode<synchronous>, transform_indices = @transform_18, window_bounds = array<i64: 1, 128>}, {transform_indices = @transform_19, window_bounds = array<i64: 1, 8, 128>}]} {
    %0 = tpu.iota {dimensions = array<i32: 1>} : vector<8x8xi32>
    %c5_i32 = arith.constant 5 : i32
    %1 = vector.broadcast %c5_i32 : i32 to vector<8x8xi32>
    %2 = arith.cmpi slt, %0, %1 : vector<8x8xi32>
    %cst = arith.constant 0.000000e+00 : f32
    %cst_0 = arith.constant -1.000000e+30 : f32
    %3 = vector.broadcast %cst : f32 to vector<8x8xf32>
    %4 = vector.broadcast %cst_0 : f32 to vector<8x8xf32>
    %5 = arith.select %2, %3, %4 : vector<8x8xi1>, vector<8x8xf32>
    %c0 = arith.constant 0 : index
    %c0_1 = arith.constant 0 : index
    %c0_2 = arith.constant 0 : index
    %6 = vector.load %arg1[%c0, %c0_1, %c0_2] : memref<1x8x192xf32, #tpu.memory_space<vmem>>, vector<1x8x192xf32>
    %7 = vector.shape_cast %6 : vector<1x8x192xf32> to vector<8x192xf32>
    %c0_3 = arith.constant 0 : index
    %c0_4 = arith.constant 0 : index
    %8 = vector.load %arg2[%c0_3, %c0_4] : memref<192x32xf32, #tpu.memory_space<vmem>>, vector<192x32xf32>
    %cst_5 = arith.constant dense<0.000000e+00> : vector<8x32xf32>
    %9 = tpu.matmul %7, %8, %cst_5 {dimension_numbers = #tpu.dot_dimension_numbers<[1], [0], [0], [1], [0, 0, 1, 1], [], []>} : vector<8x192xf32>, vector<192x32xf32>, vector<8x32xf32> -> vector<8x32xf32>
    %c0_6 = arith.constant 0 : index
    %c0_7 = arith.constant 0 : index
    %10 = vector.load %arg3[%c0_6, %c0_7] : memref<8x32xf32, #tpu.memory_space<vmem>>, vector<8x32xf32>
    %11 = arith.addf %9, %10 : vector<8x32xf32>
    %c0_8 = arith.constant 0 : index
    %c0_9 = arith.constant 0 : index
    %12 = vector.load %arg4[%c0_8, %c0_9] : memref<2x32xf32, #tpu.memory_space<vmem>>, vector<1x32xf32>
    %c0_10 = arith.constant 0 : index
    %c0_11 = arith.constant 0 : index
    %13 = vector.load %arg5[%c0_10, %c0_11] : memref<2x32xf32, #tpu.memory_space<vmem>>, vector<1x32xf32>
    %cst_12 = arith.constant dense<0.000000e+00> : vector<8xf32>
    %14 = vector.multi_reduction <add>, %11, %cst_12 [1] : vector<8x32xf32> to vector<8xf32>
    %15 = vector.shape_cast %14 : vector<8xf32> to vector<8x1xf32>
    %cst_13 = arith.constant 3.200000e+01 : f32
    %16 = vector.broadcast %cst_13 : f32 to vector<8x1xf32>
    %17 = arith.divf %15, %16 : vector<8x1xf32>
    %18 = vector.broadcast %17 : vector<8x1xf32> to vector<8x32xf32>
    %19 = arith.subf %11, %18 : vector<8x32xf32>
    %20 = arith.mulf %19, %19 : vector<8x32xf32>
    %cst_14 = arith.constant dense<0.000000e+00> : vector<8xf32>
    %21 = vector.multi_reduction <add>, %20, %cst_14 [1] : vector<8x32xf32> to vector<8xf32>
    %22 = vector.shape_cast %21 : vector<8xf32> to vector<8x1xf32>
    %cst_15 = arith.constant 3.200000e+01 : f32
    %23 = vector.broadcast %cst_15 : f32 to vector<8x1xf32>
    %24 = arith.divf %22, %23 : vector<8x1xf32>
    %cst_16 = arith.constant 9.99999996E-13 : f32
    %25 = vector.broadcast %cst_16 : f32 to vector<8x1xf32>
    %26 = arith.addf %24, %25 : vector<8x1xf32>
    %27 = math.rsqrt %26 : vector<8x1xf32>
    %28 = vector.broadcast %27 : vector<8x1xf32> to vector<8x32xf32>
    %29 = arith.mulf %19, %28 : vector<8x32xf32>
    %30 = vector.broadcast %12 : vector<1x32xf32> to vector<8x32xf32>
    %31 = arith.mulf %29, %30 : vector<8x32xf32>
    %32 = vector.broadcast %13 : vector<1x32xf32> to vector<8x32xf32>
    %33 = arith.addf %31, %32 : vector<8x32xf32>
    %c0_17 = arith.constant 0 : index
    %c0_18 = arith.constant 0 : index
    %c0_19 = arith.constant 0 : index
    %34 = vector.load %arg6[%c0_17, %c0_18, %c0_19] : memref<2x32x96xf32, #tpu.memory_space<vmem>>, vector<1x32x96xf32>
    %35 = vector.shape_cast %34 : vector<1x32x96xf32> to vector<32x96xf32>
    %cst_20 = arith.constant dense<0.000000e+00> : vector<8x96xf32>
    %36 = tpu.matmul %33, %35, %cst_20 {dimension_numbers = #tpu.dot_dimension_numbers<[1], [0], [0], [1], [0, 0, 1, 1], [], []>} : vector<8x32xf32>, vector<32x96xf32>, vector<8x96xf32> -> vector<8x96xf32>
    %c0_21 = arith.constant 0 : index
    %c0_22 = arith.constant 0 : index
    %37 = vector.load %arg7[%c0_21, %c0_22] : memref<2x96xf32, #tpu.memory_space<vmem>>, vector<1x96xf32>
    %38 = vector.broadcast %37 : vector<1x96xf32> to vector<8x96xf32>
    %39 = arith.addf %36, %38 : vector<8x96xf32>
    %40 = vector.extract_strided_slice %39 {offsets = [0, 0], sizes = [8, 8], strides = [1, 1]} : vector<8x96xf32> to vector<8x8xf32>
    %41 = vector.extract_strided_slice %39 {offsets = [0, 32], sizes = [8, 8], strides = [1, 1]} : vector<8x96xf32> to vector<8x8xf32>
    %42 = vector.extract_strided_slice %39 {offsets = [0, 64], sizes = [8, 8], strides = [1, 1]} : vector<8x96xf32> to vector<8x8xf32>
    %cst_23 = arith.constant dense<0.000000e+00> : vector<8x8xf32>
    %43 = tpu.matmul %40, %41, %cst_23 {dimension_numbers = #tpu.dot_dimension_numbers<[1], [1], [0], [0], [0, 0, 1, 0], [], []>} : vector<8x8xf32>, vector<8x8xf32>, vector<8x8xf32> -> vector<8x8xf32>
    %cst_24 = arith.constant 0.353553385 : f32
    %44 = vector.broadcast %cst_24 : f32 to vector<8x8xf32>
    %45 = arith.mulf %43, %44 : vector<8x8xf32>
    %46 = arith.addf %45, %5 : vector<8x8xf32>
    %cst_25 = arith.constant dense<0xFF800000> : vector<8xf32>
    %47 = vector.multi_reduction <maximumf>, %46, %cst_25 [1] : vector<8x8xf32> to vector<8xf32>
    %48 = vector.shape_cast %47 : vector<8xf32> to vector<8x1xf32>
    %49 = vector.broadcast %48 : vector<8x1xf32> to vector<8x8xf32>
    %50 = arith.subf %46, %49 : vector<8x8xf32>
    %51 = math.exp %50 : vector<8x8xf32>
    %cst_26 = arith.constant dense<0.000000e+00> : vector<8xf32>
    %52 = vector.multi_reduction <add>, %51, %cst_26 [1] : vector<8x8xf32> to vector<8xf32>
    %53 = vector.shape_cast %52 : vector<8xf32> to vector<8x1xf32>
    %54 = vector.broadcast %53 : vector<8x1xf32> to vector<8x8xf32>
    %55 = arith.divf %51, %54 : vector<8x8xf32>
    %cst_27 = arith.constant dense<0.000000e+00> : vector<8x8xf32>
    %56 = tpu.matmul %55, %42, %cst_27 {dimension_numbers = #tpu.dot_dimension_numbers<[1], [0], [0], [1], [0, 0, 1, 1], [], []>} : vector<8x8xf32>, vector<8x8xf32>, vector<8x8xf32> -> vector<8x8xf32>
    %57 = vector.extract_strided_slice %39 {offsets = [0, 8], sizes = [8, 8], strides = [1, 1]} : vector<8x96xf32> to vector<8x8xf32>
    %58 = vector.extract_strided_slice %39 {offsets = [0, 40], sizes = [8, 8], strides = [1, 1]} : vector<8x96xf32> to vector<8x8xf32>
    %59 = vector.extract_strided_slice %39 {offsets = [0, 72], sizes = [8, 8], strides = [1, 1]} : vector<8x96xf32> to vector<8x8xf32>
    %cst_28 = arith.constant dense<0.000000e+00> : vector<8x8xf32>
    %60 = tpu.matmul %57, %58, %cst_28 {dimension_numbers = #tpu.dot_dimension_numbers<[1], [1], [0], [0], [0, 0, 1, 0], [], []>} : vector<8x8xf32>, vector<8x8xf32>, vector<8x8xf32> -> vector<8x8xf32>
    %cst_29 = arith.constant 0.353553385 : f32
    %61 = vector.broadcast %cst_29 : f32 to vector<8x8xf32>
    %62 = arith.mulf %60, %61 : vector<8x8xf32>
    %63 = arith.addf %62, %5 : vector<8x8xf32>
    %cst_30 = arith.constant dense<0xFF800000> : vector<8xf32>
    %64 = vector.multi_reduction <maximumf>, %63, %cst_30 [1] : vector<8x8xf32> to vector<8xf32>
    %65 = vector.shape_cast %64 : vector<8xf32> to vector<8x1xf32>
    %66 = vector.broadcast %65 : vector<8x1xf32> to vector<8x8xf32>
    %67 = arith.subf %63, %66 : vector<8x8xf32>
    %68 = math.exp %67 : vector<8x8xf32>
    %cst_31 = arith.constant dense<0.000000e+00> : vector<8xf32>
    %69 = vector.multi_reduction <add>, %68, %cst_31 [1] : vector<8x8xf32> to vector<8xf32>
    %70 = vector.shape_cast %69 : vector<8xf32> to vector<8x1xf32>
    %71 = vector.broadcast %70 : vector<8x1xf32> to vector<8x8xf32>
    %72 = arith.divf %68, %71 : vector<8x8xf32>
    %cst_32 = arith.constant dense<0.000000e+00> : vector<8x8xf32>
    %73 = tpu.matmul %72, %59, %cst_32 {dimension_numbers = #tpu.dot_dimension_numbers<[1], [0], [0], [1], [0, 0, 1, 1], [], []>} : vector<8x8xf32>, vector<8x8xf32>, vector<8x8xf32> -> vector<8x8xf32>
    %74 = vector.extract_strided_slice %39 {offsets = [0, 16], sizes = [8, 8], strides = [1, 1]} : vector<8x96xf32> to vector<8x8xf32>
    %75 = vector.extract_strided_slice %39 {offsets = [0, 48], sizes = [8, 8], strides = [1, 1]} : vector<8x96xf32> to vector<8x8xf32>
    %76 = vector.extract_strided_slice %39 {offsets = [0, 80], sizes = [8, 8], strides = [1, 1]} : vector<8x96xf32> to vector<8x8xf32>
    %cst_33 = arith.constant dense<0.000000e+00> : vector<8x8xf32>
    %77 = tpu.matmul %74, %75, %cst_33 {dimension_numbers = #tpu.dot_dimension_numbers<[1], [1], [0], [0], [0, 0, 1, 0], [], []>} : vector<8x8xf32>, vector<8x8xf32>, vector<8x8xf32> -> vector<8x8xf32>
    %cst_34 = arith.constant 0.353553385 : f32
    %78 = vector.broadcast %cst_34 : f32 to vector<8x8xf32>
    %79 = arith.mulf %77, %78 : vector<8x8xf32>
    %80 = arith.addf %79, %5 : vector<8x8xf32>
    %cst_35 = arith.constant dense<0xFF800000> : vector<8xf32>
    %81 = vector.multi_reduction <maximumf>, %80, %cst_35 [1] : vector<8x8xf32> to vector<8xf32>
    %82 = vector.shape_cast %81 : vector<8xf32> to vector<8x1xf32>
    %83 = vector.broadcast %82 : vector<8x1xf32> to vector<8x8xf32>
    %84 = arith.subf %80, %83 : vector<8x8xf32>
    %85 = math.exp %84 : vector<8x8xf32>
    %cst_36 = arith.constant dense<0.000000e+00> : vector<8xf32>
    %86 = vector.multi_reduction <add>, %85, %cst_36 [1] : vector<8x8xf32> to vector<8xf32>
    %87 = vector.shape_cast %86 : vector<8xf32> to vector<8x1xf32>
    %88 = vector.broadcast %87 : vector<8x1xf32> to vector<8x8xf32>
    %89 = arith.divf %85, %88 : vector<8x8xf32>
    %cst_37 = arith.constant dense<0.000000e+00> : vector<8x8xf32>
    %90 = tpu.matmul %89, %76, %cst_37 {dimension_numbers = #tpu.dot_dimension_numbers<[1], [0], [0], [1], [0, 0, 1, 1], [], []>} : vector<8x8xf32>, vector<8x8xf32>, vector<8x8xf32> -> vector<8x8xf32>
    %91 = vector.extract_strided_slice %39 {offsets = [0, 24], sizes = [8, 8], strides = [1, 1]} : vector<8x96xf32> to vector<8x8xf32>
    %92 = vector.extract_strided_slice %39 {offsets = [0, 56], sizes = [8, 8], strides = [1, 1]} : vector<8x96xf32> to vector<8x8xf32>
    %93 = vector.extract_strided_slice %39 {offsets = [0, 88], sizes = [8, 8], strides = [1, 1]} : vector<8x96xf32> to vector<8x8xf32>
    %cst_38 = arith.constant dense<0.000000e+00> : vector<8x8xf32>
    %94 = tpu.matmul %91, %92, %cst_38 {dimension_numbers = #tpu.dot_dimension_numbers<[1], [1], [0], [0], [0, 0, 1, 0], [], []>} : vector<8x8xf32>, vector<8x8xf32>, vector<8x8xf32> -> vector<8x8xf32>
    %cst_39 = arith.constant 0.353553385 : f32
    %95 = vector.broadcast %cst_39 : f32 to vector<8x8xf32>
    %96 = arith.mulf %94, %95 : vector<8x8xf32>
    %97 = arith.addf %96, %5 : vector<8x8xf32>
    %cst_40 = arith.constant dense<0xFF800000> : vector<8xf32>
    %98 = vector.multi_reduction <maximumf>, %97, %cst_40 [1] : vector<8x8xf32> to vector<8xf32>
    %99 = vector.shape_cast %98 : vector<8xf32> to vector<8x1xf32>
    %100 = vector.broadcast %99 : vector<8x1xf32> to vector<8x8xf32>
    %101 = arith.subf %97, %100 : vector<8x8xf32>
    %102 = math.exp %101 : vector<8x8xf32>
    %cst_41 = arith.constant dense<0.000000e+00> : vector<8xf32>
    %103 = vector.multi_reduction <add>, %102, %cst_41 [1] : vector<8x8xf32> to vector<8xf32>
    %104 = vector.shape_cast %103 : vector<8xf32> to vector<8x1xf32>
    %105 = vector.broadcast %104 : vector<8x1xf32> to vector<8x8xf32>
    %106 = arith.divf %102, %105 : vector<8x8xf32>
    %cst_42 = arith.constant dense<0.000000e+00> : vector<8x8xf32>
    %107 = tpu.matmul %106, %93, %cst_42 {dimension_numbers = #tpu.dot_dimension_numbers<[1], [0], [0], [1], [0, 0, 1, 1], [], []>} : vector<8x8xf32>, vector<8x8xf32>, vector<8x8xf32> -> vector<8x8xf32>
    %108 = tpu.concatenate %56, %73, %90, %107 in 1 : vector<8x8xf32>, vector<8x8xf32>, vector<8x8xf32>, vector<8x8xf32> -> vector<8x32xf32>
    %c0_43 = arith.constant 0 : index
    %c0_44 = arith.constant 0 : index
    %c0_45 = arith.constant 0 : index
    %109 = vector.load %arg8[%c0_43, %c0_44, %c0_45] : memref<2x32x32xf32, #tpu.memory_space<vmem>>, vector<1x32x32xf32>
    %110 = vector.shape_cast %109 : vector<1x32x32xf32> to vector<32x32xf32>
    %cst_46 = arith.constant dense<0.000000e+00> : vector<8x32xf32>
    %111 = tpu.matmul %108, %110, %cst_46 {dimension_numbers = #tpu.dot_dimension_numbers<[1], [0], [0], [1], [0, 0, 1, 1], [], []>} : vector<8x32xf32>, vector<32x32xf32>, vector<8x32xf32> -> vector<8x32xf32>
    %112 = arith.addf %11, %111 : vector<8x32xf32>
    %c0_47 = arith.constant 0 : index
    %c0_48 = arith.constant 0 : index
    %113 = vector.load %arg9[%c0_47, %c0_48] : memref<2x32xf32, #tpu.memory_space<vmem>>, vector<1x32xf32>
    %114 = vector.broadcast %113 : vector<1x32xf32> to vector<8x32xf32>
    %115 = arith.addf %112, %114 : vector<8x32xf32>
    %c0_49 = arith.constant 0 : index
    %c0_50 = arith.constant 0 : index
    %116 = vector.load %arg10[%c0_49, %c0_50] : memref<2x32xf32, #tpu.memory_space<vmem>>, vector<1x32xf32>
    %c0_51 = arith.constant 0 : index
    %c0_52 = arith.constant 0 : index
    %117 = vector.load %arg11[%c0_51, %c0_52] : memref<2x32xf32, #tpu.memory_space<vmem>>, vector<1x32xf32>
    %cst_53 = arith.constant dense<0.000000e+00> : vector<8xf32>
    %118 = vector.multi_reduction <add>, %115, %cst_53 [1] : vector<8x32xf32> to vector<8xf32>
    %119 = vector.shape_cast %118 : vector<8xf32> to vector<8x1xf32>
    %cst_54 = arith.constant 3.200000e+01 : f32
    %120 = vector.broadcast %cst_54 : f32 to vector<8x1xf32>
    %121 = arith.divf %119, %120 : vector<8x1xf32>
    %122 = vector.broadcast %121 : vector<8x1xf32> to vector<8x32xf32>
    %123 = arith.subf %115, %122 : vector<8x32xf32>
    %124 = arith.mulf %123, %123 : vector<8x32xf32>
    %cst_55 = arith.constant dense<0.000000e+00> : vector<8xf32>
    %125 = vector.multi_reduction <add>, %124, %cst_55 [1] : vector<8x32xf32> to vector<8xf32>
    %126 = vector.shape_cast %125 : vector<8xf32> to vector<8x1xf32>
    %cst_56 = arith.constant 3.200000e+01 : f32
    %127 = vector.broadcast %cst_56 : f32 to vector<8x1xf32>
    %128 = arith.divf %126, %127 : vector<8x1xf32>
    %cst_57 = arith.constant 9.99999996E-13 : f32
    %129 = vector.broadcast %cst_57 : f32 to vector<8x1xf32>
    %130 = arith.addf %128, %129 : vector<8x1xf32>
    %131 = math.rsqrt %130 : vector<8x1xf32>
    %132 = vector.broadcast %131 : vector<8x1xf32> to vector<8x32xf32>
    %133 = arith.mulf %123, %132 : vector<8x32xf32>
    %134 = vector.broadcast %116 : vector<1x32xf32> to vector<8x32xf32>
    %135 = arith.mulf %133, %134 : vector<8x32xf32>
    %136 = vector.broadcast %117 : vector<1x32xf32> to vector<8x32xf32>
    %137 = arith.addf %135, %136 : vector<8x32xf32>
    %c0_58 = arith.constant 0 : index
    %c0_59 = arith.constant 0 : index
    %c0_60 = arith.constant 0 : index
    %138 = vector.load %arg12[%c0_58, %c0_59, %c0_60] : memref<2x32x128xf32, #tpu.memory_space<vmem>>, vector<1x32x128xf32>
    %139 = vector.shape_cast %138 : vector<1x32x128xf32> to vector<32x128xf32>
    %cst_61 = arith.constant dense<0.000000e+00> : vector<8x128xf32>
    %140 = tpu.matmul %137, %139, %cst_61 {dimension_numbers = #tpu.dot_dimension_numbers<[1], [0], [0], [1], [0, 0, 1, 1], [], []>} : vector<8x32xf32>, vector<32x128xf32>, vector<8x128xf32> -> vector<8x128xf32>
    %c0_62 = arith.constant 0 : index
    %c0_63 = arith.constant 0 : index
    %141 = vector.load %arg13[%c0_62, %c0_63] : memref<2x128xf32, #tpu.memory_space<vmem>>, vector<1x128xf32>
    %142 = vector.broadcast %141 : vector<1x128xf32> to vector<8x128xf32>
    %143 = arith.addf %140, %142 : vector<8x128xf32>
    %cst_64 = arith.constant 5.000000e-01 : f32
    %144 = vector.broadcast %cst_64 : f32 to vector<8x128xf32>
    %145 = arith.mulf %144, %143 : vector<8x128xf32>
    %cst_65 = arith.constant 0.707106769 : f32
    %146 = vector.broadcast %cst_65 : f32 to vector<8x128xf32>
    %147 = arith.mulf %143, %146 : vector<8x128xf32>
    %148 = math.erf %147 : vector<8x128xf32>
    %cst_66 = arith.constant 1.000000e+00 : f32
    %149 = vector.broadcast %cst_66 : f32 to vector<8x128xf32>
    %150 = arith.addf %149, %148 : vector<8x128xf32>
    %151 = arith.mulf %145, %150 : vector<8x128xf32>
    %c0_67 = arith.constant 0 : index
    %c0_68 = arith.constant 0 : index
    %c0_69 = arith.constant 0 : index
    %152 = vector.load %arg14[%c0_67, %c0_68, %c0_69] : memref<2x128x32xf32, #tpu.memory_space<vmem>>, vector<1x128x32xf32>
    %153 = vector.shape_cast %152 : vector<1x128x32xf32> to vector<128x32xf32>
    %cst_70 = arith.constant dense<0.000000e+00> : vector<8x32xf32>
    %154 = tpu.matmul %151, %153, %cst_70 {dimension_numbers = #tpu.dot_dimension_numbers<[1], [0], [0], [1], [0, 0, 1, 1], [], []>} : vector<8x128xf32>, vector<128x32xf32>, vector<8x32xf32> -> vector<8x32xf32>
    %155 = arith.addf %115, %154 : vector<8x32xf32>
    %c0_71 = arith.constant 0 : index
    %c0_72 = arith.constant 0 : index
    %156 = vector.load %arg15[%c0_71, %c0_72] : memref<2x32xf32, #tpu.memory_space<vmem>>, vector<1x32xf32>
    %157 = vector.broadcast %156 : vector<1x32xf32> to vector<8x32xf32>
    %158 = arith.addf %155, %157 : vector<8x32xf32>
    %c1 = arith.constant 1 : index
    %c0_73 = arith.constant 0 : index
    %159 = vector.load %arg4[%c1, %c0_73] : memref<2x32xf32, #tpu.memory_space<vmem>>, vector<1x32xf32>
    %c1_74 = arith.constant 1 : index
    %c0_75 = arith.constant 0 : index
    %160 = vector.load %arg5[%c1_74, %c0_75] : memref<2x32xf32, #tpu.memory_space<vmem>>, vector<1x32xf32>
    %cst_76 = arith.constant dense<0.000000e+00> : vector<8xf32>
    %161 = vector.multi_reduction <add>, %158, %cst_76 [1] : vector<8x32xf32> to vector<8xf32>
    %162 = vector.shape_cast %161 : vector<8xf32> to vector<8x1xf32>
    %cst_77 = arith.constant 3.200000e+01 : f32
    %163 = vector.broadcast %cst_77 : f32 to vector<8x1xf32>
    %164 = arith.divf %162, %163 : vector<8x1xf32>
    %165 = vector.broadcast %164 : vector<8x1xf32> to vector<8x32xf32>
    %166 = arith.subf %158, %165 : vector<8x32xf32>
    %167 = arith.mulf %166, %166 : vector<8x32xf32>
    %cst_78 = arith.constant dense<0.000000e+00> : vector<8xf32>
    %168 = vector.multi_reduction <add>, %167, %cst_78 [1] : vector<8x32xf32> to vector<8xf32>
    %169 = vector.shape_cast %168 : vector<8xf32> to vector<8x1xf32>
    %cst_79 = arith.constant 3.200000e+01 : f32
    %170 = vector.broadcast %cst_79 : f32 to vector<8x1xf32>
    %171 = arith.divf %169, %170 : vector<8x1xf32>
    %cst_80 = arith.constant 9.99999996E-13 : f32
    %172 = vector.broadcast %cst_80 : f32 to vector<8x1xf32>
    %173 = arith.addf %171, %172 : vector<8x1xf32>
    %174 = math.rsqrt %173 : vector<8x1xf32>
    %175 = vector.broadcast %174 : vector<8x1xf32> to vector<8x32xf32>
    %176 = arith.mulf %166, %175 : vector<8x32xf32>
    %177 = vector.broadcast %159 : vector<1x32xf32> to vector<8x32xf32>
    %178 = arith.mulf %176, %177 : vector<8x32xf32>
    %179 = vector.broadcast %160 : vector<1x32xf32> to vector<8x32xf32>
    %180 = arith.addf %178, %179 : vector<8x32xf32>
    %c1_81 = arith.constant 1 : index
    %c0_82 = arith.constant 0 : index
    %c0_83 = arith.constant 0 : index
    %181 = vector.load %arg6[%c1_81, %c0_82, %c0_83] : memref<2x32x96xf32, #tpu.memory_space<vmem>>, vector<1x32x96xf32>
    %182 = vector.shape_cast %181 : vector<1x32x96xf32> to vector<32x96xf32>
    %cst_84 = arith.constant dense<0.000000e+00> : vector<8x96xf32>
    %183 = tpu.matmul %180, %182, %cst_84 {dimension_numbers = #tpu.dot_dimension_numbers<[1], [0], [0], [1], [0, 0, 1, 1], [], []>} : vector<8x32xf32>, vector<32x96xf32>, vector<8x96xf32> -> vector<8x96xf32>
    %c1_85 = arith.constant 1 : index
    %c0_86 = arith.constant 0 : index
    %184 = vector.load %arg7[%c1_85, %c0_86] : memref<2x96xf32, #tpu.memory_space<vmem>>, vector<1x96xf32>
    %185 = vector.broadcast %184 : vector<1x96xf32> to vector<8x96xf32>
    %186 = arith.addf %183, %185 : vector<8x96xf32>
    %187 = vector.extract_strided_slice %186 {offsets = [0, 0], sizes = [8, 8], strides = [1, 1]} : vector<8x96xf32> to vector<8x8xf32>
    %188 = vector.extract_strided_slice %186 {offsets = [0, 32], sizes = [8, 8], strides = [1, 1]} : vector<8x96xf32> to vector<8x8xf32>
    %189 = vector.extract_strided_slice %186 {offsets = [0, 64], sizes = [8, 8], strides = [1, 1]} : vector<8x96xf32> to vector<8x8xf32>
    %cst_87 = arith.constant dense<0.000000e+00> : vector<8x8xf32>
    %190 = tpu.matmul %187, %188, %cst_87 {dimension_numbers = #tpu.dot_dimension_numbers<[1], [1], [0], [0], [0, 0, 1, 0], [], []>} : vector<8x8xf32>, vector<8x8xf32>, vector<8x8xf32> -> vector<8x8xf32>
    %cst_88 = arith.constant 0.353553385 : f32
    %191 = vector.broadcast %cst_88 : f32 to vector<8x8xf32>
    %192 = arith.mulf %190, %191 : vector<8x8xf32>
    %193 = arith.addf %192, %5 : vector<8x8xf32>
    %cst_89 = arith.constant dense<0xFF800000> : vector<8xf32>
    %194 = vector.multi_reduction <maximumf>, %193, %cst_89 [1] : vector<8x8xf32> to vector<8xf32>
    %195 = vector.shape_cast %194 : vector<8xf32> to vector<8x1xf32>
    %196 = vector.broadcast %195 : vector<8x1xf32> to vector<8x8xf32>
    %197 = arith.subf %193, %196 : vector<8x8xf32>
    %198 = math.exp %197 : vector<8x8xf32>
    %cst_90 = arith.constant dense<0.000000e+00> : vector<8xf32>
    %199 = vector.multi_reduction <add>, %198, %cst_90 [1] : vector<8x8xf32> to vector<8xf32>
    %200 = vector.shape_cast %199 : vector<8xf32> to vector<8x1xf32>
    %201 = vector.broadcast %200 : vector<8x1xf32> to vector<8x8xf32>
    %202 = arith.divf %198, %201 : vector<8x8xf32>
    %cst_91 = arith.constant dense<0.000000e+00> : vector<8x8xf32>
    %203 = tpu.matmul %202, %189, %cst_91 {dimension_numbers = #tpu.dot_dimension_numbers<[1], [0], [0], [1], [0, 0, 1, 1], [], []>} : vector<8x8xf32>, vector<8x8xf32>, vector<8x8xf32> -> vector<8x8xf32>
    %204 = vector.extract_strided_slice %186 {offsets = [0, 8], sizes = [8, 8], strides = [1, 1]} : vector<8x96xf32> to vector<8x8xf32>
    %205 = vector.extract_strided_slice %186 {offsets = [0, 40], sizes = [8, 8], strides = [1, 1]} : vector<8x96xf32> to vector<8x8xf32>
    %206 = vector.extract_strided_slice %186 {offsets = [0, 72], sizes = [8, 8], strides = [1, 1]} : vector<8x96xf32> to vector<8x8xf32>
    %cst_92 = arith.constant dense<0.000000e+00> : vector<8x8xf32>
    %207 = tpu.matmul %204, %205, %cst_92 {dimension_numbers = #tpu.dot_dimension_numbers<[1], [1], [0], [0], [0, 0, 1, 0], [], []>} : vector<8x8xf32>, vector<8x8xf32>, vector<8x8xf32> -> vector<8x8xf32>
    %cst_93 = arith.constant 0.353553385 : f32
    %208 = vector.broadcast %cst_93 : f32 to vector<8x8xf32>
    %209 = arith.mulf %207, %208 : vector<8x8xf32>
    %210 = arith.addf %209, %5 : vector<8x8xf32>
    %cst_94 = arith.constant dense<0xFF800000> : vector<8xf32>
    %211 = vector.multi_reduction <maximumf>, %210, %cst_94 [1] : vector<8x8xf32> to vector<8xf32>
    %212 = vector.shape_cast %211 : vector<8xf32> to vector<8x1xf32>
    %213 = vector.broadcast %212 : vector<8x1xf32> to vector<8x8xf32>
    %214 = arith.subf %210, %213 : vector<8x8xf32>
    %215 = math.exp %214 : vector<8x8xf32>
    %cst_95 = arith.constant dense<0.000000e+00> : vector<8xf32>
    %216 = vector.multi_reduction <add>, %215, %cst_95 [1] : vector<8x8xf32> to vector<8xf32>
    %217 = vector.shape_cast %216 : vector<8xf32> to vector<8x1xf32>
    %218 = vector.broadcast %217 : vector<8x1xf32> to vector<8x8xf32>
    %219 = arith.divf %215, %218 : vector<8x8xf32>
    %cst_96 = arith.constant dense<0.000000e+00> : vector<8x8xf32>
    %220 = tpu.matmul %219, %206, %cst_96 {dimension_numbers = #tpu.dot_dimension_numbers<[1], [0], [0], [1], [0, 0, 1, 1], [], []>} : vector<8x8xf32>, vector<8x8xf32>, vector<8x8xf32> -> vector<8x8xf32>
    %221 = vector.extract_strided_slice %186 {offsets = [0, 16], sizes = [8, 8], strides = [1, 1]} : vector<8x96xf32> to vector<8x8xf32>
    %222 = vector.extract_strided_slice %186 {offsets = [0, 48], sizes = [8, 8], strides = [1, 1]} : vector<8x96xf32> to vector<8x8xf32>
    %223 = vector.extract_strided_slice %186 {offsets = [0, 80], sizes = [8, 8], strides = [1, 1]} : vector<8x96xf32> to vector<8x8xf32>
    %cst_97 = arith.constant dense<0.000000e+00> : vector<8x8xf32>
    %224 = tpu.matmul %221, %222, %cst_97 {dimension_numbers = #tpu.dot_dimension_numbers<[1], [1], [0], [0], [0, 0, 1, 0], [], []>} : vector<8x8xf32>, vector<8x8xf32>, vector<8x8xf32> -> vector<8x8xf32>
    %cst_98 = arith.constant 0.353553385 : f32
    %225 = vector.broadcast %cst_98 : f32 to vector<8x8xf32>
    %226 = arith.mulf %224, %225 : vector<8x8xf32>
    %227 = arith.addf %226, %5 : vector<8x8xf32>
    %cst_99 = arith.constant dense<0xFF800000> : vector<8xf32>
    %228 = vector.multi_reduction <maximumf>, %227, %cst_99 [1] : vector<8x8xf32> to vector<8xf32>
    %229 = vector.shape_cast %228 : vector<8xf32> to vector<8x1xf32>
    %230 = vector.broadcast %229 : vector<8x1xf32> to vector<8x8xf32>
    %231 = arith.subf %227, %230 : vector<8x8xf32>
    %232 = math.exp %231 : vector<8x8xf32>
    %cst_100 = arith.constant dense<0.000000e+00> : vector<8xf32>
    %233 = vector.multi_reduction <add>, %232, %cst_100 [1] : vector<8x8xf32> to vector<8xf32>
    %234 = vector.shape_cast %233 : vector<8xf32> to vector<8x1xf32>
    %235 = vector.broadcast %234 : vector<8x1xf32> to vector<8x8xf32>
    %236 = arith.divf %232, %235 : vector<8x8xf32>
    %cst_101 = arith.constant dense<0.000000e+00> : vector<8x8xf32>
    %237 = tpu.matmul %236, %223, %cst_101 {dimension_numbers = #tpu.dot_dimension_numbers<[1], [0], [0], [1], [0, 0, 1, 1], [], []>} : vector<8x8xf32>, vector<8x8xf32>, vector<8x8xf32> -> vector<8x8xf32>
    %238 = vector.extract_strided_slice %186 {offsets = [0, 24], sizes = [8, 8], strides = [1, 1]} : vector<8x96xf32> to vector<8x8xf32>
    %239 = vector.extract_strided_slice %186 {offsets = [0, 56], sizes = [8, 8], strides = [1, 1]} : vector<8x96xf32> to vector<8x8xf32>
    %240 = vector.extract_strided_slice %186 {offsets = [0, 88], sizes = [8, 8], strides = [1, 1]} : vector<8x96xf32> to vector<8x8xf32>
    %cst_102 = arith.constant dense<0.000000e+00> : vector<8x8xf32>
    %241 = tpu.matmul %238, %239, %cst_102 {dimension_numbers = #tpu.dot_dimension_numbers<[1], [1], [0], [0], [0, 0, 1, 0], [], []>} : vector<8x8xf32>, vector<8x8xf32>, vector<8x8xf32> -> vector<8x8xf32>
    %cst_103 = arith.constant 0.353553385 : f32
    %242 = vector.broadcast %cst_103 : f32 to vector<8x8xf32>
    %243 = arith.mulf %241, %242 : vector<8x8xf32>
    %244 = arith.addf %243, %5 : vector<8x8xf32>
    %cst_104 = arith.constant dense<0xFF800000> : vector<8xf32>
    %245 = vector.multi_reduction <maximumf>, %244, %cst_104 [1] : vector<8x8xf32> to vector<8xf32>
    %246 = vector.shape_cast %245 : vector<8xf32> to vector<8x1xf32>
    %247 = vector.broadcast %246 : vector<8x1xf32> to vector<8x8xf32>
    %248 = arith.subf %244, %247 : vector<8x8xf32>
    %249 = math.exp %248 : vector<8x8xf32>
    %cst_105 = arith.constant dense<0.000000e+00> : vector<8xf32>
    %250 = vector.multi_reduction <add>, %249, %cst_105 [1] : vector<8x8xf32> to vector<8xf32>
    %251 = vector.shape_cast %250 : vector<8xf32> to vector<8x1xf32>
    %252 = vector.broadcast %251 : vector<8x1xf32> to vector<8x8xf32>
    %253 = arith.divf %249, %252 : vector<8x8xf32>
    %cst_106 = arith.constant dense<0.000000e+00> : vector<8x8xf32>
    %254 = tpu.matmul %253, %240, %cst_106 {dimension_numbers = #tpu.dot_dimension_numbers<[1], [0], [0], [1], [0, 0, 1, 1], [], []>} : vector<8x8xf32>, vector<8x8xf32>, vector<8x8xf32> -> vector<8x8xf32>
    %255 = tpu.concatenate %203, %220, %237, %254 in 1 : vector<8x8xf32>, vector<8x8xf32>, vector<8x8xf32>, vector<8x8xf32> -> vector<8x32xf32>
    %c1_107 = arith.constant 1 : index
    %c0_108 = arith.constant 0 : index
    %c0_109 = arith.constant 0 : index
    %256 = vector.load %arg8[%c1_107, %c0_108, %c0_109] : memref<2x32x32xf32, #tpu.memory_space<vmem>>, vector<1x32x32xf32>
    %257 = vector.shape_cast %256 : vector<1x32x32xf32> to vector<32x32xf32>
    %cst_110 = arith.constant dense<0.000000e+00> : vector<8x32xf32>
    %258 = tpu.matmul %255, %257, %cst_110 {dimension_numbers = #tpu.dot_dimension_numbers<[1], [0], [0], [1], [0, 0, 1, 1], [], []>} : vector<8x32xf32>, vector<32x32xf32>, vector<8x32xf32> -> vector<8x32xf32>
    %259 = arith.addf %158, %258 : vector<8x32xf32>
    %c1_111 = arith.constant 1 : index
    %c0_112 = arith.constant 0 : index
    %260 = vector.load %arg9[%c1_111, %c0_112] : memref<2x32xf32, #tpu.memory_space<vmem>>, vector<1x32xf32>
    %261 = vector.broadcast %260 : vector<1x32xf32> to vector<8x32xf32>
    %262 = arith.addf %259, %261 : vector<8x32xf32>
    %c1_113 = arith.constant 1 : index
    %c0_114 = arith.constant 0 : index
    %263 = vector.load %arg10[%c1_113, %c0_114] : memref<2x32xf32, #tpu.memory_space<vmem>>, vector<1x32xf32>
    %c1_115 = arith.constant 1 : index
    %c0_116 = arith.constant 0 : index
    %264 = vector.load %arg11[%c1_115, %c0_116] : memref<2x32xf32, #tpu.memory_space<vmem>>, vector<1x32xf32>
    %cst_117 = arith.constant dense<0.000000e+00> : vector<8xf32>
    %265 = vector.multi_reduction <add>, %262, %cst_117 [1] : vector<8x32xf32> to vector<8xf32>
    %266 = vector.shape_cast %265 : vector<8xf32> to vector<8x1xf32>
    %cst_118 = arith.constant 3.200000e+01 : f32
    %267 = vector.broadcast %cst_118 : f32 to vector<8x1xf32>
    %268 = arith.divf %266, %267 : vector<8x1xf32>
    %269 = vector.broadcast %268 : vector<8x1xf32> to vector<8x32xf32>
    %270 = arith.subf %262, %269 : vector<8x32xf32>
    %271 = arith.mulf %270, %270 : vector<8x32xf32>
    %cst_119 = arith.constant dense<0.000000e+00> : vector<8xf32>
    %272 = vector.multi_reduction <add>, %271, %cst_119 [1] : vector<8x32xf32> to vector<8xf32>
    %273 = vector.shape_cast %272 : vector<8xf32> to vector<8x1xf32>
    %cst_120 = arith.constant 3.200000e+01 : f32
    %274 = vector.broadcast %cst_120 : f32 to vector<8x1xf32>
    %275 = arith.divf %273, %274 : vector<8x1xf32>
    %cst_121 = arith.constant 9.99999996E-13 : f32
    %276 = vector.broadcast %cst_121 : f32 to vector<8x1xf32>
    %277 = arith.addf %275, %276 : vector<8x1xf32>
    %278 = math.rsqrt %277 : vector<8x1xf32>
    %279 = vector.broadcast %278 : vector<8x1xf32> to vector<8x32xf32>
    %280 = arith.mulf %270, %279 : vector<8x32xf32>
    %281 = vector.broadcast %263 : vector<1x32xf32> to vector<8x32xf32>
    %282 = arith.mulf %280, %281 : vector<8x32xf32>
    %283 = vector.broadcast %264 : vector<1x32xf32> to vector<8x32xf32>
    %284 = arith.addf %282, %283 : vector<8x32xf32>
    %c1_122 = arith.constant 1 : index
    %c0_123 = arith.constant 0 : index
    %c0_124 = arith.constant 0 : index
    %285 = vector.load %arg12[%c1_122, %c0_123, %c0_124] : memref<2x32x128xf32, #tpu.memory_space<vmem>>, vector<1x32x128xf32>
    %286 = vector.shape_cast %285 : vector<1x32x128xf32> to vector<32x128xf32>
    %cst_125 = arith.constant dense<0.000000e+00> : vector<8x128xf32>
    %287 = tpu.matmul %284, %286, %cst_125 {dimension_numbers = #tpu.dot_dimension_numbers<[1], [0], [0], [1], [0, 0, 1, 1], [], []>} : vector<8x32xf32>, vector<32x128xf32>, vector<8x128xf32> -> vector<8x128xf32>
    %c1_126 = arith.constant 1 : index
    %c0_127 = arith.constant 0 : index
    %288 = vector.load %arg13[%c1_126, %c0_127] : memref<2x128xf32, #tpu.memory_space<vmem>>, vector<1x128xf32>
    %289 = vector.broadcast %288 : vector<1x128xf32> to vector<8x128xf32>
    %290 = arith.addf %287, %289 : vector<8x128xf32>
    %cst_128 = arith.constant 5.000000e-01 : f32
    %291 = vector.broadcast %cst_128 : f32 to vector<8x128xf32>
    %292 = arith.mulf %291, %290 : vector<8x128xf32>
    %cst_129 = arith.constant 0.707106769 : f32
    %293 = vector.broadcast %cst_129 : f32 to vector<8x128xf32>
    %294 = arith.mulf %290, %293 : vector<8x128xf32>
    %295 = math.erf %294 : vector<8x128xf32>
    %cst_130 = arith.constant 1.000000e+00 : f32
    %296 = vector.broadcast %cst_130 : f32 to vector<8x128xf32>
    %297 = arith.addf %296, %295 : vector<8x128xf32>
    %298 = arith.mulf %292, %297 : vector<8x128xf32>
    %c1_131 = arith.constant 1 : index
    %c0_132 = arith.constant 0 : index
    %c0_133 = arith.constant 0 : index
    %299 = vector.load %arg14[%c1_131, %c0_132, %c0_133] : memref<2x128x32xf32, #tpu.memory_space<vmem>>, vector<1x128x32xf32>
    %300 = vector.shape_cast %299 : vector<1x128x32xf32> to vector<128x32xf32>
    %cst_134 = arith.constant dense<0.000000e+00> : vector<8x32xf32>
    %301 = tpu.matmul %298, %300, %cst_134 {dimension_numbers = #tpu.dot_dimension_numbers<[1], [0], [0], [1], [0, 0, 1, 1], [], []>} : vector<8x128xf32>, vector<128x32xf32>, vector<8x32xf32> -> vector<8x32xf32>
    %302 = arith.addf %262, %301 : vector<8x32xf32>
    %c1_135 = arith.constant 1 : index
    %c0_136 = arith.constant 0 : index
    %303 = vector.load %arg15[%c1_135, %c0_136] : memref<2x32xf32, #tpu.memory_space<vmem>>, vector<1x32xf32>
    %304 = vector.broadcast %303 : vector<1x32xf32> to vector<8x32xf32>
    %305 = arith.addf %302, %304 : vector<8x32xf32>
    %c0_137 = arith.constant 0 : index
    %c0_138 = arith.constant 0 : index
    %306 = vector.load %arg16[%c0_137, %c0_138] : memref<1x32xf32, #tpu.memory_space<vmem>>, vector<1x32xf32>
    %c0_139 = arith.constant 0 : index
    %c0_140 = arith.constant 0 : index
    %307 = vector.load %arg17[%c0_139, %c0_140] : memref<1x32xf32, #tpu.memory_space<vmem>>, vector<1x32xf32>
    %cst_141 = arith.constant dense<0.000000e+00> : vector<8xf32>
    %308 = vector.multi_reduction <add>, %305, %cst_141 [1] : vector<8x32xf32> to vector<8xf32>
    %309 = vector.shape_cast %308 : vector<8xf32> to vector<8x1xf32>
    %cst_142 = arith.constant 3.200000e+01 : f32
    %310 = vector.broadcast %cst_142 : f32 to vector<8x1xf32>
    %311 = arith.divf %309, %310 : vector<8x1xf32>
    %312 = vector.broadcast %311 : vector<8x1xf32> to vector<8x32xf32>
    %313 = arith.subf %305, %312 : vector<8x32xf32>
    %314 = arith.mulf %313, %313 : vector<8x32xf32>
    %cst_143 = arith.constant dense<0.000000e+00> : vector<8xf32>
    %315 = vector.multi_reduction <add>, %314, %cst_143 [1] : vector<8x32xf32> to vector<8xf32>
    %316 = vector.shape_cast %315 : vector<8xf32> to vector<8x1xf32>
    %cst_144 = arith.constant 3.200000e+01 : f32
    %317 = vector.broadcast %cst_144 : f32 to vector<8x1xf32>
    %318 = arith.divf %316, %317 : vector<8x1xf32>
    %cst_145 = arith.constant 9.99999996E-13 : f32
    %319 = vector.broadcast %cst_145 : f32 to vector<8x1xf32>
    %320 = arith.addf %318, %319 : vector<8x1xf32>
    %321 = math.rsqrt %320 : vector<8x1xf32>
    %322 = vector.broadcast %321 : vector<8x1xf32> to vector<8x32xf32>
    %323 = arith.mulf %313, %322 : vector<8x32xf32>
    %324 = vector.broadcast %306 : vector<1x32xf32> to vector<8x32xf32>
    %325 = arith.mulf %323, %324 : vector<8x32xf32>
    %326 = vector.broadcast %307 : vector<1x32xf32> to vector<8x32xf32>
    %327 = arith.addf %325, %326 : vector<8x32xf32>
    %328 = vector.extract_strided_slice %327 {offsets = [0, 0], sizes = [1, 32], strides = [1, 1]} : vector<8x32xf32> to vector<1x32xf32>
    %c0_146 = arith.constant 0 : index
    %c0_147 = arith.constant 0 : index
    %329 = vector.load %arg18[%c0_146, %c0_147] : memref<32x128xf32, #tpu.memory_space<vmem>>, vector<32x128xf32>
    %cst_148 = arith.constant dense<0.000000e+00> : vector<1x128xf32>
    %330 = tpu.matmul %328, %329, %cst_148 {dimension_numbers = #tpu.dot_dimension_numbers<[1], [0], [0], [1], [0, 0, 1, 1], [], []>} : vector<1x32xf32>, vector<32x128xf32>, vector<1x128xf32> -> vector<1x128xf32>
    %c0_149 = arith.constant 0 : index
    %c0_150 = arith.constant 0 : index
    %331 = vector.load %arg19[%c0_149, %c0_150] : memref<1x128xf32, #tpu.memory_space<vmem>>, vector<1x128xf32>
    %332 = arith.addf %330, %331 : vector<1x128xf32>
    %333 = vector.shape_cast %332 : vector<1x128xf32> to vector<1x128xf32>
    %334 = vector.broadcast %333 : vector<1x128xf32> to vector<8x128xf32>
    %c0_151 = arith.constant 0 : index
    %c0_152 = arith.constant 0 : index
    %c0_153 = arith.constant 0 : index
    %335 = vector.load %arg20[%c0_151, %c0_152, %c0_153] : memref<1x8x128xf32, #tpu.memory_space<vmem>>, vector<1x8x128xf32>
    %336 = vector.shape_cast %335 : vector<1x8x128xf32> to vector<8x128xf32>
    %337 = vector.shape_cast %334 : vector<8x128xf32> to vector<1x8x128xf32>
    tpu.vector_store %arg20[%c0_151, %c0_152, %c0_153], %337 {strides = array<i32>} : memref<1x8x128xf32, #tpu.memory_space<vmem>>, vector<1x8x128xf32>,
    return
  }
  func.func @transform_0(%arg0: i32) -> (i32, i32, i32) {
    %c0_i32 = arith.constant 0 : i32
    %c0_i32_0 = arith.constant 0 : i32
    %c0_i32_1 = arith.constant 0 : i32
    return %arg0, %c0_i32, %c0_i32_0 : i32, i32, i32
  }
  func.func @transform_1(%arg0: i32) -> (i32, i32) {
    %c0_i32 = arith.constant 0 : i32
    %c0_i32_0 = arith.constant 0 : i32
    %c0_i32_1 = arith.constant 0 : i32
    return %c0_i32, %c0_i32_0 : i32, i32
  }
  func.func @transform_2(%arg0: i32) -> (i32, i32) {
    %c0_i32 = arith.constant 0 : i32
    %c0_i32_0 = arith.constant 0 : i32
    %c0_i32_1 = arith.constant 0 : i32
    return %c0_i32, %c0_i32_0 : i32, i32
  }
  func.func @transform_3(%arg0: i32) -> (i32, i32) {
    %c0_i32 = arith.constant 0 : i32
    %c0_i32_0 = arith.constant 0 : i32
    %c0_i32_1 = arith.constant 0 : i32
    return %c0_i32, %c0_i32_0 : i32, i32
  }
  func.func @transform_4(%arg0: i32) -> (i32, i32) {
    %c0_i32 = arith.constant 0 : i32
    %c0_i32_0 = arith.constant 0 : i32
    %c0_i32_1 = arith.constant 0 : i32
    return %c0_i32, %c0_i32_0 : i32, i32
  }
  func.func @transform_5(%arg0: i32) -> (i32, i32, i32) {
    %c0_i32 = arith.constant 0 : i32
    %c0_i32_0 = arith.constant 0 : i32
    %c0_i32_1 = arith.constant 0 : i32
    %c0_i32_2 = arith.constant 0 : i32
    return %c0_i32, %c0_i32_0, %c0_i32_1 : i32, i32, i32
  }
  func.func @transform_6(%arg0: i32) -> (i32, i32) {
    %c0_i32 = arith.constant 0 : i32
    %c0_i32_0 = arith.constant 0 : i32
    %c0_i32_1 = arith.constant 0 : i32
    return %c0_i32, %c0_i32_0 : i32, i32
  }
  func.func @transform_7(%arg0: i32) -> (i32, i32, i32) {
    %c0_i32 = arith.constant 0 : i32
    %c0_i32_0 = arith.constant 0 : i32
    %c0_i32_1 = arith.constant 0 : i32
    %c0_i32_2 = arith.constant 0 : i32
    return %c0_i32, %c0_i32_0, %c0_i32_1 : i32, i32, i32
  }
  func.func @transform_8(%arg0: i32) -> (i32, i32) {
    %c0_i32 = arith.constant 0 : i32
    %c0_i32_0 = arith.constant 0 : i32
    %c0_i32_1 = arith.constant 0 : i32
    return %c0_i32, %c0_i32_0 : i32, i32
  }
  func.func @transform_9(%arg0: i32) -> (i32, i32) {
    %c0_i32 = arith.constant 0 : i32
    %c0_i32_0 = arith.constant 0 : i32
    %c0_i32_1 = arith.constant 0 : i32
    return %c0_i32, %c0_i32_0 : i32, i32
  }
  func.func @transform_10(%arg0: i32) -> (i32, i32) {
    %c0_i32 = arith.constant 0 : i32
    %c0_i32_0 = arith.constant 0 : i32
    %c0_i32_1 = arith.constant 0 : i32
    return %c0_i32, %c0_i32_0 : i32, i32
  }
  func.func @transform_11(%arg0: i32) -> (i32, i32, i32) {
    %c0_i32 = arith.constant 0 : i32
    %c0_i32_0 = arith.constant 0 : i32
    %c0_i32_1 = arith.constant 0 : i32
    %c0_i32_2 = arith.constant 0 : i32
    return %c0_i32, %c0_i32_0, %c0_i32_1 : i32, i32, i32
  }
  func.func @transform_12(%arg0: i32) -> (i32, i32) {
    %c0_i32 = arith.constant 0 : i32
    %c0_i32_0 = arith.constant 0 : i32
    %c0_i32_1 = arith.constant 0 : i32
    return %c0_i32, %c0_i32_0 : i32, i32
  }
  func.func @transform_13(%arg0: i32) -> (i32, i32, i32) {
    %c0_i32 = arith.constant 0 : i32
    %c0_i32_0 = arith.constant 0 : i32
    %c0_i32_1 = arith.constant 0 : i32
    %c0_i32_2 = arith.constant 0 : i32
    return %c0_i32, %c0_i32_0, %c0_i32_1 : i32, i32, i32
  }
  func.func @transform_14(%arg0: i32) -> (i32, i32) {
    %c0_i32 = arith.constant 0 : i32
    %c0_i32_0 = arith.constant 0 : i32
    %c0_i32_1 = arith.constant 0 : i32
    return %c0_i32, %c0_i32_0 : i32, i32
  }
  func.func @transform_15(%arg0: i32) -> (i32, i32) {
    %c0_i32 = arith.constant 0 : i32
    %c0_i32_0 = arith.constant 0 : i32
    %c0_i32_1 = arith.constant 0 : i32
    return %c0_i32, %c0_i32_0 : i32, i32
  }
  func.func @transform_16(%arg0: i32) -> (i32, i32) {
    %c0_i32 = arith.constant 0 : i32
    %c0_i32_0 = arith.constant 0 : i32
    %c0_i32_1 = arith.constant 0 : i32
    return %c0_i32, %c0_i32_0 : i32, i32
  }
  func.func @transform_17(%arg0: i32) -> (i32, i32) {
    %c0_i32 = arith.constant 0 : i32
    %c0_i32_0 = arith.constant 0 : i32
    %c0_i32_1 = arith.constant 0 : i32
    return %c0_i32, %c0_i32_0 : i32, i32
  }
  func.func @transform_18(%arg0: i32) -> (i32, i32) {
    %c0_i32 = arith.constant 0 : i32
    %c0_i32_0 = arith.constant 0 : i32
    %c0_i32_1 = arith.constant 0 : i32
    return %c0_i32, %c0_i32_0 : i32, i32
  }
  func.func @transform_19(%arg0: i32) -> (i32, i32, i32) {
    %c0_i32 = arith.constant 0 : i32
    %c0_i32_0 = arith.constant 0 : i32
    %c0_i32_1 = arith.constant 0 : i32
    return %arg0, %c0_i32, %c0_i32_0 : i32, i32, i32
  }
}

</mosaic_0001>

<llo_original>
// kernel: vit_model_forward.1
$region0: #{vit_model_forward.1}
  #allocation0 [shape = 'u32[]', space=smem, size = 0x4, offset = 0x4, fixed_abs, tag = 'smem constant byte address 0x4 - core index']
  #allocation1 [shape = 'u32[144,128]{1,0:T(1,128)}', space=vmem, size = 0x12000, scoped, tag = 'internal scratch']
  %s0 = inlined_call_operand.vmem [shape: f32[2,8,192], index: 0, kind: input, shape index: {}]
  %s1 = inlined_call_operand.vmem [shape: f32[192,32], index: 1, kind: input, shape index: {}]
  %s2 = inlined_call_operand.vmem [shape: f32[8,32], index: 2, kind: input, shape index: {}]
  %s3 = inlined_call_operand.vmem [shape: f32[2,32], index: 3, kind: input, shape index: {}]
  %s4 = inlined_call_operand.vmem [shape: f32[2,32], index: 4, kind: input, shape index: {}]
  %s5 = inlined_call_operand.vmem [shape: f32[2,32,96], index: 5, kind: input, shape index: {}]
  %s6 = inlined_call_operand.vmem [shape: f32[2,96], index: 6, kind: input, shape index: {}]
  %s7 = inlined_call_operand.vmem [shape: f32[2,32,32], index: 7, kind: input, shape index: {}]
  %s8 = inlined_call_operand.vmem [shape: f32[2,32], index: 8, kind: input, shape index: {}]
  %s9 = inlined_call_operand.vmem [shape: f32[2,32], index: 9, kind: input, shape index: {}]
  %s10 = inlined_call_operand.vmem [shape: f32[2,32], index: 10, kind: input, shape index: {}]
  %s11 = inlined_call_operand.vmem [shape: f32[2,32,128], index: 11, kind: input, shape index: {}]
  %s12 = inlined_call_operand.vmem [shape: f32[2,128], index: 12, kind: input, shape index: {}]
  %s13 = inlined_call_operand.vmem [shape: f32[2,128,32], index: 13, kind: input, shape index: {}]
  %s14 = inlined_call_operand.vmem [shape: f32[2,32], index: 14, kind: input, shape index: {}]
  %s15 = inlined_call_operand.vmem [shape: f32[1,32], index: 15, kind: input, shape index: {}]
  %s16 = inlined_call_operand.vmem [shape: f32[1,32], index: 16, kind: input, shape index: {}]
  %s17 = inlined_call_operand.vmem [shape: f32[32,128], index: 17, kind: input, shape index: {}]
  %s18 = inlined_call_operand.vmem [shape: f32[1,128], index: 18, kind: input, shape index: {}]
  %s19 = inlined_call_operand.vmem [shape: f32[2,8,128], index: 19, kind: output, shape index: {}]
  %s20 = sld [smem:[#allocation0]]
  $region109: #{vit_model_forward.1} parent=0
    _
  %s22 = ssub.s32 1, %s20
  %s23 = scalar_select 0, %s22, %s20
  loop: start=0, step=1, limit=4
  $region2: #{vit_model_forward.1} parent=0 // loop_pre_header
    _
  $region3: #{vit_model_forward.1} parent=0 // loop_header
    %s25 = sphi 0, %s29
    %p26 = scmp.ge.s32.totalorder %s25, 4
    %s35 = sphi 0, %s37
    %s38 = sphi 0, %s35
    %s39 = sphi 0, %s38
    %s55 = sphi 0, %s39
    %s59 = sphi 0, %s59
    %s61 = sphi 0, %s59
    %s62 = sphi 0, %s61
    %s76 = sphi 0, %s62
    %s80 = sphi 0, %s80
    %s82 = sphi 0, %s80
    %s83 = sphi 0, %s82
    %s97 = sphi 0, %s83
    %s101 = sphi 0, %s101
    %s103 = sphi 0, %s101
    %s104 = sphi 0, %s103
    %s118 = sphi 0, %s104
    %s122 = sphi 0, %s122
    %s124 = sphi 0, %s122
    %s125 = sphi 0, %s124
    %s139 = sphi 0, %s125
    %s143 = sphi 0, %s143
    %s145 = sphi 0, %s143
    %s146 = sphi 0, %s145
    %s160 = sphi 0, %s146
    %s164 = sphi 0, %s164
    %s166 = sphi 0, %s164
    %s167 = sphi 0, %s166
    %s181 = sphi 0, %s167
    %s185 = sphi 0, %s185
    %s187 = sphi 0, %s185
    %s188 = sphi 0, %s187
    %s202 = sphi 0, %s188
    %s206 = sphi 0, %s206
    %s208 = sphi 0, %s206
    %s209 = sphi 0, %s208
    %s223 = sphi 0, %s209
    %s227 = sphi 0, %s227
    %s229 = sphi 0, %s227
    %s230 = sphi 0, %s229
    %s244 = sphi 0, %s230
    %s248 = sphi 0, %s248
    %s250 = sphi 0, %s248
    %s251 = sphi 0, %s250
    %s265 = sphi 0, %s251
    %s269 = sphi 0, %s269
    %s271 = sphi 0, %s269
    %s272 = sphi 0, %s271
    %s286 = sphi 0, %s272
    %s290 = sphi 0, %s290
    %s292 = sphi 0, %s290
    %s293 = sphi 0, %s292
    %s307 = sphi 0, %s293
    %s311 = sphi 0, %s311
    %s313 = sphi 0, %s311
    %s314 = sphi 0, %s313
    %s328 = sphi 0, %s314
    %s332 = sphi 0, %s332
    %s334 = sphi 0, %s332
    %s335 = sphi 0, %s334
    %s349 = sphi 0, %s335
    %s353 = sphi 0, %s353
    %s355 = sphi 0, %s353
    %s356 = sphi 0, %s355
    %s370 = sphi 0, %s356
    %s374 = sphi 0, %s374
    %s376 = sphi 0, %s374
    %s377 = sphi 0, %s376
    %s391 = sphi 0, %s377
    %s395 = sphi 0, %s395
    %s397 = sphi 0, %s395
    %s398 = sphi 0, %s397
    %s412 = sphi 0, %s398
    %s416 = sphi 0, %s416
    %s418 = sphi 0, %s416
    %s419 = sphi 0, %s418
    %s433 = sphi 0, %s419
    %s439 = sphi 0, %s441
    %s442 = sphi 0, %s439
    %s443 = sphi 0, %s442
    %s459 = sphi 0, %s443
  $region4: #{vit_model_forward.1} parent=0 // loop_header_branch
    %28 = sbr.rel (%p26) target = $region8
  $region5: #{vit_model_forward.1} parent=0 // loop_body
    %s30 = ssub.s32 %s25, 1
    %s31 = ssub.s32 %s25, 2
    %s32 = sadd.s32 %s25, 1
    %s33 = ssub.s32 %s25, %s32
    %p34 = scmp.eq.s32.totalorder %s33, 0
    %s36 = sadd.s32 %s35, 1
    %s37 = scalar_select %p34, %s35, %s36
    %p40 = pneg %p34
    %p41 = scmp.eq.s32.totalorder %s25, 1
    %p42 = por %p40, %p41
    %p43 = scmp.ne.s32.totalorder %s35, %s38
    %p44 = scmp.eq.s32.totalorder %s25, 0
    %p45 = por %p43, %p44
    %p46 = scmp.ne.s32.totalorder %s35, %s38
    %p47 = scmp.eq.s32.totalorder %s30, 1
    %p48 = por %p46, %p47
    %p49 = scmp.ne.s32.totalorder %s38, %s39
    %p50 = scmp.eq.s32.totalorder %s30, 0
    %p51 = por %p49, %p50
    %p52 = scmp.ne.s32.totalorder %s38, %s39
    %p53 = scmp.eq.s32.totalorder %s31, 1
    %p54 = por %p52, %p53
    %p56 = scmp.ne.s32.totalorder %s39, %s55
    %p57 = scmp.eq.s32.totalorder %s31, 0
    %p58 = por %p56, %p57
    %s60 = sadd.s32 %s59, 1
    %p63 = scmp.eq.s32.totalorder %s25, 1
    %p64 = scmp.ne.s32.totalorder %s59, %s61
    %p65 = scmp.eq.s32.totalorder %s25, 0
    %p66 = por %p64, %p65
    %p67 = scmp.ne.s32.totalorder %s59, %s61
    %p68 = scmp.eq.s32.totalorder %s30, 1
    %p69 = por %p67, %p68
    %p70 = scmp.ne.s32.totalorder %s61, %s62
    %p71 = scmp.eq.s32.totalorder %s30, 0
    %p72 = por %p70, %p71
    %p73 = scmp.ne.s32.totalorder %s61, %s62
    %p74 = scmp.eq.s32.totalorder %s31, 1
    %p75 = por %p73, %p74
    %p77 = scmp.ne.s32.totalorder %s62, %s76
    %p78 = scmp.eq.s32.totalorder %s31, 0
    %p79 = por %p77, %p78
    %s81 = sadd.s32 %s80, 1
    %p84 = scmp.eq.s32.totalorder %s25, 1
    %p85 = scmp.ne.s32.totalorder %s80, %s82
    %p86 = scmp.eq.s32.totalorder %s25, 0
    %p87 = por %p85, %p86
    %p88 = scmp.ne.s32.totalorder %s80, %s82
    %p89 = scmp.eq.s32.totalorder %s30, 1
    %p90 = por %p88, %p89
    %p91 = scmp.ne.s32.totalorder %s82, %s83
    %p92 = scmp.eq.s32.totalorder %s30, 0
    %p93 = por %p91, %p92
    %p94 = scmp.ne.s32.totalorder %s82, %s83
    %p95 = scmp.eq.s32.totalorder %s31, 1
    %p96 = por %p94, %p95
    %p98 = scmp.ne.s32.totalorder %s83, %s97
    %p99 = scmp.eq.s32.totalorder %s31, 0
    %p100 = por %p98, %p99
    %s102 = sadd.s32 %s101, 1
    %p105 = scmp.eq.s32.totalorder %s25, 1
    %p106 = scmp.ne.s32.totalorder %s101, %s103
    %p107 = scmp.eq.s32.totalorder %s25, 0
    %p108 = por %p106, %p107
    %p109 = scmp.ne.s32.totalorder %s101, %s103
    %p110 = scmp.eq.s32.totalorder %s30, 1
    %p111 = por %p109, %p110
    %p112 = scmp.ne.s32.totalorder %s103, %s104
    %p113 = scmp.eq.s32.totalorder %s30, 0
    %p114 = por %p112, %p113
    %p115 = scmp.ne.s32.totalorder %s103, %s104
    %p116 = scmp.eq.s32.totalorder %s31, 1
    %p117 = por %p115, %p116
    %p119 = scmp.ne.s32.totalorder %s104, %s118
    %p120 = scmp.eq.s32.totalorder %s31, 0
    %p121 = por %p119, %p120
    %s123 = sadd.s32 %s122, 1
    %p126 = scmp.eq.s32.totalorder %s25, 1
    %p127 = scmp.ne.s32.totalorder %s122, %s124
    %p128 = scmp.eq.s32.totalorder %s25, 0
    %p129 = por %p127, %p128
    %p130 = scmp.ne.s32.totalorder %s122, %s124
    %p131 = scmp.eq.s32.totalorder %s30, 1
    %p132 = por %p130, %p131
    %p133 = scmp.ne.s32.totalorder %s124, %s125
    %p134 = scmp.eq.s32.totalorder %s30, 0
    %p135 = por %p133, %p134
    %p136 = scmp.ne.s32.totalorder %s124, %s125
    %p137 = scmp.eq.s32.totalorder %s31, 1
    %p138 = por %p136, %p137
    %p140 = scmp.ne.s32.totalorder %s125, %s139
    %p141 = scmp.eq.s32.totalorder %s31, 0
    %p142 = por %p140, %p141
    %s144 = sadd.s32 %s143, 1
    %p147 = scmp.eq.s32.totalorder %s25, 1
    %p148 = scmp.ne.s32.totalorder %s143, %s145
    %p149 = scmp.eq.s32.totalorder %s25, 0
    %p150 = por %p148, %p149
    %p151 = scmp.ne.s32.totalorder %s143, %s145
    %p152 = scmp.eq.s32.totalorder %s30, 1
    %p153 = por %p151, %p152
    %p154 = scmp.ne.s32.totalorder %s145, %s146
    %p155 = scmp.eq.s32.totalorder %s30, 0
    %p156 = por %p154, %p155
    %p157 = scmp.ne.s32.totalorder %s145, %s146
    %p158 = scmp.eq.s32.totalorder %s31, 1
    %p159 = por %p157, %p158
    %p161 = scmp.ne.s32.totalorder %s146, %s160
    %p162 = scmp.eq.s32.totalorder %s31, 0
    %p163 = por %p161, %p162
    %s165 = sadd.s32 %s164, 1
    %p168 = scmp.eq.s32.totalorder %s25, 1
    %p169 = scmp.ne.s32.totalorder %s164, %s166
    %p170 = scmp.eq.s32.totalorder %s25, 0
    %p171 = por %p169, %p170
    %p172 = scmp.ne.s32.totalorder %s164, %s166
    %p173 = scmp.eq.s32.totalorder %s30, 1
    %p174 = por %p172, %p173
    %p175 = scmp.ne.s32.totalorder %s166, %s167
    %p176 = scmp.eq.s32.totalorder %s30, 0
    %p177 = por %p175, %p176
    %p178 = scmp.ne.s32.totalorder %s166, %s167
    %p179 = scmp.eq.s32.totalorder %s31, 1
    %p180 = por %p178, %p179
    %p182 = scmp.ne.s32.totalorder %s167, %s181
    %p183 = scmp.eq.s32.totalorder %s31, 0
    %p184 = por %p182, %p183
    %s186 = sadd.s32 %s185, 1
    %p189 = scmp.eq.s32.totalorder %s25, 1
    %p190 = scmp.ne.s32.totalorder %s185, %s187
    %p191 = scmp.eq.s32.totalorder %s25, 0
    %p192 = por %p190, %p191
    %p193 = scmp.ne.s32.totalorder %s185, %s187
    %p194 = scmp.eq.s32.totalorder %s30, 1
    %p195 = por %p193, %p194
    %p196 = scmp.ne.s32.totalorder %s187, %s188
    %p197 = scmp.eq.s32.totalorder %s30, 0
    %p198 = por %p196, %p197
    %p199 = scmp.ne.s32.totalorder %s187, %s188
    %p200 = scmp.eq.s32.totalorder %s31, 1
    %p201 = por %p199, %p200
    %p203 = scmp.ne.s32.totalorder %s188, %s202
    %p204 = scmp.eq.s32.totalorder %s31, 0
    %p205 = por %p203, %p204
    %s207 = sadd.s32 %s206, 1
    %p210 = scmp.eq.s32.totalorder %s25, 1
    %p211 = scmp.ne.s32.totalorder %s206, %s208
    %p212 = scmp.eq.s32.totalorder %s25, 0
    %p213 = por %p211, %p212
    %p214 = scmp.ne.s32.totalorder %s206, %s208
    %p215 = scmp.eq.s32.totalorder %s30, 1
    %p216 = por %p214, %p215
    %p217 = scmp.ne.s32.totalorder %s208, %s209
    %p218 = scmp.eq.s32.totalorder %s30, 0
    %p219 = por %p217, %p218
    %p220 = scmp.ne.s32.totalorder %s208, %s209
    %p221 = scmp.eq.s32.totalorder %s31, 1
    %p222 = por %p220, %p221
    %p224 = scmp.ne.s32.totalorder %s209, %s223
    %p225 = scmp.eq.s32.totalorder %s31, 0
    %p226 = por %p224, %p225
    %s228 = sadd.s32 %s227, 1
    %p231 = scmp.eq.s32.totalorder %s25, 1
    %p232 = scmp.ne.s32.totalorder %s227, %s229
    %p233 = scmp.eq.s32.totalorder %s25, 0
    %p234 = por %p232, %p233
    %p235 = scmp.ne.s32.totalorder %s227, %s229
    %p236 = scmp.eq.s32.totalorder %s30, 1
    %p237 = por %p235, %p236
    %p238 = scmp.ne.s32.totalorder %s229, %s230
    %p239 = scmp.eq.s32.totalorder %s30, 0
    %p240 = por %p238, %p239
    %p241 = scmp.ne.s32.totalorder %s229, %s230
    %p242 = scmp.eq.s32.totalorder %s31, 1
    %p243 = por %p241, %p242
    %p245 = scmp.ne.s32.totalorder %s230, %s244
    %p246 = scmp.eq.s32.totalorder %s31, 0
    %p247 = por %p245, %p246
    %s249 = sadd.s32 %s248, 1
    %p252 = scmp.eq.s32.totalorder %s25, 1
    %p253 = scmp.ne.s32.totalorder %s248, %s250
    %p254 = scmp.eq.s32.totalorder %s25, 0
    %p255 = por %p253, %p254
    %p256 = scmp.ne.s32.totalorder %s248, %s250
    %p257 = scmp.eq.s32.totalorder %s30, 1
    %p258 = por %p256, %p257
    %p259 = scmp.ne.s32.totalorder %s250, %s251
    %p260 = scmp.eq.s32.totalorder %s30, 0
    %p261 = por %p259, %p260
    %p262 = scmp.ne.s32.totalorder %s250, %s251
    %p263 = scmp.eq.s32.totalorder %s31, 1
    %p264 = por %p262, %p263
    %p266 = scmp.ne.s32.totalorder %s251, %s265
    %p267 = scmp.eq.s32.totalorder %s31, 0
    %p268 = por %p266, %p267
    %s270 = sadd.s32 %s269, 1
    %p273 = scmp.eq.s32.totalorder %s25, 1
    %p274 = scmp.ne.s32.totalorder %s269, %s271
    %p275 = scmp.eq.s32.totalorder %s25, 0
    %p276 = por %p274, %p275
    %p277 = scmp.ne.s32.totalorder %s269, %s271
    %p278 = scmp.eq.s32.totalorder %s30, 1
    %p279 = por %p277, %p278
    %p280 = scmp.ne.s32.totalorder %s271, %s272
    %p281 = scmp.eq.s32.totalorder %s30, 0
    %p282 = por %p280, %p281
    %p283 = scmp.ne.s32.totalorder %s271, %s272
    %p284 = scmp.eq.s32.totalorder %s31, 1
    %p285 = por %p283, %p284
    %p287 = scmp.ne.s32.totalorder %s272, %s286
    %p288 = scmp.eq.s32.totalorder %s31, 0
    %p289 = por %p287, %p288
    %s291 = sadd.s32 %s290, 1
    %p294 = scmp.eq.s32.totalorder %s25, 1
    %p295 = scmp.ne.s32.totalorder %s290, %s292
    %p296 = scmp.eq.s32.totalorder %s25, 0
    %p297 = por %p295, %p296
    %p298 = scmp.ne.s32.totalorder %s290, %s292
    %p299 = scmp.eq.s32.totalorder %s30, 1
    %p300 = por %p298, %p299
    %p301 = scmp.ne.s32.totalorder %s292, %s293
    %p302 = scmp.eq.s32.totalorder %s30, 0
    %p303 = por %p301, %p302
    %p304 = scmp.ne.s32.totalorder %s292, %s293
    %p305 = scmp.eq.s32.totalorder %s31, 1
    %p306 = por %p304, %p305
    %p308 = scmp.ne.s32.totalorder %s293, %s307
    %p309 = scmp.eq.s32.totalorder %s31, 0
    %p310 = por %p308, %p309
    %s312 = sadd.s32 %s311, 1
    %p315 = scmp.eq.s32.totalorder %s25, 1
    %p316 = scmp.ne.s32.totalorder %s311, %s313
    %p317 = scmp.eq.s32.totalorder %s25, 0
    %p318 = por %p316, %p317
    %p319 = scmp.ne.s32.totalorder %s311, %s313
    %p320 = scmp.eq.s32.totalorder %s30, 1
    %p321 = por %p319, %p320
    %p322 = scmp.ne.s32.totalorder %s313, %s314
    %p323 = scmp.eq.s32.totalorder %s30, 0
    %p324 = por %p322, %p323
    %p325 = scmp.ne.s32.totalorder %s313, %s314
    %p326 = scmp.eq.s32.totalorder %s31, 1
    %p327 = por %p325, %p326
    %p329 = scmp.ne.s32.totalorder %s314, %s328
    %p330 = scmp.eq.s32.totalorder %s31, 0
    %p331 = por %p329, %p330
    %s333 = sadd.s32 %s332, 1
    %p336 = scmp.eq.s32.totalorder %s25, 1
    %p337 = scmp.ne.s32.totalorder %s332, %s334
    %p338 = scmp.eq.s32.totalorder %s25, 0
    %p339 = por %p337, %p338
    %p340 = scmp.ne.s32.totalorder %s332, %s334
    %p341 = scmp.eq.s32.totalorder %s30, 1
    %p342 = por %p340, %p341
    %p343 = scmp.ne.s32.totalorder %s334, %s335
    %p344 = scmp.eq.s32.totalorder %s30, 0
    %p345 = por %p343, %p344
    %p346 = scmp.ne.s32.totalorder %s334, %s335
    %p347 = scmp.eq.s32.totalorder %s31, 1
    %p348 = por %p346, %p347
    %p350 = scmp.ne.s32.totalorder %s335, %s349
    %p351 = scmp.eq.s32.totalorder %s31, 0
    %p352 = por %p350, %p351
    %s354 = sadd.s32 %s353, 1
    %p357 = scmp.eq.s32.totalorder %s25, 1
    %p358 = scmp.ne.s32.totalorder %s353, %s355
    %p359 = scmp.eq.s32.totalorder %s25, 0
    %p360 = por %p358, %p359
    %p361 = scmp.ne.s32.totalorder %s353, %s355
    %p362 = scmp.eq.s32.totalorder %s30, 1
    %p363 = por %p361, %p362
    %p364 = scmp.ne.s32.totalorder %s355, %s356
    %p365 = scmp.eq.s32.totalorder %s30, 0
    %p366 = por %p364, %p365
    %p367 = scmp.ne.s32.totalorder %s355, %s356
    %p368 = scmp.eq.s32.totalorder %s31, 1
    %p369 = por %p367, %p368
    %p371 = scmp.ne.s32.totalorder %s356, %s370
    %p372 = scmp.eq.s32.totalorder %s31, 0
    %p373 = por %p371, %p372
    %s375 = sadd.s32 %s374, 1
    %p378 = scmp.eq.s32.totalorder %s25, 1
    %p379 = scmp.ne.s32.totalorder %s374, %s376
    %p380 = scmp.eq.s32.totalorder %s25, 0
    %p381 = por %p379, %p380
    %p382 = scmp.ne.s32.totalorder %s374, %s376
    %p383 = scmp.eq.s32.totalorder %s30, 1
    %p384 = por %p382, %p383
    %p385 = scmp.ne.s32.totalorder %s376, %s377
    %p386 = scmp.eq.s32.totalorder %s30, 0
    %p387 = por %p385, %p386
    %p388 = scmp.ne.s32.totalorder %s376, %s377
    %p389 = scmp.eq.s32.totalorder %s31, 1
    %p390 = por %p388, %p389
    %p392 = scmp.ne.s32.totalorder %s377, %s391
    %p393 = scmp.eq.s32.totalorder %s31, 0
    %p394 = por %p392, %p393
    %s396 = sadd.s32 %s395, 1
    %p399 = scmp.eq.s32.totalorder %s25, 1
    %p400 = scmp.ne.s32.totalorder %s395, %s397
    %p401 = scmp.eq.s32.totalorder %s25, 0
    %p402 = por %p400, %p401
    %p403 = scmp.ne.s32.totalorder %s395, %s397
    %p404 = scmp.eq.s32.totalorder %s30, 1
    %p405 = por %p403, %p404
    %p406 = scmp.ne.s32.totalorder %s397, %s398
    %p407 = scmp.eq.s32.totalorder %s30, 0
    %p408 = por %p406, %p407
    %p409 = scmp.ne.s32.totalorder %s397, %s398
    %p410 = scmp.eq.s32.totalorder %s31, 1
    %p411 = por %p409, %p410
    %p413 = scmp.ne.s32.totalorder %s398, %s412
    %p414 = scmp.eq.s32.totalorder %s31, 0
    %p415 = por %p413, %p414
    %s417 = sadd.s32 %s416, 1
    %p420 = scmp.eq.s32.totalorder %s25, 1
    %p421 = scmp.ne.s32.totalorder %s416, %s418
    %p422 = scmp.eq.s32.totalorder %s25, 0
    %p423 = por %p421, %p422
    %p424 = scmp.ne.s32.totalorder %s416, %s418
    %p425 = scmp.eq.s32.totalorder %s30, 1
    %p426 = por %p424, %p425
    %p427 = scmp.ne.s32.totalorder %s418, %s419
    %p428 = scmp.eq.s32.totalorder %s30, 0
    %p429 = por %p427, %p428
    %p430 = scmp.ne.s32.totalorder %s418, %s419
    %p431 = scmp.eq.s32.totalorder %s31, 1
    %p432 = por %p430, %p431
    %p434 = scmp.ne.s32.totalorder %s419, %s433
    %p435 = scmp.eq.s32.totalorder %s31, 0
    %p436 = por %p434, %p435
    %s437 = ssub.s32 %s25, %s32
    %p438 = scmp.eq.s32.totalorder %s437, 0
    %s440 = sadd.s32 %s439, 1
    %s441 = scalar_select %p438, %s439, %s440
    %p444 = pneg %p438
    %p445 = scmp.eq.s32.totalorder %s25, 1
    %p446 = por %p444, %p445
    %p447 = scmp.ne.s32.totalorder %s439, %s442
    %p448 = scmp.eq.s32.totalorder %s25, 0
    %p449 = por %p447, %p448
    %p450 = scmp.ne.s32.totalorder %s439, %s442
    %p451 = scmp.eq.s32.totalorder %s30, 1
    %p452 = por %p450, %p451
    %p453 = scmp.ne.s32.totalorder %s442, %s443
    %p454 = scmp.eq.s32.totalorder %s30, 0
    %p455 = por %p453, %p454
    %p456 = scmp.ne.s32.totalorder %s442, %s443
    %p457 = scmp.eq.s32.totalorder %s31, 1
    %p458 = por %p456, %p457
    %p460 = scmp.ne.s32.totalorder %s443, %s459
    %p461 = scmp.eq.s32.totalorder %s31, 0
    %p462 = por %p460, %p461
    %p463 = scmp.le.s32.totalorder 1, %s25
    %p464 = scmp.lt.s32.totalorder %s25, 3
    %p465 = pnand %p463, %p464
    %p466 = pneg %p465
    // Predicated region
    $region9: #{vit_model_forward.1} parent=5 // pred_check
      _
    $region10: #{vit_model_forward.1} parent=5 // pred_check_branch
      %468 = sbr.rel (%p465) target = $region12
    $region11: #{vit_model_forward.1} parent=5 // pred_region
      %s469 = ssub.s32 %s25, 1
      // Predicated region
      $region13: #{vit_model_forward.1} parent=11 // pred_check
        %p470 = pneg %p72
      $region14: #{vit_model_forward.1} parent=11 // pred_check_branch
        %472 = sbr.rel (%p470) target = $region16
      $region15: #{vit_model_forward.1} parent=11 // pred_region
        _
      $region16: #{vit_model_forward.1} parent=11 // pred_fallthru
        _
      // Predicated region
      $region17: #{vit_model_forward.1} parent=11 // pred_check
        %p473 = pneg %p93
      $region18: #{vit_model_forward.1} parent=11 // pred_check_branch
        %475 = sbr.rel (%p473) target = $region20
      $region19: #{vit_model_forward.1} parent=11 // pred_region
        _
      $region20: #{vit_model_forward.1} parent=11 // pred_fallthru
        _
      // Predicated region
      $region21: #{vit_model_forward.1} parent=11 // pred_check
        %p476 = pneg %p114
      $region22: #{vit_model_forward.1} parent=11 // pred_check_branch
        %478 = sbr.rel (%p476) target = $region24
      $region23: #{vit_model_forward.1} parent=11 // pred_region
        _
      $region24: #{vit_model_forward.1} parent=11 // pred_fallthru
        _
      // Predicated region
      $region25: #{vit_model_forward.1} parent=11 // pred_check
        %p479 = pneg %p135
      $region26: #{vit_model_forward.1} parent=11 // pred_check_branch
        %481 = sbr.rel (%p479) target = $region28
      $region27: #{vit_model_forward.1} parent=11 // pred_region
        _
      $region28: #{vit_model_forward.1} parent=11 // pred_fallthru
        _
      // Predicated region
      $region29: #{vit_model_forward.1} parent=11 // pred_check
        %p482 = pneg %p156
      $region30: #{vit_model_forward.1} parent=11 // pred_check_branch
        %484 = sbr.rel (%p482) target = $region32
      $region31: #{vit_model_forward.1} parent=11 // pred_region
        _
      $region32: #{vit_model_forward.1} parent=11 // pred_fallthru
        _
      // Predicated region
      $region33: #{vit_model_forward.1} parent=11 // pred_check
        %p485 = pneg %p177
      $region34: #{vit_model_forward.1} parent=11 // pred_check_branch
        %487 = sbr.rel (%p485) target = $region36
      $region35: #{vit_model_forward.1} parent=11 // pred_region
        _
      $region36: #{vit_model_forward.1} parent=11 // pred_fallthru
        _
      // Predicated region
      $region37: #{vit_model_forward.1} parent=11 // pred_check
        %p488 = pneg %p198
      $region38: #{vit_model_forward.1} parent=11 // pred_check_branch
        %490 = sbr.rel (%p488) target = $region40
      $region39: #{vit_model_forward.1} parent=11 // pred_region
        _
      $region40: #{vit_model_forward.1} parent=11 // pred_fallthru
        _
      // Predicated region
      $region41: #{vit_model_forward.1} parent=11 // pred_check
        %p491 = pneg %p219
      $region42: #{vit_model_forward.1} parent=11 // pred_check_branch
        %493 = sbr.rel (%p491) target = $region44
      $region43: #{vit_model_forward.1} parent=11 // pred_region
        _
      $region44: #{vit_model_forward.1} parent=11 // pred_fallthru
        _
      // Predicated region
      $region45: #{vit_model_forward.1} parent=11 // pred_check
        %p494 = pneg %p240
      $region46: #{vit_model_forward.1} parent=11 // pred_check_branch
        %496 = sbr.rel (%p494) target = $region48
      $region47: #{vit_model_forward.1} parent=11 // pred_region
        _
      $region48: #{vit_model_forward.1} parent=11 // pred_fallthru
        _
      // Predicated region
      $region49: #{vit_model_forward.1} parent=11 // pred_check
        %p497 = pneg %p261
      $region50: #{vit_model_forward.1} parent=11 // pred_check_branch
        %499 = sbr.rel (%p497) target = $region52
      $region51: #{vit_model_forward.1} parent=11 // pred_region
        _
      $region52: #{vit_model_forward.1} parent=11 // pred_fallthru
        _
      // Predicated region
      $region53: #{vit_model_forward.1} parent=11 // pred_check
        %p500 = pneg %p282
      $region54: #{vit_model_forward.1} parent=11 // pred_check_branch
        %502 = sbr.rel (%p500) target = $region56
      $region55: #{vit_model_forward.1} parent=11 // pred_region
        _
      $region56: #{vit_model_forward.1} parent=11 // pred_fallthru
        _
      // Predicated region
      $region57: #{vit_model_forward.1} parent=11 // pred_check
        %p503 = pneg %p303
      $region58: #{vit_model_forward.1} parent=11 // pred_check_branch
        %505 = sbr.rel (%p503) target = $region60
      $region59: #{vit_model_forward.1} parent=11 // pred_region
        _
      $region60: #{vit_model_forward.1} parent=11 // pred_fallthru
        _
      // Predicated region
      $region61: #{vit_model_forward.1} parent=11 // pred_check
        %p506 = pneg %p324
      $region62: #{vit_model_forward.1} parent=11 // pred_check_branch
        %508 = sbr.rel (%p506) target = $region64
      $region63: #{vit_model_forward.1} parent=11 // pred_region
        _
      $region64: #{vit_model_forward.1} parent=11 // pred_fallthru
        _
      // Predicated region
      $region65: #{vit_model_forward.1} parent=11 // pred_check
        %p509 = pneg %p345
      $region66: #{vit_model_forward.1} parent=11 // pred_check_branch
        %511 = sbr.rel (%p509) target = $region68
      $region67: #{vit_model_forward.1} parent=11 // pred_region
        _
      $region68: #{vit_model_forward.1} parent=11 // pred_fallthru
        _
      // Predicated region
      $region69: #{vit_model_forward.1} parent=11 // pred_check
        %p512 = pneg %p366
      $region70: #{vit_model_forward.1} parent=11 // pred_check_branch
        %514 = sbr.rel (%p512) target = $region72
      $region71: #{vit_model_forward.1} parent=11 // pred_region
        _
      $region72: #{vit_model_forward.1} parent=11 // pred_fallthru
        _
      // Predicated region
      $region73: #{vit_model_forward.1} parent=11 // pred_check
        %p515 = pneg %p387
      $region74: #{vit_model_forward.1} parent=11 // pred_check_branch
        %517 = sbr.rel (%p515) target = $region76
      $region75: #{vit_model_forward.1} parent=11 // pred_region
        _
      $region76: #{vit_model_forward.1} parent=11 // pred_fallthru
        _
      // Predicated region
      $region77: #{vit_model_forward.1} parent=11 // pred_check
        %p518 = pneg %p408
      $region78: #{vit_model_forward.1} parent=11 // pred_check_branch
        %520 = sbr.rel (%p518) target = $region80
      $region79: #{vit_model_forward.1} parent=11 // pred_region
        _
      $region80: #{vit_model_forward.1} parent=11 // pred_fallthru
        _
      // Predicated region
      $region81: #{vit_model_forward.1} parent=11 // pred_check
        %p521 = pneg %p429
      $region82: #{vit_model_forward.1} parent=11 // pred_check_branch
        %523 = sbr.rel (%p521) target = $region84
      $region83: #{vit_model_forward.1} parent=11 // pred_region
        _
      $region84: #{vit_model_forward.1} parent=11 // pred_fallthru
        _
    $region12: #{vit_model_forward.1} parent=5 // pred_fallthru
      _
    %p524 = scmp.lt.s32.totalorder %s25, 2
    // Predicated region
    $region85: #{vit_model_forward.1} parent=5 // pred_check
      %p525 = pneg %p524
    $region86: #{vit_model_forward.1} parent=5 // pred_check_branch
      %527 = sbr.rel (%p525) target = $region88
    $region87: #{vit_model_forward.1} parent=5 // pred_region
      // Predicated region
      $region89: #{vit_model_forward.1} parent=87 // pred_check
        %p528 = pneg %p45
      $region90: #{vit_model_forward.1} parent=87 // pred_check_branch
        %530 = sbr.rel (%p528) target = $region92
      $region91: #{vit_model_forward.1} parent=87 // pred_region
        %p531 = scmp.lt.s32.totalorder %s25, 1
        %s532 = scalar_select %p531, %s25, 1
        %s533 = smul.addr %s532, 2
        %s534 = smul.addr %s533, 8
        %s535 = scalar_lea.vmem %s0, %s534
      $region92: #{vit_model_forward.1} parent=87 // pred_fallthru
        _
    $region88: #{vit_model_forward.1} parent=5 // pred_fallthru
      _
    %p536 = scmp.le.s32.totalorder 1, %s25
    %p537 = scmp.lt.s32.totalorder %s25, 3
    %p538 = pnand %p536, %p537
    %p539 = pneg %p538
    // Predicated region
    $region93: #{vit_model_forward.1} parent=5 // pred_check
      _
    $region94: #{vit_model_forward.1} parent=5 // pred_check_branch
      %541 = sbr.rel (%p538) target = $region96
    $region95: #{vit_model_forward.1} parent=5 // pred_region
      %s542 = ssub.s32 %s25, 1
      %p543 = scmp.lt.s32.totalorder %s30, 1
      %s544 = scalar_select %p543, %s30, 1
      %s545 = smul.addr %s544, 2
      %s546 = smul.addr %s545, 8
      %s547 = scalar_lea.vmem %s0, %s546
      %p548 = pneg %p51
      %p549 = pneg %p48
      %p550 = pneg %p72
      %p551 = pneg %p69
      %p552 = pneg %p93
      %p553 = pneg %p90
      %p554 = pneg %p114
      %p555 = pneg %p111
      %p556 = pneg %p135
      %p557 = pneg %p132
      %p558 = pneg %p156
      %p559 = pneg %p153
      %p560 = pneg %p177
      %p561 = pneg %p174
      %p562 = pneg %p198
      %p563 = pneg %p195
      %p564 = pneg %p219
      %p565 = pneg %p216
      %p566 = pneg %p240
      %p567 = pneg %p237
      %p568 = pneg %p261
      %p569 = pneg %p258
      %p570 = pneg %p282
      %p571 = pneg %p279
      %p572 = pneg %p303
      %p573 = pneg %p300
      %p574 = pneg %p324
      %p575 = pneg %p321
      %p576 = pneg %p345
      %p577 = pneg %p342
      %p578 = pneg %p366
      %p579 = pneg %p363
      %p580 = pneg %p387
      %p581 = pneg %p384
      %p582 = pneg %p408
      %p583 = pneg %p405
      %p584 = pneg %p429
      %p585 = pneg %p426
      %p586 = pneg %p455
      %p587 = pneg %p452
      %p588 = scmp.lt.s32.totalorder %s30, 1
      %s589 = scalar_select %p588, %s30, 1
      %s590 = smul.addr %s589, 8
      %s591 = scalar_lea.vmem %s19, %s590
      %p592 = scmp.lt.s32.totalorder %s30, 1
      %s593 = scalar_select %p592, %s30, 1
      %s594 = smul.addr %s593, 2
      %s595 = smul.addr %s594, 8
      %s596 = scalar_lea.vmem %s0, %s595
      %p597 = scmp.lt.s32.totalorder %s30, 1
      %s598 = scalar_select %p597, %s30, 1
      %s599 = smul.addr %s598, 8
      %s600 = scalar_lea.vmem %s19, %s599
      %v601 = vlaneseq
      %v602 = vand.u32 %v601, 127
      %vm603 = vcmp.lt.s32.totalorder %v602, 5
      %v604 = vsel %vm603, 0.0, -1e+30
      %v605 = vld [vmem:[%s596] sm:$0xff]
      %v606 = vld [vmem:[%s596 + $0x8] sm:$0xff]
      %v607 = vld [vmem:[%s1] sm:$0xff]
      %v608 = vld [vmem:[%s1 + $0x8] sm:$0xff]
      %v609 = vld [vmem:[%s1 + $0x10] sm:$0xff]
      %v610 = vld [vmem:[%s1 + $0x18] sm:$0xff]
      %v611 = vld [vmem:[%s1 + $0x20] sm:$0xff]
      %v612 = vld [vmem:[%s1 + $0x28] sm:$0xff]
      %v613 = vld [vmem:[%s1 + $0x30] sm:$0xff]
      %v614 = vld [vmem:[%s1 + $0x38] sm:$0xff]
      %v615 = vld [vmem:[%s1 + $0x40] sm:$0xff]
      %v616 = vld [vmem:[%s1 + $0x48] sm:$0xff]
      %v617 = vld [vmem:[%s1 + $0x50] sm:$0xff]
      %v618 = vld [vmem:[%s1 + $0x58] sm:$0xff]
      %v619 = vld [vmem:[%s1 + $0x60] sm:$0xff]
      %v620 = vld [vmem:[%s1 + $0x68] sm:$0xff]
      %v621 = vld [vmem:[%s1 + $0x70] sm:$0xff]
      %v622 = vld [vmem:[%s1 + $0x78] sm:$0xff]
      %v623 = vld [vmem:[%s1 + $0x80] sm:$0xff]
      %v624 = vld [vmem:[%s1 + $0x88] sm:$0xff]
      %v625 = vld [vmem:[%s1 + $0x90] sm:$0xff]
      %v626 = vld [vmem:[%s1 + $0x98] sm:$0xff]
      %v627 = vld [vmem:[%s1 + $0xa0] sm:$0xff]
      %v628 = vld [vmem:[%s1 + $0xa8] sm:$0xff]
      %v629 = vld [vmem:[%s1 + $0xb0] sm:$0xff]
      %v630 = vld [vmem:[%s1 + $0xb8] sm:$0xff]
      %v631 = vld [vmem:[%s2] sm:$0xff]
      %vm632 = vcmask 523264
      %v634 = vsel %vm632, %v606, 0
      %636 = vmatprep.subr.mxu0 0.0
      %637 = vmatpush1.msra.mxu0 %v607
      %638 = vmatprep.subr.mxu0 0.0
      %639 = vmatpush1.msra.mxu0 %v608
      %640 = vmatprep.subr.mxu0 0.0
      %641 = vmatpush1.msra.mxu0 %v609
      %642 = vmatprep.subr.mxu0 0.0
      %643 = vmatpush1.msra.mxu0 %v610
      %644 = vmatprep.subr.mxu0 0.0
      %645 = vmatpush1.msra.mxu0 %v611
      %646 = vmatprep.subr.mxu0 0.0
      %647 = vmatpush1.msra.mxu0 %v612
      %648 = vmatprep.subr.mxu0 0.0
      %649 = vmatpush1.msra.mxu0 %v613
      %650 = vmatprep.subr.mxu0 0.0
      %651 = vmatpush1.msra.mxu0 %v614
      %652 = vmatprep.subr.mxu0 0.0
      %653 = vmatpush1.msra.mxu0 %v615
      %654 = vmatprep.subr.mxu0 0.0
      %655 = vmatpush1.msra.mxu0 %v616
      %656 = vmatprep.subr.mxu0 0.0
      %657 = vmatpush1.msra.mxu0 %v617
      %658 = vmatprep.subr.mxu0 0.0
      %659 = vmatpush1.msra.mxu0 %v618
      %660 = vmatprep.subr.mxu0 0.0
      %661 = vmatpush1.msra.mxu0 %v619
      %662 = vmatprep.subr.mxu0 0.0
      %663 = vmatpush1.msra.mxu0 %v620
      %664 = vmatprep.subr.mxu0 0.0
      %665 = vmatpush1.msra.mxu0 %v621
      %666 = vmatprep.subr.mxu0 0.0
      %667 = vmatpush1.msra.mxu0 %v622
      %668 = vmatprep.subr.mxu0 0.0
      %669 = vmatpush1.msra.mxu0 %v623
      %670 = vmatprep.subr.mxu0 0.0
      %671 = vmatpush1.msra.mxu0 %v624
      %672 = vmatprep.subr.mxu0 0.0
      %673 = vmatpush1.msra.mxu0 %v625
      %674 = vmatprep.subr.mxu0 0.0
      %675 = vmatpush1.msra.mxu0 %v626
      %676 = vmatprep.subr.mxu0 0.0
      %677 = vmatpush1.msra.mxu0 %v627
      %678 = vmatprep.subr.mxu0 0.0
      %679 = vmatpush1.msra.mxu0 %v628
      %680 = vmatprep.subr.mxu0 0.0
      %681 = vmatpush1.msra.mxu0 %v629
      %682 = vmatprep.subr.mxu0 0.0
      %683 = vmatpush1.msra.mxu0 %v630
      %684 = vmatprep.subr.mxu0 0.0
      %685 = vmatpush1.msra.mxu0 0.0
      %686 = vmatprep.subr.mxu0 0.0
      %687 = vmatpush1.msra.mxu0 0.0
      %688 = vmatprep.subr.mxu0 0.0
      %689 = vmatpush1.msra.mxu0 0.0
      %690 = vmatprep.subr.mxu0 0.0
      %691 = vmatpush1.msra.mxu0 0.0
      %692 = vmatprep.subr.mxu0 0.0
      %693 = vmatpush1.msra.mxu0 0.0
      %694 = vmatprep.subr.mxu0 0.0
      %695 = vmatpush1.msra.mxu0 0.0
      %696 = vmatprep.subr.mxu0 0.0
      %697 = vmatpush1.msra.mxu0 0.0
      %698 = vmatprep.subr.mxu0 0.0
      %699 = vmatpush1.msra.mxu0 0.0
      %700 = vmatprep.mubr.f32.mxu0 %v634
      %701 = vmatmul.mubr.f32.gmra.mrb[0].mxu0 %v605
      %v702 = vpop.f32.mrb[0].mxu0
      %v703 = vadd.f32 %v631, %v702
      %v704 = vpop.f32.mrb[0].mxu0
      %705 = vdwg.mxu0
      %v706 = vld [vmem:[%s3] sm:$0x1]
      %v707 = vld [vmem:[%s4] sm:$0x1]
      %vm708 = vcmask 261120
      %v709 = vsel %vm708, %v703, 0.0
      %710 = vadd.xlane.f32.xlu0 %v709
      %v711 = vpop.xlane.xlu0 %710
      %v712 = vrcp.pop 32.0
      %v713 = vmul.f32 %v711, %v712
      %v714 = vsub.f32 %v703, %v713
      %v715 = vmul.f32 %v714, %v714
      %v716 = vsel %vm708, %v715, 0.0
      %717 = vadd.xlane.f32.xlu0 %v716
      %v718 = vpop.xlane.xlu0 %717
      %v719 = vmul.f32 %v718, %v712
      %v720 = vadd.f32 %v719, 1e-12
      %v721 = vrsqrt.pop %v720
      %v722 = vmul.f32 %v714, %v721
      %v723 = vlaneseq
      %v724 = vshrl.u32 %v723, 7
      %v725 = vsub.s32 0, %v724
      %v726 = vrot.slane %v706, %v725
      %v727 = vmul.f32 %v722, %v726
      %v728 = vlaneseq
      %v729 = vshrl.u32 %v728, 7
      %v730 = vsub.s32 0, %v729
      %v731 = vrot.slane %v707, %v730
      %v732 = vadd.f32 %v727, %v731
      %v733 = vld [vmem:[%s5] sm:$0xff]
      %v734 = vld [vmem:[%s5 + $0x8] sm:$0xff]
      %v735 = vld [vmem:[%s5 + $0x10] sm:$0xff]
      %v736 = vld [vmem:[%s5 + $0x18] sm:$0xff]
      %v737 = vld [vmem:[%s6] sm:$0x1]
      %v738 = vlaneseq
      %v739 = vshrl.u32 %v738, 7
      %v740 = vsub.s32 0, %v739
      %v741 = vrot.slane %v737, %v740
      %v743 = vsel %vm708, %v732, 0
      %745 = vmatprep.subr.mxu0 0.0
      %746 = vmatpush1.msra.mxu0 %v733
      %747 = vmatprep.subr.mxu0 0.0
      %748 = vmatpush1.msra.mxu0 %v734
      %749 = vmatprep.subr.mxu0 0.0
      %750 = vmatpush1.msra.mxu0 %v735
      %751 = vmatprep.subr.mxu0 0.0
      %752 = vmatpush1.msra.mxu0 %v736
      %753 = vmatprep.subr.mxu0 0.0
      %754 = vmatpush1.msra.mxu0 0.0
      %755 = vmatprep.subr.mxu0 0.0
      %756 = vmatpush1.msra.mxu0 0.0
      %757 = vmatprep.subr.mxu0 0.0
      %758 = vmatpush1.msra.mxu0 0.0
      %759 = vmatprep.subr.mxu0 0.0
      %760 = vmatpush1.msra.mxu0 0.0
      %761 = vmatprep.subr.mxu0 0.0
      %762 = vmatpush1.msra.mxu0 0.0
      %763 = vmatprep.subr.mxu0 0.0
      %764 = vmatpush1.msra.mxu0 0.0
      %765 = vmatprep.subr.mxu0 0.0
      %766 = vmatpush1.msra.mxu0 0.0
      %767 = vmatprep.subr.mxu0 0.0
      %768 = vmatpush1.msra.mxu0 0.0
      %769 = vmatprep.subr.mxu0 0.0
      %770 = vmatpush1.msra.mxu0 0.0
      %771 = vmatprep.subr.mxu0 0.0
      %772 = vmatpush1.msra.mxu0 0.0
      %773 = vmatprep.subr.mxu0 0.0
      %774 = vmatpush1.msra.mxu0 0.0
      %775 = vmatprep.subr.mxu0 0.0
      %776 = vmatpush1.msra.mxu0 0.0
      %777 = vmatprep.subr.mxu0 0.0
      %778 = vmatpush1.msra.mxu0 0.0
      %779 = vmatprep.subr.mxu0 0.0
      %780 = vmatpush1.msra.mxu0 0.0
      %781 = vmatprep.subr.mxu0 0.0
      %782 = vmatpush1.msra.mxu0 0.0
      %783 = vmatprep.subr.mxu0 0.0
      %784 = vmatpush1.msra.mxu0 0.0
      %785 = vmatprep.subr.mxu0 0.0
      %786 = vmatpush1.msra.mxu0 0.0
      %787 = vmatprep.subr.mxu0 0.0
      %788 = vmatpush1.msra.mxu0 0.0
      %789 = vmatprep.subr.mxu0 0.0
      %790 = vmatpush1.msra.mxu0 0.0
      %791 = vmatprep.subr.mxu0 0.0
      %792 = vmatpush1.msra.mxu0 0.0
      %793 = vmatprep.subr.mxu0 0.0
      %794 = vmatpush1.msra.mxu0 0.0
      %795 = vmatprep.subr.mxu0 0.0
      %796 = vmatpush1.msra.mxu0 0.0
      %797 = vmatprep.subr.mxu0 0.0
      %798 = vmatpush1.msra.mxu0 0.0
      %799 = vmatprep.subr.mxu0 0.0
      %800 = vmatpush1.msra.mxu0 0.0
      %801 = vmatprep.subr.mxu0 0.0
      %802 = vmatpush1.msra.mxu0 0.0
      %803 = vmatprep.subr.mxu0 0.0
      %804 = vmatpush1.msra.mxu0 0.0
      %805 = vmatprep.subr.mxu0 0.0
      %806 = vmatpush1.msra.mxu0 0.0
      %807 = vmatprep.subr.mxu0 0.0
      %808 = vmatpush1.msra.mxu0 0.0
      %809 = vmatprep.mubr.f32.mxu0 0.0
      %810 = vmatmul.mubr.f32.gmra.mrb[0].mxu0 %v743
      %v811 = vpop.f32.mrb[0].mxu0
      %v812 = vadd.f32 %v741, %v811
      %v813 = vpop.f32.mrb[0].mxu0
      %814 = vdwg.mxu0
      %816 = vrot.lane.b32.xlu0 %v812, 96
      %v817 = vpop.permute.xlu0 %816
      %vm818 = vcmask 64512
      %v819 = vsel %vm818, %v812, 0
      %v821 = vsel %vm818, %v817, 0
      %823 = vmatprep.subr.mxu0 0.0
      %824 = vmatpush1.xpose.msra.mxu0 %v821
      %825 = vmatprep.subr.mxu0 0.0
      %826 = vmatpush1.xpose.msra.mxu0 0.0
      %827 = vmatprep.subr.mxu0 0.0
      %828 = vmatpush1.xpose.msra.mxu0 0.0
      %829 = vmatprep.subr.mxu0 0.0
      %830 = vmatpush1.xpose.msra.mxu0 0.0
      %831 = vmatprep.subr.mxu0 0.0
      %832 = vmatpush1.xpose.msra.mxu0 0.0
      %833 = vmatprep.subr.mxu0 0.0
      %834 = vmatpush1.xpose.msra.mxu0 0.0
      %835 = vmatprep.subr.mxu0 0.0
      %836 = vmatpush1.xpose.msra.mxu0 0.0
      %837 = vmatprep.subr.mxu0 0.0
      %838 = vmatpush1.xpose.msra.mxu0 0.0
      %839 = vmatprep.subr.mxu0 0.0
      %840 = vmatpush1.xpose.msra.mxu0 0.0
      %841 = vmatprep.subr.mxu0 0.0
      %842 = vmatpush1.xpose.msra.mxu0 0.0
      %843 = vmatprep.subr.mxu0 0.0
      %844 = vmatpush1.xpose.msra.mxu0 0.0
      %845 = vmatprep.subr.mxu0 0.0
      %846 = vmatpush1.xpose.msra.mxu0 0.0
      %847 = vmatprep.subr.mxu0 0.0
      %848 = vmatpush1.xpose.msra.mxu0 0.0
      %849 = vmatprep.subr.mxu0 0.0
      %850 = vmatpush1.xpose.msra.mxu0 0.0
      %851 = vmatprep.subr.mxu0 0.0
      %852 = vmatpush1.xpose.msra.mxu0 0.0
      %853 = vmatprep.subr.mxu0 0.0
      %854 = vmatpush1.xpose.msra.mxu0 0.0
      %855 = vmatprep.subr.mxu0 0.0
      %856 = vmatpush1.xpose.msra.mxu0 0.0
      %857 = vmatprep.subr.mxu0 0.0
      %858 = vmatpush1.xpose.msra.mxu0 0.0
      %859 = vmatprep.subr.mxu0 0.0
      %860 = vmatpush1.xpose.msra.mxu0 0.0
      %861 = vmatprep.subr.mxu0 0.0
      %862 = vmatpush1.xpose.msra.mxu0 0.0
      %863 = vmatprep.subr.mxu0 0.0
      %864 = vmatpush1.xpose.msra.mxu0 0.0
      %865 = vmatprep.subr.mxu0 0.0
      %866 = vmatpush1.xpose.msra.mxu0 0.0
      %867 = vmatprep.subr.mxu0 0.0
      %868 = vmatpush1.xpose.msra.mxu0 0.0
      %869 = vmatprep.subr.mxu0 0.0
      %870 = vmatpush1.xpose.msra.mxu0 0.0
      %871 = vmatprep.subr.mxu0 0.0
      %872 = vmatpush1.xpose.msra.mxu0 0.0
      %873 = vmatprep.subr.mxu0 0.0
      %874 = vmatpush1.xpose.msra.mxu0 0.0
      %875 = vmatprep.subr.mxu0 0.0
      %876 = vmatpush1.xpose.msra.mxu0 0.0
      %877 = vmatprep.subr.mxu0 0.0
      %878 = vmatpush1.xpose.msra.mxu0 0.0
      %879 = vmatprep.subr.mxu0 0.0
      %880 = vmatpush1.xpose.msra.mxu0 0.0
      %881 = vmatprep.subr.mxu0 0.0
      %882 = vmatpush1.xpose.msra.mxu0 0.0
      %883 = vmatprep.subr.mxu0 0.0
      %884 = vmatpush1.xpose.msra.mxu0 0.0
      %885 = vmatprep.subr.mxu0 0.0
      %886 = vmatpush1.xpose.msra.mxu0 0.0
      %887 = vmatprep.mubr.f32.mxu0 0.0
      %888 = vmatmul.mubr.f32.gmra.mrb[0].mxu0 %v819
      %v889 = vpop.f32.mrb[0].mxu0
      %v890 = vadd.f32 0.0, %v889
      %v891 = vpop.f32.mrb[0].mxu0
      %892 = vdwg.mxu0
      %v893 = vmul.f32 %v890, 0.35355338
      %v894 = vadd.f32 %v893, %v604
      %v895 = vsel %vm818, %v894, -inf
      %896 = vmax.xlane.f32.xlu0 %v895
      %v897 = vpop.xlane.xlu0 %896
      %v898 = vsub.f32 %v894, %v897
      %v899 = vmul.f32 %v898, 1.442695
      %v900 = vpow.pop %v899
      %v901 = vsel %vm818, %v900, 0.0
      %902 = vadd.xlane.f32.xlu0 %v901
      %v903 = vpop.xlane.xlu0 %902
      %v904 = vrcp.pop %v903
      %v905 = vmul.f32 %v900, %v904
      %906 = vrot.lane.b32.xlu0 %v812, 64
      %v907 = vpop.permute.xlu0 %906
      %v910 = vsel %vm818, %v905, 0
      %912 = vmatprep.subr.mxu0 0.0
      %913 = vmatpush1.msra.mxu0 %v907
      %914 = vmatprep.subr.mxu0 0.0
      %915 = vmatpush1.msra.mxu0 0.0
      %916 = vmatprep.subr.mxu0 0.0
      %917 = vmatpush1.msra.mxu0 0.0
      %918 = vmatprep.subr.mxu0 0.0
      %919 = vmatpush1.msra.mxu0 0.0
      %920 = vmatprep.subr.mxu0 0.0
      %921 = vmatpush1.msra.mxu0 0.0
      %922 = vmatprep.subr.mxu0 0.0
      %923 = vmatpush1.msra.mxu0 0.0
      %924 = vmatprep.subr.mxu0 0.0
      %925 = vmatpush1.msra.mxu0 0.0
      %926 = vmatprep.subr.mxu0 0.0
      %927 = vmatpush1.msra.mxu0 0.0
      %928 = vmatprep.subr.mxu0 0.0
      %929 = vmatpush1.msra.mxu0 0.0
      %930 = vmatprep.subr.mxu0 0.0
      %931 = vmatpush1.msra.mxu0 0.0
      %932 = vmatprep.subr.mxu0 0.0
      %933 = vmatpush1.msra.mxu0 0.0
      %934 = vmatprep.subr.mxu0 0.0
      %935 = vmatpush1.msra.mxu0 0.0
      %936 = vmatprep.subr.mxu0 0.0
      %937 = vmatpush1.msra.mxu0 0.0
      %938 = vmatprep.subr.mxu0 0.0
      %939 = vmatpush1.msra.mxu0 0.0
      %940 = vmatprep.subr.mxu0 0.0
      %941 = vmatpush1.msra.mxu0 0.0
      %942 = vmatprep.subr.mxu0 0.0
      %943 = vmatpush1.msra.mxu0 0.0
      %944 = vmatprep.subr.mxu0 0.0
      %945 = vmatpush1.msra.mxu0 0.0
      %946 = vmatprep.subr.mxu0 0.0
      %947 = vmatpush1.msra.mxu0 0.0
      %948 = vmatprep.subr.mxu0 0.0
      %949 = vmatpush1.msra.mxu0 0.0
      %950 = vmatprep.subr.mxu0 0.0
      %951 = vmatpush1.msra.mxu0 0.0
      %952 = vmatprep.subr.mxu0 0.0
      %953 = vmatpush1.msra.mxu0 0.0
      %954 = vmatprep.subr.mxu0 0.0
      %955 = vmatpush1.msra.mxu0 0.0
      %956 = vmatprep.subr.mxu0 0.0
      %957 = vmatpush1.msra.mxu0 0.0
      %958 = vmatprep.subr.mxu0 0.0
      %959 = vmatpush1.msra.mxu0 0.0
      %960 = vmatprep.subr.mxu0 0.0
      %961 = vmatpush1.msra.mxu0 0.0
      %962 = vmatprep.subr.mxu0 0.0
      %963 = vmatpush1.msra.mxu0 0.0
      %964 = vmatprep.subr.mxu0 0.0
      %965 = vmatpush1.msra.mxu0 0.0
      %966 = vmatprep.subr.mxu0 0.0
      %967 = vmatpush1.msra.mxu0 0.0
      %968 = vmatprep.subr.mxu0 0.0
      %969 = vmatpush1.msra.mxu0 0.0
      %970 = vmatprep.subr.mxu0 0.0
      %971 = vmatpush1.msra.mxu0 0.0
      %972 = vmatprep.subr.mxu0 0.0
      %973 = vmatpush1.msra.mxu0 0.0
      %974 = vmatprep.subr.mxu0 0.0
      %975 = vmatpush1.msra.mxu0 0.0
      %976 = vmatprep.mubr.f32.mxu0 0.0
      %977 = vmatmul.mubr.f32.gmra.mrb[0].mxu0 %v910
      %v978 = vpop.f32.mrb[0].mxu0
      %v979 = vadd.f32 0.0, %v978
      %v980 = vpop.f32.mrb[0].mxu0
      %981 = vdwg.mxu0
      %982 = vrot.lane.b32.xlu0 %v812, 120
      %v983 = vpop.permute.xlu0 %982
      %984 = vrot.lane.b32.xlu0 %v812, 88
      %v985 = vpop.permute.xlu0 %984
      %v986 = vsel %vm818, %v983, 0
      %v988 = vsel %vm818, %v985, 0
      %990 = vmatprep.subr.mxu0 0.0
      %991 = vmatpush1.xpose.msra.mxu0 %v988
      %992 = vmatprep.subr.mxu0 0.0
      %993 = vmatpush1.xpose.msra.mxu0 0.0
      %994 = vmatprep.subr.mxu0 0.0
      %995 = vmatpush1.xpose.msra.mxu0 0.0
      %996 = vmatprep.subr.mxu0 0.0
      %997 = vmatpush1.xpose.msra.mxu0 0.0
      %998 = vmatprep.subr.mxu0 0.0
      %999 = vmatpush1.xpose.msra.mxu0 0.0
      %1000 = vmatprep.subr.mxu0 0.0
      %1001 = vmatpush1.xpose.msra.mxu0 0.0
      %1002 = vmatprep.subr.mxu0 0.0
      %1003 = vmatpush1.xpose.msra.mxu0 0.0
      %1004 = vmatprep.subr.mxu0 0.0
      %1005 = vmatpush1.xpose.msra.mxu0 0.0
      %1006 = vmatprep.subr.mxu0 0.0
      %1007 = vmatpush1.xpose.msra.mxu0 0.0
      %1008 = vmatprep.subr.mxu0 0.0
      %1009 = vmatpush1.xpose.msra.mxu0 0.0
      %1010 = vmatprep.subr.mxu0 0.0
      %1011 = vmatpush1.xpose.msra.mxu0 0.0
      %1012 = vmatprep.subr.mxu0 0.0
      %1013 = vmatpush1.xpose.msra.mxu0 0.0
      %1014 = vmatprep.subr.mxu0 0.0
      %1015 = vmatpush1.xpose.msra.mxu0 0.0
      %1016 = vmatprep.subr.mxu0 0.0
      %1017 = vmatpush1.xpose.msra.mxu0 0.0
      %1018 = vmatprep.subr.mxu0 0.0
      %1019 = vmatpush1.xpose.msra.mxu0 0.0
      %1020 = vmatprep.subr.mxu0 0.0
      %1021 = vmatpush1.xpose.msra.mxu0 0.0
      %1022 = vmatprep.subr.mxu0 0.0
      %1023 = vmatpush1.xpose.msra.mxu0 0.0
      %1024 = vmatprep.subr.mxu0 0.0
      %1025 = vmatpush1.xpose.msra.mxu0 0.0
      %1026 = vmatprep.subr.mxu0 0.0
      %1027 = vmatpush1.xpose.msra.mxu0 0.0
      %1028 = vmatprep.subr.mxu0 0.0
      %1029 = vmatpush1.xpose.msra.mxu0 0.0
      %1030 = vmatprep.subr.mxu0 0.0
      %1031 = vmatpush1.xpose.msra.mxu0 0.0
      %1032 = vmatprep.subr.mxu0 0.0
      %1033 = vmatpush1.xpose.msra.mxu0 0.0
      %1034 = vmatprep.subr.mxu0 0.0
      %1035 = vmatpush1.xpose.msra.mxu0 0.0
      %1036 = vmatprep.subr.mxu0 0.0
      %1037 = vmatpush1.xpose.msra.mxu0 0.0
      %1038 = vmatprep.subr.mxu0 0.0
      %1039 = vmatpush1.xpose.msra.mxu0 0.0
      %1040 = vmatprep.subr.mxu0 0.0
      %1041 = vmatpush1.xpose.msra.mxu0 0.0
      %1042 = vmatprep.subr.mxu0 0.0
      %1043 = vmatpush1.xpose.msra.mxu0 0.0
      %1044 = vmatprep.subr.mxu0 0.0
      %1045 = vmatpush1.xpose.msra.mxu0 0.0
      %1046 = vmatprep.subr.mxu0 0.0
      %1047 = vmatpush1.xpose.msra.mxu0 0.0
      %1048 = vmatprep.subr.mxu0 0.0
      %1049 = vmatpush1.xpose.msra.mxu0 0.0
      %1050 = vmatprep.subr.mxu0 0.0
      %1051 = vmatpush1.xpose.msra.mxu0 0.0
      %1052 = vmatprep.subr.mxu0 0.0
      %1053 = vmatpush1.xpose.msra.mxu0 0.0
      %1054 = vmatprep.mubr.f32.mxu0 0.0
      %1055 = vmatmul.mubr.f32.gmra.mrb[0].mxu0 %v986
      %v1056 = vpop.f32.mrb[0].mxu0
      %v1057 = vadd.f32 0.0, %v1056
      %v1058 = vpop.f32.mrb[0].mxu0
      %1059 = vdwg.mxu0
      %v1060 = vmul.f32 %v1057, 0.35355338
      %v1061 = vadd.f32 %v1060, %v604
      %v1062 = vsel %vm818, %v1061, -inf
      %1063 = vmax.xlane.f32.xlu0 %v1062
      %v1064 = vpop.xlane.xlu0 %1063
      %v1065 = vsub.f32 %v1061, %v1064
      %v1066 = vmul.f32 %v1065, 1.442695
      %v1067 = vpow.pop %v1066
      %v1068 = vsel %vm818, %v1067, 0.0
      %1069 = vadd.xlane.f32.xlu0 %v1068
      %v1070 = vpop.xlane.xlu0 %1069
      %v1071 = vrcp.pop %v1070
      %v1072 = vmul.f32 %v1067, %v1071
      %1073 = vrot.lane.b32.xlu0 %v812, 56
      %v1074 = vpop.permute.xlu0 %1073
      %v1077 = vsel %vm818, %v1072, 0
      %1079 = vmatprep.subr.mxu0 0.0
      %1080 = vmatpush1.msra.mxu0 %v1074
      %1081 = vmatprep.subr.mxu0 0.0
      %1082 = vmatpush1.msra.mxu0 0.0
      %1083 = vmatprep.subr.mxu0 0.0
      %1084 = vmatpush1.msra.mxu0 0.0
      %1085 = vmatprep.subr.mxu0 0.0
      %1086 = vmatpush1.msra.mxu0 0.0
      %1087 = vmatprep.subr.mxu0 0.0
      %1088 = vmatpush1.msra.mxu0 0.0
      %1089 = vmatprep.subr.mxu0 0.0
      %1090 = vmatpush1.msra.mxu0 0.0
      %1091 = vmatprep.subr.mxu0 0.0
      %1092 = vmatpush1.msra.mxu0 0.0
      %1093 = vmatprep.subr.mxu0 0.0
      %1094 = vmatpush1.msra.mxu0 0.0
      %1095 = vmatprep.subr.mxu0 0.0
      %1096 = vmatpush1.msra.mxu0 0.0
      %1097 = vmatprep.subr.mxu0 0.0
      %1098 = vmatpush1.msra.mxu0 0.0
      %1099 = vmatprep.subr.mxu0 0.0
      %1100 = vmatpush1.msra.mxu0 0.0
      %1101 = vmatprep.subr.mxu0 0.0
      %1102 = vmatpush1.msra.mxu0 0.0
      %1103 = vmatprep.subr.mxu0 0.0
      %1104 = vmatpush1.msra.mxu0 0.0
      %1105 = vmatprep.subr.mxu0 0.0
      %1106 = vmatpush1.msra.mxu0 0.0
      %1107 = vmatprep.subr.mxu0 0.0
      %1108 = vmatpush1.msra.mxu0 0.0
      %1109 = vmatprep.subr.mxu0 0.0
      %1110 = vmatpush1.msra.mxu0 0.0
      %1111 = vmatprep.subr.mxu0 0.0
      %1112 = vmatpush1.msra.mxu0 0.0
      %1113 = vmatprep.subr.mxu0 0.0
      %1114 = vmatpush1.msra.mxu0 0.0
      %1115 = vmatprep.subr.mxu0 0.0
      %1116 = vmatpush1.msra.mxu0 0.0
      %1117 = vmatprep.subr.mxu0 0.0
      %1118 = vmatpush1.msra.mxu0 0.0
      %1119 = vmatprep.subr.mxu0 0.0
      %1120 = vmatpush1.msra.mxu0 0.0
      %1121 = vmatprep.subr.mxu0 0.0
      %1122 = vmatpush1.msra.mxu0 0.0
      %1123 = vmatprep.subr.mxu0 0.0
      %1124 = vmatpush1.msra.mxu0 0.0
      %1125 = vmatprep.subr.mxu0 0.0
      %1126 = vmatpush1.msra.mxu0 0.0
      %1127 = vmatprep.subr.mxu0 0.0
      %1128 = vmatpush1.msra.mxu0 0.0
      %1129 = vmatprep.subr.mxu0 0.0
      %1130 = vmatpush1.msra.mxu0 0.0
      %1131 = vmatprep.subr.mxu0 0.0
      %1132 = vmatpush1.msra.mxu0 0.0
      %1133 = vmatprep.subr.mxu0 0.0
      %1134 = vmatpush1.msra.mxu0 0.0
      %1135 = vmatprep.subr.mxu0 0.0
      %1136 = vmatpush1.msra.mxu0 0.0
      %1137 = vmatprep.subr.mxu0 0.0
      %1138 = vmatpush1.msra.mxu0 0.0
      %1139 = vmatprep.subr.mxu0 0.0
      %1140 = vmatpush1.msra.mxu0 0.0
      %1141 = vmatprep.subr.mxu0 0.0
      %1142 = vmatpush1.msra.mxu0 0.0
      %1143 = vmatprep.mubr.f32.mxu0 0.0
      %1144 = vmatmul.mubr.f32.gmra.mrb[0].mxu0 %v1077
      %v1145 = vpop.f32.mrb[0].mxu0
      %v1146 = vadd.f32 0.0, %v1145
      %v1147 = vpop.f32.mrb[0].mxu0
      %1148 = vdwg.mxu0
      %1149 = vrot.lane.b32.xlu0 %v812, 112
      %v1150 = vpop.permute.xlu0 %1149
      %1151 = vrot.lane.b32.xlu0 %v812, 80
      %v1152 = vpop.permute.xlu0 %1151
      %v1153 = vsel %vm818, %v1150, 0
      %v1155 = vsel %vm818, %v1152, 0
      %1157 = vmatprep.subr.mxu0 0.0
      %1158 = vmatpush1.xpose.msra.mxu0 %v1155
      %1159 = vmatprep.subr.mxu0 0.0
      %1160 = vmatpush1.xpose.msra.mxu0 0.0
      %1161 = vmatprep.subr.mxu0 0.0
      %1162 = vmatpush1.xpose.msra.mxu0 0.0
      %1163 = vmatprep.subr.mxu0 0.0
      %1164 = vmatpush1.xpose.msra.mxu0 0.0
      %1165 = vmatprep.subr.mxu0 0.0
      %1166 = vmatpush1.xpose.msra.mxu0 0.0
      %1167 = vmatprep.subr.mxu0 0.0
      %1168 = vmatpush1.xpose.msra.mxu0 0.0
      %1169 = vmatprep.subr.mxu0 0.0
      %1170 = vmatpush1.xpose.msra.mxu0 0.0
      %1171 = vmatprep.subr.mxu0 0.0
      %1172 = vmatpush1.xpose.msra.mxu0 0.0
      %1173 = vmatprep.subr.mxu0 0.0
      %1174 = vmatpush1.xpose.msra.mxu0 0.0
      %1175 = vmatprep.subr.mxu0 0.0
      %1176 = vmatpush1.xpose.msra.mxu0 0.0
      %1177 = vmatprep.subr.mxu0 0.0
      %1178 = vmatpush1.xpose.msra.mxu0 0.0
      %1179 = vmatprep.subr.mxu0 0.0
      %1180 = vmatpush1.xpose.msra.mxu0 0.0
      %1181 = vmatprep.subr.mxu0 0.0
      %1182 = vmatpush1.xpose.msra.mxu0 0.0
      %1183 = vmatprep.subr.mxu0 0.0
      %1184 = vmatpush1.xpose.msra.mxu0 0.0
      %1185 = vmatprep.subr.mxu0 0.0
      %1186 = vmatpush1.xpose.msra.mxu0 0.0
      %1187 = vmatprep.subr.mxu0 0.0
      %1188 = vmatpush1.xpose.msra.mxu0 0.0
      %1189 = vmatprep.subr.mxu0 0.0
      %1190 = vmatpush1.xpose.msra.mxu0 0.0
      %1191 = vmatprep.subr.mxu0 0.0
      %1192 = vmatpush1.xpose.msra.mxu0 0.0
      %1193 = vmatprep.subr.mxu0 0.0
      %1194 = vmatpush1.xpose.msra.mxu0 0.0
      %1195 = vmatprep.subr.mxu0 0.0
      %1196 = vmatpush1.xpose.msra.mxu0 0.0
      %1197 = vmatprep.subr.mxu0 0.0
      %1198 = vmatpush1.xpose.msra.mxu0 0.0
      %1199 = vmatprep.subr.mxu0 0.0
      %1200 = vmatpush1.xpose.msra.mxu0 0.0
      %1201 = vmatprep.subr.mxu0 0.0
      %1202 = vmatpush1.xpose.msra.mxu0 0.0
      %1203 = vmatprep.subr.mxu0 0.0
      %1204 = vmatpush1.xpose.msra.mxu0 0.0
      %1205 = vmatprep.subr.mxu0 0.0
      %1206 = vmatpush1.xpose.msra.mxu0 0.0
      %1207 = vmatprep.subr.mxu0 0.0
      %1208 = vmatpush1.xpose.msra.mxu0 0.0
      %1209 = vmatprep.subr.mxu0 0.0
      %1210 = vmatpush1.xpose.msra.mxu0 0.0
      %1211 = vmatprep.subr.mxu0 0.0
      %1212 = vmatpush1.xpose.msra.mxu0 0.0
      %1213 = vmatprep.subr.mxu0 0.0
      %1214 = vmatpush1.xpose.msra.mxu0 0.0
      %1215 = vmatprep.subr.mxu0 0.0
      %1216 = vmatpush1.xpose.msra.mxu0 0.0
      %1217 = vmatprep.subr.mxu0 0.0
      %1218 = vmatpush1.xpose.msra.mxu0 0.0
      %1219 = vmatprep.subr.mxu0 0.0
      %1220 = vmatpush1.xpose.msra.mxu0 0.0
      %1221 = vmatprep.mubr.f32.mxu0 0.0
      %1222 = vmatmul.mubr.f32.gmra.mrb[0].mxu0 %v1153
      %v1223 = vpop.f32.mrb[0].mxu0
      %v1224 = vadd.f32 0.0, %v1223
      %v1225 = vpop.f32.mrb[0].mxu0
      %1226 = vdwg.mxu0
      %v1227 = vmul.f32 %v1224, 0.35355338
      %v1228 = vadd.f32 %v1227, %v604
      %v1229 = vsel %vm818, %v1228, -inf
      %1230 = vmax.xlane.f32.xlu0 %v1229
      %v1231 = vpop.xlane.xlu0 %1230
      %v1232 = vsub.f32 %v1228, %v1231
      %v1233 = vmul.f32 %v1232, 1.442695
      %v1234 = vpow.pop %v1233
      %v1235 = vsel %vm818, %v1234, 0.0
      %1236 = vadd.xlane.f32.xlu0 %v1235
      %v1237 = vpop.xlane.xlu0 %1236
      %v1238 = vrcp.pop %v1237
      %v1239 = vmul.f32 %v1234, %v1238
      %1240 = vrot.lane.b32.xlu0 %v812, 48
      %v1241 = vpop.permute.xlu0 %1240
      %v1244 = vsel %vm818, %v1239, 0
      %1246 = vmatprep.subr.mxu0 0.0
      %1247 = vmatpush1.msra.mxu0 %v1241
      %1248 = vmatprep.subr.mxu0 0.0
      %1249 = vmatpush1.msra.mxu0 0.0
      %1250 = vmatprep.subr.mxu0 0.0
      %1251 = vmatpush1.msra.mxu0 0.0
      %1252 = vmatprep.subr.mxu0 0.0
      %1253 = vmatpush1.msra.mxu0 0.0
      %1254 = vmatprep.subr.mxu0 0.0
      %1255 = vmatpush1.msra.mxu0 0.0
      %1256 = vmatprep.subr.mxu0 0.0
      %1257 = vmatpush1.msra.mxu0 0.0
      %1258 = vmatprep.subr.mxu0 0.0
      %1259 = vmatpush1.msra.mxu0 0.0
      %1260 = vmatprep.subr.mxu0 0.0
      %1261 = vmatpush1.msra.mxu0 0.0
      %1262 = vmatprep.subr.mxu0 0.0
      %1263 = vmatpush1.msra.mxu0 0.0
      %1264 = vmatprep.subr.mxu0 0.0
      %1265 = vmatpush1.msra.mxu0 0.0
      %1266 = vmatprep.subr.mxu0 0.0
      %1267 = vmatpush1.msra.mxu0 0.0
      %1268 = vmatprep.subr.mxu0 0.0
      %1269 = vmatpush1.msra.mxu0 0.0
      %1270 = vmatprep.subr.mxu0 0.0
      %1271 = vmatpush1.msra.mxu0 0.0
      %1272 = vmatprep.subr.mxu0 0.0
      %1273 = vmatpush1.msra.mxu0 0.0
      %1274 = vmatprep.subr.mxu0 0.0
      %1275 = vmatpush1.msra.mxu0 0.0
      %1276 = vmatprep.subr.mxu0 0.0
      %1277 = vmatpush1.msra.mxu0 0.0
      %1278 = vmatprep.subr.mxu0 0.0
      %1279 = vmatpush1.msra.mxu0 0.0
      %1280 = vmatprep.subr.mxu0 0.0
      %1281 = vmatpush1.msra.mxu0 0.0
      %1282 = vmatprep.subr.mxu0 0.0
      %1283 = vmatpush1.msra.mxu0 0.0
      %1284 = vmatprep.subr.mxu0 0.0
      %1285 = vmatpush1.msra.mxu0 0.0
      %1286 = vmatprep.subr.mxu0 0.0
      %1287 = vmatpush1.msra.mxu0 0.0
      %1288 = vmatprep.subr.mxu0 0.0
      %1289 = vmatpush1.msra.mxu0 0.0
      %1290 = vmatprep.subr.mxu0 0.0
      %1291 = vmatpush1.msra.mxu0 0.0
      %1292 = vmatprep.subr.mxu0 0.0
      %1293 = vmatpush1.msra.mxu0 0.0
      %1294 = vmatprep.subr.mxu0 0.0
      %1295 = vmatpush1.msra.mxu0 0.0
      %1296 = vmatprep.subr.mxu0 0.0
      %1297 = vmatpush1.msra.mxu0 0.0
      %1298 = vmatprep.subr.mxu0 0.0
      %1299 = vmatpush1.msra.mxu0 0.0
      %1300 = vmatprep.subr.mxu0 0.0
      %1301 = vmatpush1.msra.mxu0 0.0
      %1302 = vmatprep.subr.mxu0 0.0
      %1303 = vmatpush1.msra.mxu0 0.0
      %1304 = vmatprep.subr.mxu0 0.0
      %1305 = vmatpush1.msra.mxu0 0.0
      %1306 = vmatprep.subr.mxu0 0.0
      %1307 = vmatpush1.msra.mxu0 0.0
      %1308 = vmatprep.subr.mxu0 0.0
      %1309 = vmatpush1.msra.mxu0 0.0
      %1310 = vmatprep.mubr.f32.mxu0 0.0
      %1311 = vmatmul.mubr.f32.gmra.mrb[0].mxu0 %v1244
      %v1312 = vpop.f32.mrb[0].mxu0
      %v1313 = vadd.f32 0.0, %v1312
      %v1314 = vpop.f32.mrb[0].mxu0
      %1315 = vdwg.mxu0
      %1316 = vrot.lane.b32.xlu0 %v812, 104
      %v1317 = vpop.permute.xlu0 %1316
      %1318 = vrot.lane.b32.xlu0 %v812, 72
      %v1319 = vpop.permute.xlu0 %1318
      %v1320 = vsel %vm818, %v1317, 0
      %v1322 = vsel %vm818, %v1319, 0
      %1324 = vmatprep.subr.mxu0 0.0
      %1325 = vmatpush1.xpose.msra.mxu0 %v1322
      %1326 = vmatprep.subr.mxu0 0.0
      %1327 = vmatpush1.xpose.msra.mxu0 0.0
      %1328 = vmatprep.subr.mxu0 0.0
      %1329 = vmatpush1.xpose.msra.mxu0 0.0
      %1330 = vmatprep.subr.mxu0 0.0
      %1331 = vmatpush1.xpose.msra.mxu0 0.0
      %1332 = vmatprep.subr.mxu0 0.0
      %1333 = vmatpush1.xpose.msra.mxu0 0.0
      %1334 = vmatprep.subr.mxu0 0.0
      %1335 = vmatpush1.xpose.msra.mxu0 0.0
      %1336 = vmatprep.subr.mxu0 0.0
      %1337 = vmatpush1.xpose.msra.mxu0 0.0
      %1338 = vmatprep.subr.mxu0 0.0
      %1339 = vmatpush1.xpose.msra.mxu0 0.0
      %1340 = vmatprep.subr.mxu0 0.0
      %1341 = vmatpush1.xpose.msra.mxu0 0.0
      %1342 = vmatprep.subr.mxu0 0.0
      %1343 = vmatpush1.xpose.msra.mxu0 0.0
      %1344 = vmatprep.subr.mxu0 0.0
      %1345 = vmatpush1.xpose.msra.mxu0 0.0
      %1346 = vmatprep.subr.mxu0 0.0
      %1347 = vmatpush1.xpose.msra.mxu0 0.0
      %1348 = vmatprep.subr.mxu0 0.0
      %1349 = vmatpush1.xpose.msra.mxu0 0.0
      %1350 = vmatprep.subr.mxu0 0.0
      %1351 = vmatpush1.xpose.msra.mxu0 0.0
      %1352 = vmatprep.subr.mxu0 0.0
      %1353 = vmatpush1.xpose.msra.mxu0 0.0
      %1354 = vmatprep.subr.mxu0 0.0
      %1355 = vmatpush1.xpose.msra.mxu0 0.0
      %1356 = vmatprep.subr.mxu0 0.0
      %1357 = vmatpush1.xpose.msra.mxu0 0.0
      %1358 = vmatprep.subr.mxu0 0.0
      %1359 = vmatpush1.xpose.msra.mxu0 0.0
      %1360 = vmatprep.subr.mxu0 0.0
      %1361 = vmatpush1.xpose.msra.mxu0 0.0
      %1362 = vmatprep.subr.mxu0 0.0
      %1363 = vmatpush1.xpose.msra.mxu0 0.0
      %1364 = vmatprep.subr.mxu0 0.0
      %1365 = vmatpush1.xpose.msra.mxu0 0.0
      %1366 = vmatprep.subr.mxu0 0.0
      %1367 = vmatpush1.xpose.msra.mxu0 0.0
      %1368 = vmatprep.subr.mxu0 0.0
      %1369 = vmatpush1.xpose.msra.mxu0 0.0
      %1370 = vmatprep.subr.mxu0 0.0
      %1371 = vmatpush1.xpose.msra.mxu0 0.0
      %1372 = vmatprep.subr.mxu0 0.0
      %1373 = vmatpush1.xpose.msra.mxu0 0.0
      %1374 = vmatprep.subr.mxu0 0.0
      %1375 = vmatpush1.xpose.msra.mxu0 0.0
      %1376 = vmatprep.subr.mxu0 0.0
      %1377 = vmatpush1.xpose.msra.mxu0 0.0
      %1378 = vmatprep.subr.mxu0 0.0
      %1379 = vmatpush1.xpose.msra.mxu0 0.0
      %1380 = vmatprep.subr.mxu0 0.0
      %1381 = vmatpush1.xpose.msra.mxu0 0.0
      %1382 = vmatprep.subr.mxu0 0.0
      %1383 = vmatpush1.xpose.msra.mxu0 0.0
      %1384 = vmatprep.subr.mxu0 0.0
      %1385 = vmatpush1.xpose.msra.mxu0 0.0
      %1386 = vmatprep.subr.mxu0 0.0
      %1387 = vmatpush1.xpose.msra.mxu0 0.0
      %1388 = vmatprep.mubr.f32.mxu0 0.0
      %1389 = vmatmul.mubr.f32.gmra.mrb[0].mxu0 %v1320
      %v1390 = vpop.f32.mrb[0].mxu0
      %v1391 = vadd.f32 0.0, %v1390
      %v1392 = vpop.f32.mrb[0].mxu0
      %1393 = vdwg.mxu0
      %v1394 = vmul.f32 %v1391, 0.35355338
      %v1395 = vadd.f32 %v1394, %v604
      %v1396 = vsel %vm818, %v1395, -inf
      %1397 = vmax.xlane.f32.xlu0 %v1396
      %v1398 = vpop.xlane.xlu0 %1397
      %v1399 = vsub.f32 %v1395, %v1398
      %v1400 = vmul.f32 %v1399, 1.442695
      %v1401 = vpow.pop %v1400
      %v1402 = vsel %vm818, %v1401, 0.0
      %1403 = vadd.xlane.f32.xlu0 %v1402
      %v1404 = vpop.xlane.xlu0 %1403
      %v1405 = vrcp.pop %v1404
      %v1406 = vmul.f32 %v1401, %v1405
      %1407 = vrot.lane.b32.xlu0 %v812, 40
      %v1408 = vpop.permute.xlu0 %1407
      %v1411 = vsel %vm818, %v1406, 0
      %1413 = vmatprep.subr.mxu0 0.0
      %1414 = vmatpush1.msra.mxu0 %v1408
      %1415 = vmatprep.subr.mxu0 0.0
      %1416 = vmatpush1.msra.mxu0 0.0
      %1417 = vmatprep.subr.mxu0 0.0
      %1418 = vmatpush1.msra.mxu0 0.0
      %1419 = vmatprep.subr.mxu0 0.0
      %1420 = vmatpush1.msra.mxu0 0.0
      %1421 = vmatprep.subr.mxu0 0.0
      %1422 = vmatpush1.msra.mxu0 0.0
      %1423 = vmatprep.subr.mxu0 0.0
      %1424 = vmatpush1.msra.mxu0 0.0
      %1425 = vmatprep.subr.mxu0 0.0
      %1426 = vmatpush1.msra.mxu0 0.0
      %1427 = vmatprep.subr.mxu0 0.0
      %1428 = vmatpush1.msra.mxu0 0.0
      %1429 = vmatprep.subr.mxu0 0.0
      %1430 = vmatpush1.msra.mxu0 0.0
      %1431 = vmatprep.subr.mxu0 0.0
      %1432 = vmatpush1.msra.mxu0 0.0
      %1433 = vmatprep.subr.mxu0 0.0
      %1434 = vmatpush1.msra.mxu0 0.0
      %1435 = vmatprep.subr.mxu0 0.0
      %1436 = vmatpush1.msra.mxu0 0.0
      %1437 = vmatprep.subr.mxu0 0.0
      %1438 = vmatpush1.msra.mxu0 0.0
      %1439 = vmatprep.subr.mxu0 0.0
      %1440 = vmatpush1.msra.mxu0 0.0
      %1441 = vmatprep.subr.mxu0 0.0
      %1442 = vmatpush1.msra.mxu0 0.0
      %1443 = vmatprep.subr.mxu0 0.0
      %1444 = vmatpush1.msra.mxu0 0.0
      %1445 = vmatprep.subr.mxu0 0.0
      %1446 = vmatpush1.msra.mxu0 0.0
      %1447 = vmatprep.subr.mxu0 0.0
      %1448 = vmatpush1.msra.mxu0 0.0
      %1449 = vmatprep.subr.mxu0 0.0
      %1450 = vmatpush1.msra.mxu0 0.0
      %1451 = vmatprep.subr.mxu0 0.0
      %1452 = vmatpush1.msra.mxu0 0.0
      %1453 = vmatprep.subr.mxu0 0.0
      %1454 = vmatpush1.msra.mxu0 0.0
      %1455 = vmatprep.subr.mxu0 0.0
      %1456 = vmatpush1.msra.mxu0 0.0
      %1457 = vmatprep.subr.mxu0 0.0
      %1458 = vmatpush1.msra.mxu0 0.0
      %1459 = vmatprep.subr.mxu0 0.0
      %1460 = vmatpush1.msra.mxu0 0.0
      %1461 = vmatprep.subr.mxu0 0.0
      %1462 = vmatpush1.msra.mxu0 0.0
      %1463 = vmatprep.subr.mxu0 0.0
      %1464 = vmatpush1.msra.mxu0 0.0
      %1465 = vmatprep.subr.mxu0 0.0
      %1466 = vmatpush1.msra.mxu0 0.0
      %1467 = vmatprep.subr.mxu0 0.0
      %1468 = vmatpush1.msra.mxu0 0.0
      %1469 = vmatprep.subr.mxu0 0.0
      %1470 = vmatpush1.msra.mxu0 0.0
      %1471 = vmatprep.subr.mxu0 0.0
      %1472 = vmatpush1.msra.mxu0 0.0
      %1473 = vmatprep.subr.mxu0 0.0
      %1474 = vmatpush1.msra.mxu0 0.0
      %1475 = vmatprep.subr.mxu0 0.0
      %1476 = vmatpush1.msra.mxu0 0.0
      %1477 = vmatprep.mubr.f32.mxu0 0.0
      %1478 = vmatmul.mubr.f32.gmra.mrb[0].mxu0 %v1411
      %v1479 = vpop.f32.mrb[0].mxu0
      %v1480 = vadd.f32 0.0, %v1479
      %v1481 = vpop.f32.mrb[0].mxu0
      %1482 = vdwg.mxu0
      %1484 = vrot.lane.b32.xlu0 %v1146, 8
      %v1485 = vpop.permute.xlu0 %1484
      %1488 = vrot.lane.b32.xlu0 %v1313, 16
      %v1489 = vpop.permute.xlu0 %1488
      %1492 = vrot.lane.b32.xlu0 %v1480, 24
      %v1493 = vpop.permute.xlu0 %1492
      %v1495 = vsel %vm818, %v979, %v1485
      %vm1496 = vcmask 130048
      %v1497 = vsel %vm1496, %v1495, %v1489
      %vm1498 = vcmask 195584
      %v1499 = vsel %vm1498, %v1497, %v1493
      %v1500 = vld [vmem:[%s7] sm:$0xff]
      %v1501 = vld [vmem:[%s7 + $0x8] sm:$0xff]
      %v1502 = vld [vmem:[%s7 + $0x10] sm:$0xff]
      %v1503 = vld [vmem:[%s7 + $0x18] sm:$0xff]
      %v1505 = vsel %vm708, %v1499, 0
      %1507 = vmatprep.subr.mxu0 0.0
      %1508 = vmatpush1.msra.mxu0 %v1500
      %1509 = vmatprep.subr.mxu0 0.0
      %1510 = vmatpush1.msra.mxu0 %v1501
      %1511 = vmatprep.subr.mxu0 0.0
      %1512 = vmatpush1.msra.mxu0 %v1502
      %1513 = vmatprep.subr.mxu0 0.0
      %1514 = vmatpush1.msra.mxu0 %v1503
      %1515 = vmatprep.subr.mxu0 0.0
      %1516 = vmatpush1.msra.mxu0 0.0
      %1517 = vmatprep.subr.mxu0 0.0
      %1518 = vmatpush1.msra.mxu0 0.0
      %1519 = vmatprep.subr.mxu0 0.0
      %1520 = vmatpush1.msra.mxu0 0.0
      %1521 = vmatprep.subr.mxu0 0.0
      %1522 = vmatpush1.msra.mxu0 0.0
      %1523 = vmatprep.subr.mxu0 0.0
      %1524 = vmatpush1.msra.mxu0 0.0
      %1525 = vmatprep.subr.mxu0 0.0
      %1526 = vmatpush1.msra.mxu0 0.0
      %1527 = vmatprep.subr.mxu0 0.0
      %1528 = vmatpush1.msra.mxu0 0.0
      %1529 = vmatprep.subr.mxu0 0.0
      %1530 = vmatpush1.msra.mxu0 0.0
      %1531 = vmatprep.subr.mxu0 0.0
      %1532 = vmatpush1.msra.mxu0 0.0
      %1533 = vmatprep.subr.mxu0 0.0
      %1534 = vmatpush1.msra.mxu0 0.0
      %1535 = vmatprep.subr.mxu0 0.0
      %1536 = vmatpush1.msra.mxu0 0.0
      %1537 = vmatprep.subr.mxu0 0.0
      %1538 = vmatpush1.msra.mxu0 0.0
      %1539 = vmatprep.subr.mxu0 0.0
      %1540 = vmatpush1.msra.mxu0 0.0
      %1541 = vmatprep.subr.mxu0 0.0
      %1542 = vmatpush1.msra.mxu0 0.0
      %1543 = vmatprep.subr.mxu0 0.0
      %1544 = vmatpush1.msra.mxu0 0.0
      %1545 = vmatprep.subr.mxu0 0.0
      %1546 = vmatpush1.msra.mxu0 0.0
      %1547 = vmatprep.subr.mxu0 0.0
      %1548 = vmatpush1.msra.mxu0 0.0
      %1549 = vmatprep.subr.mxu0 0.0
      %1550 = vmatpush1.msra.mxu0 0.0
      %1551 = vmatprep.subr.mxu0 0.0
      %1552 = vmatpush1.msra.mxu0 0.0
      %1553 = vmatprep.subr.mxu0 0.0
      %1554 = vmatpush1.msra.mxu0 0.0
      %1555 = vmatprep.subr.mxu0 0.0
      %1556 = vmatpush1.msra.mxu0 0.0
      %1557 = vmatprep.subr.mxu0 0.0
      %1558 = vmatpush1.msra.mxu0 0.0
      %1559 = vmatprep.subr.mxu0 0.0
      %1560 = vmatpush1.msra.mxu0 0.0
      %1561 = vmatprep.subr.mxu0 0.0
      %1562 = vmatpush1.msra.mxu0 0.0
      %1563 = vmatprep.subr.mxu0 0.0
      %1564 = vmatpush1.msra.mxu0 0.0
      %1565 = vmatprep.subr.mxu0 0.0
      %1566 = vmatpush1.msra.mxu0 0.0
      %1567 = vmatprep.subr.mxu0 0.0
      %1568 = vmatpush1.msra.mxu0 0.0
      %1569 = vmatprep.subr.mxu0 0.0
      %1570 = vmatpush1.msra.mxu0 0.0
      %1571 = vmatprep.mubr.f32.mxu0 0.0
      %1572 = vmatmul.mubr.f32.gmra.mrb[0].mxu0 %v1505
      %v1573 = vpop.f32.mrb[0].mxu0
      %v1574 = vadd.f32 0.0, %v1573
      %v1575 = vpop.f32.mrb[0].mxu0
      %1576 = vdwg.mxu0
      %v1577 = vadd.f32 %v703, %v1574
      %v1578 = vld [vmem:[%s8] sm:$0x1]
      %v1579 = vlaneseq
      %v1580 = vshrl.u32 %v1579, 7
      %v1581 = vsub.s32 0, %v1580
      %v1582 = vrot.slane %v1578, %v1581
      %v1583 = vadd.f32 %v1577, %v1582
      %v1584 = vld [vmem:[%s9] sm:$0x1]
      %v1585 = vld [vmem:[%s10] sm:$0x1]
      %v1586 = vsel %vm708, %v1583, 0.0
      %1587 = vadd.xlane.f32.xlu0 %v1586
      %v1588 = vpop.xlane.xlu0 %1587
      %v1589 = vmul.f32 %v1588, %v712
      %v1590 = vsub.f32 %v1583, %v1589
      %v1591 = vmul.f32 %v1590, %v1590
      %v1592 = vsel %vm708, %v1591, 0.0
      %1593 = vadd.xlane.f32.xlu0 %v1592
      %v1594 = vpop.xlane.xlu0 %1593
      %v1595 = vmul.f32 %v1594, %v712
      %v1596 = vadd.f32 %v1595, 1e-12
      %v1597 = vrsqrt.pop %v1596
      %v1598 = vmul.f32 %v1590, %v1597
      %v1599 = vlaneseq
      %v1600 = vshrl.u32 %v1599, 7
      %v1601 = vsub.s32 0, %v1600
      %v1602 = vrot.slane %v1584, %v1601
      %v1603 = vmul.f32 %v1598, %v1602
      %v1604 = vlaneseq
      %v1605 = vshrl.u32 %v1604, 7
      %v1606 = vsub.s32 0, %v1605
      %v1607 = vrot.slane %v1585, %v1606
      %v1608 = vadd.f32 %v1603, %v1607
      %v1609 = vld [vmem:[%s11] sm:$0xff]
      %v1610 = vld [vmem:[%s11 + $0x8] sm:$0xff]
      %v1611 = vld [vmem:[%s11 + $0x10] sm:$0xff]
      %v1612 = vld [vmem:[%s11 + $0x18] sm:$0xff]
      %v1613 = vld [vmem:[%s12] sm:$0x1]
      %v1614 = vlaneseq
      %v1615 = vshrl.u32 %v1614, 7
      %v1616 = vsub.s32 0, %v1615
      %v1617 = vrot.slane %v1613, %v1616
      %v1619 = vsel %vm708, %v1608, 0
      %1621 = vmatprep.subr.mxu0 0.0
      %1622 = vmatpush1.msra.mxu0 %v1609
      %1623 = vmatprep.subr.mxu0 0.0
      %1624 = vmatpush1.msra.mxu0 %v1610
      %1625 = vmatprep.subr.mxu0 0.0
      %1626 = vmatpush1.msra.mxu0 %v1611
      %1627 = vmatprep.subr.mxu0 0.0
      %1628 = vmatpush1.msra.mxu0 %v1612
      %1629 = vmatprep.subr.mxu0 0.0
      %1630 = vmatpush1.msra.mxu0 0.0
      %1631 = vmatprep.subr.mxu0 0.0
      %1632 = vmatpush1.msra.mxu0 0.0
      %1633 = vmatprep.subr.mxu0 0.0
      %1634 = vmatpush1.msra.mxu0 0.0
      %1635 = vmatprep.subr.mxu0 0.0
      %1636 = vmatpush1.msra.mxu0 0.0
      %1637 = vmatprep.subr.mxu0 0.0
      %1638 = vmatpush1.msra.mxu0 0.0
      %1639 = vmatprep.subr.mxu0 0.0
      %1640 = vmatpush1.msra.mxu0 0.0
      %1641 = vmatprep.subr.mxu0 0.0
      %1642 = vmatpush1.msra.mxu0 0.0
      %1643 = vmatprep.subr.mxu0 0.0
      %1644 = vmatpush1.msra.mxu0 0.0
      %1645 = vmatprep.subr.mxu0 0.0
      %1646 = vmatpush1.msra.mxu0 0.0
      %1647 = vmatprep.subr.mxu0 0.0
      %1648 = vmatpush1.msra.mxu0 0.0
      %1649 = vmatprep.subr.mxu0 0.0
      %1650 = vmatpush1.msra.mxu0 0.0
      %1651 = vmatprep.subr.mxu0 0.0
      %1652 = vmatpush1.msra.mxu0 0.0
      %1653 = vmatprep.subr.mxu0 0.0
      %1654 = vmatpush1.msra.mxu0 0.0
      %1655 = vmatprep.subr.mxu0 0.0
      %1656 = vmatpush1.msra.mxu0 0.0
      %1657 = vmatprep.subr.mxu0 0.0
      %1658 = vmatpush1.msra.mxu0 0.0
      %1659 = vmatprep.subr.mxu0 0.0
      %1660 = vmatpush1.msra.mxu0 0.0
      %1661 = vmatprep.subr.mxu0 0.0
      %1662 = vmatpush1.msra.mxu0 0.0
      %1663 = vmatprep.subr.mxu0 0.0
      %1664 = vmatpush1.msra.mxu0 0.0
      %1665 = vmatprep.subr.mxu0 0.0
      %1666 = vmatpush1.msra.mxu0 0.0
      %1667 = vmatprep.subr.mxu0 0.0
      %1668 = vmatpush1.msra.mxu0 0.0
      %1669 = vmatprep.subr.mxu0 0.0
      %1670 = vmatpush1.msra.mxu0 0.0
      %1671 = vmatprep.subr.mxu0 0.0
      %1672 = vmatpush1.msra.mxu0 0.0
      %1673 = vmatprep.subr.mxu0 0.0
      %1674 = vmatpush1.msra.mxu0 0.0
      %1675 = vmatprep.subr.mxu0 0.0
      %1676 = vmatpush1.msra.mxu0 0.0
      %1677 = vmatprep.subr.mxu0 0.0
      %1678 = vmatpush1.msra.mxu0 0.0
      %1679 = vmatprep.subr.mxu0 0.0
      %1680 = vmatpush1.msra.mxu0 0.0
      %1681 = vmatprep.subr.mxu0 0.0
      %1682 = vmatpush1.msra.mxu0 0.0
      %1683 = vmatprep.subr.mxu0 0.0
      %1684 = vmatpush1.msra.mxu0 0.0
      %1685 = vmatprep.mubr.f32.mxu0 0.0
      %1686 = vmatmul.mubr.f32.gmra.mrb[0].mxu0 %v1619
      %v1687 = vpop.f32.mrb[0].mxu0
      %v1688 = vadd.f32 %v1617, %v1687
      %v1689 = vpop.f32.mrb[0].mxu0
      %1690 = vdwg.mxu0
      %v1691 = vmul.f32 %v1688, 0.5
      %v1692 = vmul.f32 %v1688, 0.70710677
      %v1693 = verf.f32.pop %v1692
      %v1694 = vadd.f32 %v1693, 1.0
      %v1695 = vmul.f32 %v1691, %v1694
      %v1696 = vld [vmem:[%s13] sm:$0xff]
      %v1697 = vld [vmem:[%s13 + $0x8] sm:$0xff]
      %v1698 = vld [vmem:[%s13 + $0x10] sm:$0xff]
      %v1699 = vld [vmem:[%s13 + $0x18] sm:$0xff]
      %v1700 = vld [vmem:[%s13 + $0x20] sm:$0xff]
      %v1701 = vld [vmem:[%s13 + $0x28] sm:$0xff]
      %v1702 = vld [vmem:[%s13 + $0x30] sm:$0xff]
      %v1703 = vld [vmem:[%s13 + $0x38] sm:$0xff]
      %v1704 = vld [vmem:[%s13 + $0x40] sm:$0xff]
      %v1705 = vld [vmem:[%s13 + $0x48] sm:$0xff]
      %v1706 = vld [vmem:[%s13 + $0x50] sm:$0xff]
      %v1707 = vld [vmem:[%s13 + $0x58] sm:$0xff]
      %v1708 = vld [vmem:[%s13 + $0x60] sm:$0xff]
      %v1709 = vld [vmem:[%s13 + $0x68] sm:$0xff]
      %v1710 = vld [vmem:[%s13 + $0x70] sm:$0xff]
      %v1711 = vld [vmem:[%s13 + $0x78] sm:$0xff]
      %1712 = vmatprep.subr.mxu0 0.0
      %1713 = vmatpush1.msra.mxu0 %v1696
      %1714 = vmatprep.subr.mxu0 0.0
      %1715 = vmatpush1.msra.mxu0 %v1697
      %1716 = vmatprep.subr.mxu0 0.0
      %1717 = vmatpush1.msra.mxu0 %v1698
      %1718 = vmatprep.subr.mxu0 0.0
      %1719 = vmatpush1.msra.mxu0 %v1699
      %1720 = vmatprep.subr.mxu0 0.0
      %1721 = vmatpush1.msra.mxu0 %v1700
      %1722 = vmatprep.subr.mxu0 0.0
      %1723 = vmatpush1.msra.mxu0 %v1701
      %1724 = vmatprep.subr.mxu0 0.0
      %1725 = vmatpush1.msra.mxu0 %v1702
      %1726 = vmatprep.subr.mxu0 0.0
      %1727 = vmatpush1.msra.mxu0 %v1703
      %1728 = vmatprep.subr.mxu0 0.0
      %1729 = vmatpush1.msra.mxu0 %v1704
      %1730 = vmatprep.subr.mxu0 0.0
      %1731 = vmatpush1.msra.mxu0 %v1705
      %1732 = vmatprep.subr.mxu0 0.0
      %1733 = vmatpush1.msra.mxu0 %v1706
      %1734 = vmatprep.subr.mxu0 0.0
      %1735 = vmatpush1.msra.mxu0 %v1707
      %1736 = vmatprep.subr.mxu0 0.0
      %1737 = vmatpush1.msra.mxu0 %v1708
      %1738 = vmatprep.subr.mxu0 0.0
      %1739 = vmatpush1.msra.mxu0 %v1709
      %1740 = vmatprep.subr.mxu0 0.0
      %1741 = vmatpush1.msra.mxu0 %v1710
      %1742 = vmatprep.subr.mxu0 0.0
      %1743 = vmatpush1.msra.mxu0 %v1711
      %1744 = vmatprep.subr.mxu0 0.0
      %1745 = vmatpush1.msra.mxu0 0.0
      %1746 = vmatprep.subr.mxu0 0.0
      %1747 = vmatpush1.msra.mxu0 0.0
      %1748 = vmatprep.subr.mxu0 0.0
      %1749 = vmatpush1.msra.mxu0 0.0
      %1750 = vmatprep.subr.mxu0 0.0
      %1751 = vmatpush1.msra.mxu0 0.0
      %1752 = vmatprep.subr.mxu0 0.0
      %1753 = vmatpush1.msra.mxu0 0.0
      %1754 = vmatprep.subr.mxu0 0.0
      %1755 = vmatpush1.msra.mxu0 0.0
      %1756 = vmatprep.subr.mxu0 0.0
      %1757 = vmatpush1.msra.mxu0 0.0
      %1758 = vmatprep.subr.mxu0 0.0
      %1759 = vmatpush1.msra.mxu0 0.0
      %1760 = vmatprep.subr.mxu0 0.0
      %1761 = vmatpush1.msra.mxu0 0.0
      %1762 = vmatprep.subr.mxu0 0.0
      %1763 = vmatpush1.msra.mxu0 0.0
      %1764 = vmatprep.subr.mxu0 0.0
      %1765 = vmatpush1.msra.mxu0 0.0
      %1766 = vmatprep.subr.mxu0 0.0
      %1767 = vmatpush1.msra.mxu0 0.0
      %1768 = vmatprep.subr.mxu0 0.0
      %1769 = vmatpush1.msra.mxu0 0.0
      %1770 = vmatprep.subr.mxu0 0.0
      %1771 = vmatpush1.msra.mxu0 0.0
      %1772 = vmatprep.subr.mxu0 0.0
      %1773 = vmatpush1.msra.mxu0 0.0
      %1774 = vmatprep.subr.mxu0 0.0
      %1775 = vmatpush1.msra.mxu0 0.0
      %1776 = vmatprep.mubr.f32.mxu0 0.0
      %1777 = vmatmul.mubr.f32.gmra.mrb[0].mxu0 %v1695
      %v1778 = vpop.f32.mrb[0].mxu0
      %v1779 = vadd.f32 0.0, %v1778
      %v1780 = vpop.f32.mrb[0].mxu0
      %1781 = vdwg.mxu0
      %v1782 = vadd.f32 %v1583, %v1779
      %v1783 = vld [vmem:[%s14] sm:$0x1]
      %v1784 = vlaneseq
      %v1785 = vshrl.u32 %v1784, 7
      %v1786 = vsub.s32 0, %v1785
      %v1787 = vrot.slane %v1783, %v1786
      %v1788 = vadd.f32 %v1782, %v1787
      %v1789 = vld [vmem:[%s3 + $0x1] sm:$0x1]
      %v1790 = vld [vmem:[%s4 + $0x1] sm:$0x1]
      %v1791 = vsel %vm708, %v1788, 0.0
      %1792 = vadd.xlane.f32.xlu0 %v1791
      %v1793 = vpop.xlane.xlu0 %1792
      %v1794 = vmul.f32 %v1793, %v712
      %v1795 = vsub.f32 %v1788, %v1794
      %v1796 = vmul.f32 %v1795, %v1795
      %v1797 = vsel %vm708, %v1796, 0.0
      %1798 = vadd.xlane.f32.xlu0 %v1797
      %v1799 = vpop.xlane.xlu0 %1798
      %v1800 = vmul.f32 %v1799, %v712
      %v1801 = vadd.f32 %v1800, 1e-12
      %v1802 = vrsqrt.pop %v1801
      %v1803 = vmul.f32 %v1795, %v1802
      %v1804 = vlaneseq
      %v1805 = vshrl.u32 %v1804, 7
      %v1806 = vsub.s32 0, %v1805
      %v1807 = vrot.slane %v1789, %v1806
      %v1808 = vmul.f32 %v1803, %v1807
      %v1809 = vlaneseq
      %v1810 = vshrl.u32 %v1809, 7
      %v1811 = vsub.s32 0, %v1810
      %v1812 = vrot.slane %v1790, %v1811
      %v1813 = vadd.f32 %v1808, %v1812
      %s1814 = scalar_lea.vmem %s5, 32
      %v1815 = vld [vmem:[%s1814] sm:$0xff]
      %v1816 = vld [vmem:[%s1814 + $0x8] sm:$0xff]
      %v1817 = vld [vmem:[%s1814 + $0x10] sm:$0xff]
      %v1818 = vld [vmem:[%s1814 + $0x18] sm:$0xff]
      %v1819 = vld [vmem:[%s6 + $0x1] sm:$0x1]
      %v1820 = vlaneseq
      %v1821 = vshrl.u32 %v1820, 7
      %v1822 = vsub.s32 0, %v1821
      %v1823 = vrot.slane %v1819, %v1822
      %v1825 = vsel %vm708, %v1813, 0
      %1827 = vmatprep.subr.mxu0 0.0
      %1828 = vmatpush1.msra.mxu0 %v1815
      %1829 = vmatprep.subr.mxu0 0.0
      %1830 = vmatpush1.msra.mxu0 %v1816
      %1831 = vmatprep.subr.mxu0 0.0
      %1832 = vmatpush1.msra.mxu0 %v1817
      %1833 = vmatprep.subr.mxu0 0.0
      %1834 = vmatpush1.msra.mxu0 %v1818
      %1835 = vmatprep.subr.mxu0 0.0
      %1836 = vmatpush1.msra.mxu0 0.0
      %1837 = vmatprep.subr.mxu0 0.0
      %1838 = vmatpush1.msra.mxu0 0.0
      %1839 = vmatprep.subr.mxu0 0.0
      %1840 = vmatpush1.msra.mxu0 0.0
      %1841 = vmatprep.subr.mxu0 0.0
      %1842 = vmatpush1.msra.mxu0 0.0
      %1843 = vmatprep.subr.mxu0 0.0
      %1844 = vmatpush1.msra.mxu0 0.0
      %1845 = vmatprep.subr.mxu0 0.0
      %1846 = vmatpush1.msra.mxu0 0.0
      %1847 = vmatprep.subr.mxu0 0.0
      %1848 = vmatpush1.msra.mxu0 0.0
      %1849 = vmatprep.subr.mxu0 0.0
      %1850 = vmatpush1.msra.mxu0 0.0
      %1851 = vmatprep.subr.mxu0 0.0
      %1852 = vmatpush1.msra.mxu0 0.0
      %1853 = vmatprep.subr.mxu0 0.0
      %1854 = vmatpush1.msra.mxu0 0.0
      %1855 = vmatprep.subr.mxu0 0.0
      %1856 = vmatpush1.msra.mxu0 0.0
      %1857 = vmatprep.subr.mxu0 0.0
      %1858 = vmatpush1.msra.mxu0 0.0
      %1859 = vmatprep.subr.mxu0 0.0
      %1860 = vmatpush1.msra.mxu0 0.0
      %1861 = vmatprep.subr.mxu0 0.0
      %1862 = vmatpush1.msra.mxu0 0.0
      %1863 = vmatprep.subr.mxu0 0.0
      %1864 = vmatpush1.msra.mxu0 0.0
      %1865 = vmatprep.subr.mxu0 0.0
      %1866 = vmatpush1.msra.mxu0 0.0
      %1867 = vmatprep.subr.mxu0 0.0
      %1868 = vmatpush1.msra.mxu0 0.0
      %1869 = vmatprep.subr.mxu0 0.0
      %1870 = vmatpush1.msra.mxu0 0.0
      %1871 = vmatprep.subr.mxu0 0.0
      %1872 = vmatpush1.msra.mxu0 0.0
      %1873 = vmatprep.subr.mxu0 0.0
      %1874 = vmatpush1.msra.mxu0 0.0
      %1875 = vmatprep.subr.mxu0 0.0
      %1876 = vmatpush1.msra.mxu0 0.0
      %1877 = vmatprep.subr.mxu0 0.0
      %1878 = vmatpush1.msra.mxu0 0.0
      %1879 = vmatprep.subr.mxu0 0.0
      %1880 = vmatpush1.msra.mxu0 0.0
      %1881 = vmatprep.subr.mxu0 0.0
      %1882 = vmatpush1.msra.mxu0 0.0
      %1883 = vmatprep.subr.mxu0 0.0
      %1884 = vmatpush1.msra.mxu0 0.0
      %1885 = vmatprep.subr.mxu0 0.0
      %1886 = vmatpush1.msra.mxu0 0.0
      %1887 = vmatprep.subr.mxu0 0.0
      %1888 = vmatpush1.msra.mxu0 0.0
      %1889 = vmatprep.subr.mxu0 0.0
      %1890 = vmatpush1.msra.mxu0 0.0
      %1891 = vmatprep.mubr.f32.mxu0 0.0
      %1892 = vmatmul.mubr.f32.gmra.mrb[0].mxu0 %v1825
      %v1893 = vpop.f32.mrb[0].mxu0
      %v1894 = vadd.f32 %v1823, %v1893
      %v1895 = vpop.f32.mrb[0].mxu0
      %1896 = vdwg.mxu0
      %1898 = vrot.lane.b32.xlu0 %v1894, 96
      %v1899 = vpop.permute.xlu0 %1898
      %v1900 = vsel %vm818, %v1894, 0
      %v1902 = vsel %vm818, %v1899, 0
      %1904 = vmatprep.subr.mxu0 0.0
      %1905 = vmatpush1.xpose.msra.mxu0 %v1902
      %1906 = vmatprep.subr.mxu0 0.0
      %1907 = vmatpush1.xpose.msra.mxu0 0.0
      %1908 = vmatprep.subr.mxu0 0.0
      %1909 = vmatpush1.xpose.msra.mxu0 0.0
      %1910 = vmatprep.subr.mxu0 0.0
      %1911 = vmatpush1.xpose.msra.mxu0 0.0
      %1912 = vmatprep.subr.mxu0 0.0
      %1913 = vmatpush1.xpose.msra.mxu0 0.0
      %1914 = vmatprep.subr.mxu0 0.0
      %1915 = vmatpush1.xpose.msra.mxu0 0.0
      %1916 = vmatprep.subr.mxu0 0.0
      %1917 = vmatpush1.xpose.msra.mxu0 0.0
      %1918 = vmatprep.subr.mxu0 0.0
      %1919 = vmatpush1.xpose.msra.mxu0 0.0
      %1920 = vmatprep.subr.mxu0 0.0
      %1921 = vmatpush1.xpose.msra.mxu0 0.0
      %1922 = vmatprep.subr.mxu0 0.0
      %1923 = vmatpush1.xpose.msra.mxu0 0.0
      %1924 = vmatprep.subr.mxu0 0.0
      %1925 = vmatpush1.xpose.msra.mxu0 0.0
      %1926 = vmatprep.subr.mxu0 0.0
      %1927 = vmatpush1.xpose.msra.mxu0 0.0
      %1928 = vmatprep.subr.mxu0 0.0
      %1929 = vmatpush1.xpose.msra.mxu0 0.0
      %1930 = vmatprep.subr.mxu0 0.0
      %1931 = vmatpush1.xpose.msra.mxu0 0.0
      %1932 = vmatprep.subr.mxu0 0.0
      %1933 = vmatpush1.xpose.msra.mxu0 0.0
      %1934 = vmatprep.subr.mxu0 0.0
      %1935 = vmatpush1.xpose.msra.mxu0 0.0
      %1936 = vmatprep.subr.mxu0 0.0
      %1937 = vmatpush1.xpose.msra.mxu0 0.0
      %1938 = vmatprep.subr.mxu0 0.0
      %1939 = vmatpush1.xpose.msra.mxu0 0.0
      %1940 = vmatprep.subr.mxu0 0.0
      %1941 = vmatpush1.xpose.msra.mxu0 0.0
      %1942 = vmatprep.subr.mxu0 0.0
      %1943 = vmatpush1.xpose.msra.mxu0 0.0
      %1944 = vmatprep.subr.mxu0 0.0
      %1945 = vmatpush1.xpose.msra.mxu0 0.0
      %1946 = vmatprep.subr.mxu0 0.0
      %1947 = vmatpush1.xpose.msra.mxu0 0.0
      %1948 = vmatprep.subr.mxu0 0.0
      %1949 = vmatpush1.xpose.msra.mxu0 0.0
      %1950 = vmatprep.subr.mxu0 0.0
      %1951 = vmatpush1.xpose.msra.mxu0 0.0
      %1952 = vmatprep.subr.mxu0 0.0
      %1953 = vmatpush1.xpose.msra.mxu0 0.0
      %1954 = vmatprep.subr.mxu0 0.0
      %1955 = vmatpush1.xpose.msra.mxu0 0.0
      %1956 = vmatprep.subr.mxu0 0.0
      %1957 = vmatpush1.xpose.msra.mxu0 0.0
      %1958 = vmatprep.subr.mxu0 0.0
      %1959 = vmatpush1.xpose.msra.mxu0 0.0
      %1960 = vmatprep.subr.mxu0 0.0
      %1961 = vmatpush1.xpose.msra.mxu0 0.0
      %1962 = vmatprep.subr.mxu0 0.0
      %1963 = vmatpush1.xpose.msra.mxu0 0.0
      %1964 = vmatprep.subr.mxu0 0.0
      %1965 = vmatpush1.xpose.msra.mxu0 0.0
      %1966 = vmatprep.subr.mxu0 0.0
      %1967 = vmatpush1.xpose.msra.mxu0 0.0
      %1968 = vmatprep.mubr.f32.mxu0 0.0
      %1969 = vmatmul.mubr.f32.gmra.mrb[0].mxu0 %v1900
      %v1970 = vpop.f32.mrb[0].mxu0
      %v1971 = vadd.f32 0.0, %v1970
      %v1972 = vpop.f32.mrb[0].mxu0
      %1973 = vdwg.mxu0
      %v1974 = vmul.f32 %v1971, 0.35355338
      %v1975 = vadd.f32 %v1974, %v604
      %v1976 = vsel %vm818, %v1975, -inf
      %1977 = vmax.xlane.f32.xlu0 %v1976
      %v1978 = vpop.xlane.xlu0 %1977
      %v1979 = vsub.f32 %v1975, %v1978
      %v1980 = vmul.f32 %v1979, 1.442695
      %v1981 = vpow.pop %v1980
      %v1982 = vsel %vm818, %v1981, 0.0
      %1983 = vadd.xlane.f32.xlu0 %v1982
      %v1984 = vpop.xlane.xlu0 %1983
      %v1985 = vrcp.pop %v1984
      %v1986 = vmul.f32 %v1981, %v1985
      %1987 = vrot.lane.b32.xlu0 %v1894, 64
      %v1988 = vpop.permute.xlu0 %1987
      %v1991 = vsel %vm818, %v1986, 0
      %1993 = vmatprep.subr.mxu0 0.0
      %1994 = vmatpush1.msra.mxu0 %v1988
      %1995 = vmatprep.subr.mxu0 0.0
      %1996 = vmatpush1.msra.mxu0 0.0
      %1997 = vmatprep.subr.mxu0 0.0
      %1998 = vmatpush1.msra.mxu0 0.0
      %1999 = vmatprep.subr.mxu0 0.0
      %2000 = vmatpush1.msra.mxu0 0.0
      %2001 = vmatprep.subr.mxu0 0.0
      %2002 = vmatpush1.msra.mxu0 0.0
      %2003 = vmatprep.subr.mxu0 0.0
      %2004 = vmatpush1.msra.mxu0 0.0
      %2005 = vmatprep.subr.mxu0 0.0
      %2006 = vmatpush1.msra.mxu0 0.0
      %2007 = vmatprep.subr.mxu0 0.0
      %2008 = vmatpush1.msra.mxu0 0.0
      %2009 = vmatprep.subr.mxu0 0.0
      %2010 = vmatpush1.msra.mxu0 0.0
      %2011 = vmatprep.subr.mxu0 0.0
      %2012 = vmatpush1.msra.mxu0 0.0
      %2013 = vmatprep.subr.mxu0 0.0
      %2014 = vmatpush1.msra.mxu0 0.0
      %2015 = vmatprep.subr.mxu0 0.0
      %2016 = vmatpush1.msra.mxu0 0.0
      %2017 = vmatprep.subr.mxu0 0.0
      %2018 = vmatpush1.msra.mxu0 0.0
      %2019 = vmatprep.subr.mxu0 0.0
      %2020 = vmatpush1.msra.mxu0 0.0
      %2021 = vmatprep.subr.mxu0 0.0
      %2022 = vmatpush1.msra.mxu0 0.0
      %2023 = vmatprep.subr.mxu0 0.0
      %2024 = vmatpush1.msra.mxu0 0.0
      %2025 = vmatprep.subr.mxu0 0.0
      %2026 = vmatpush1.msra.mxu0 0.0
      %2027 = vmatprep.subr.mxu0 0.0
      %2028 = vmatpush1.msra.mxu0 0.0
      %2029 = vmatprep.subr.mxu0 0.0
      %2030 = vmatpush1.msra.mxu0 0.0
      %2031 = vmatprep.subr.mxu0 0.0
      %2032 = vmatpush1.msra.mxu0 0.0
      %2033 = vmatprep.subr.mxu0 0.0
      %2034 = vmatpush1.msra.mxu0 0.0
      %2035 = vmatprep.subr.mxu0 0.0
      %2036 = vmatpush1.msra.mxu0 0.0
      %2037 = vmatprep.subr.mxu0 0.0
      %2038 = vmatpush1.msra.mxu0 0.0
      %2039 = vmatprep.subr.mxu0 0.0
      %2040 = vmatpush1.msra.mxu0 0.0
      %2041 = vmatprep.subr.mxu0 0.0
      %2042 = vmatpush1.msra.mxu0 0.0
      %2043 = vmatprep.subr.mxu0 0.0
      %2044 = vmatpush1.msra.mxu0 0.0
      %2045 = vmatprep.subr.mxu0 0.0
      %2046 = vmatpush1.msra.mxu0 0.0
      %2047 = vmatprep.subr.mxu0 0.0
      %2048 = vmatpush1.msra.mxu0 0.0
      %2049 = vmatprep.subr.mxu0 0.0
      %2050 = vmatpush1.msra.mxu0 0.0
      %2051 = vmatprep.subr.mxu0 0.0
      %2052 = vmatpush1.msra.mxu0 0.0
      %2053 = vmatprep.subr.mxu0 0.0
      %2054 = vmatpush1.msra.mxu0 0.0
      %2055 = vmatprep.subr.mxu0 0.0
      %2056 = vmatpush1.msra.mxu0 0.0
      %2057 = vmatprep.mubr.f32.mxu0 0.0
      %2058 = vmatmul.mubr.f32.gmra.mrb[0].mxu0 %v1991
      %v2059 = vpop.f32.mrb[0].mxu0
      %v2060 = vadd.f32 0.0, %v2059
      %v2061 = vpop.f32.mrb[0].mxu0
      %2062 = vdwg.mxu0
      %2063 = vrot.lane.b32.xlu0 %v1894, 120
      %v2064 = vpop.permute.xlu0 %2063
      %2065 = vrot.lane.b32.xlu0 %v1894, 88
      %v2066 = vpop.permute.xlu0 %2065
      %v2067 = vsel %vm818, %v2064, 0
      %v2069 = vsel %vm818, %v2066, 0
      %2071 = vmatprep.subr.mxu0 0.0
      %2072 = vmatpush1.xpose.msra.mxu0 %v2069
      %2073 = vmatprep.subr.mxu0 0.0
      %2074 = vmatpush1.xpose.msra.mxu0 0.0
      %2075 = vmatprep.subr.mxu0 0.0
      %2076 = vmatpush1.xpose.msra.mxu0 0.0
      %2077 = vmatprep.subr.mxu0 0.0
      %2078 = vmatpush1.xpose.msra.mxu0 0.0
      %2079 = vmatprep.subr.mxu0 0.0
      %2080 = vmatpush1.xpose.msra.mxu0 0.0
      %2081 = vmatprep.subr.mxu0 0.0
      %2082 = vmatpush1.xpose.msra.mxu0 0.0
      %2083 = vmatprep.subr.mxu0 0.0
      %2084 = vmatpush1.xpose.msra.mxu0 0.0
      %2085 = vmatprep.subr.mxu0 0.0
      %2086 = vmatpush1.xpose.msra.mxu0 0.0
      %2087 = vmatprep.subr.mxu0 0.0
      %2088 = vmatpush1.xpose.msra.mxu0 0.0
      %2089 = vmatprep.subr.mxu0 0.0
      %2090 = vmatpush1.xpose.msra.mxu0 0.0
      %2091 = vmatprep.subr.mxu0 0.0
      %2092 = vmatpush1.xpose.msra.mxu0 0.0
      %2093 = vmatprep.subr.mxu0 0.0
      %2094 = vmatpush1.xpose.msra.mxu0 0.0
      %2095 = vmatprep.subr.mxu0 0.0
      %2096 = vmatpush1.xpose.msra.mxu0 0.0
      %2097 = vmatprep.subr.mxu0 0.0
      %2098 = vmatpush1.xpose.msra.mxu0 0.0
      %2099 = vmatprep.subr.mxu0 0.0
      %2100 = vmatpush1.xpose.msra.mxu0 0.0
      %2101 = vmatprep.subr.mxu0 0.0
      %2102 = vmatpush1.xpose.msra.mxu0 0.0
      %2103 = vmatprep.subr.mxu0 0.0
      %2104 = vmatpush1.xpose.msra.mxu0 0.0
      %2105 = vmatprep.subr.mxu0 0.0
      %2106 = vmatpush1.xpose.msra.mxu0 0.0
      %2107 = vmatprep.subr.mxu0 0.0
      %2108 = vmatpush1.xpose.msra.mxu0 0.0
      %2109 = vmatprep.subr.mxu0 0.0
      %2110 = vmatpush1.xpose.msra.mxu0 0.0
      %2111 = vmatprep.subr.mxu0 0.0
      %2112 = vmatpush1.xpose.msra.mxu0 0.0
      %2113 = vmatprep.subr.mxu0 0.0
      %2114 = vmatpush1.xpose.msra.mxu0 0.0
      %2115 = vmatprep.subr.mxu0 0.0
      %2116 = vmatpush1.xpose.msra.mxu0 0.0
      %2117 = vmatprep.subr.mxu0 0.0
      %2118 = vmatpush1.xpose.msra.mxu0 0.0
      %2119 = vmatprep.subr.mxu0 0.0
      %2120 = vmatpush1.xpose.msra.mxu0 0.0
      %2121 = vmatprep.subr.mxu0 0.0
      %2122 = vmatpush1.xpose.msra.mxu0 0.0
      %2123 = vmatprep.subr.mxu0 0.0
      %2124 = vmatpush1.xpose.msra.mxu0 0.0
      %2125 = vmatprep.subr.mxu0 0.0
      %2126 = vmatpush1.xpose.msra.mxu0 0.0
      %2127 = vmatprep.subr.mxu0 0.0
      %2128 = vmatpush1.xpose.msra.mxu0 0.0
      %2129 = vmatprep.subr.mxu0 0.0
      %2130 = vmatpush1.xpose.msra.mxu0 0.0
      %2131 = vmatprep.subr.mxu0 0.0
      %2132 = vmatpush1.xpose.msra.mxu0 0.0
      %2133 = vmatprep.subr.mxu0 0.0
      %2134 = vmatpush1.xpose.msra.mxu0 0.0
      %2135 = vmatprep.mubr.f32.mxu0 0.0
      %2136 = vmatmul.mubr.f32.gmra.mrb[0].mxu0 %v2067
      %v2137 = vpop.f32.mrb[0].mxu0
      %v2138 = vadd.f32 0.0, %v2137
      %v2139 = vpop.f32.mrb[0].mxu0
      %2140 = vdwg.mxu0
      %v2141 = vmul.f32 %v2138, 0.35355338
      %v2142 = vadd.f32 %v2141, %v604
      %v2143 = vsel %vm818, %v2142, -inf
      %2144 = vmax.xlane.f32.xlu0 %v2143
      %v2145 = vpop.xlane.xlu0 %2144
      %v2146 = vsub.f32 %v2142, %v2145
      %v2147 = vmul.f32 %v2146, 1.442695
      %v2148 = vpow.pop %v2147
      %v2149 = vsel %vm818, %v2148, 0.0
      %2150 = vadd.xlane.f32.xlu0 %v2149
      %v2151 = vpop.xlane.xlu0 %2150
      %v2152 = vrcp.pop %v2151
      %v2153 = vmul.f32 %v2148, %v2152
      %2154 = vrot.lane.b32.xlu0 %v1894, 56
      %v2155 = vpop.permute.xlu0 %2154
      %v2158 = vsel %vm818, %v2153, 0
      %2160 = vmatprep.subr.mxu0 0.0
      %2161 = vmatpush1.msra.mxu0 %v2155
      %2162 = vmatprep.subr.mxu0 0.0
      %2163 = vmatpush1.msra.mxu0 0.0
      %2164 = vmatprep.subr.mxu0 0.0
      %2165 = vmatpush1.msra.mxu0 0.0
      %2166 = vmatprep.subr.mxu0 0.0
      %2167 = vmatpush1.msra.mxu0 0.0
      %2168 = vmatprep.subr.mxu0 0.0
      %2169 = vmatpush1.msra.mxu0 0.0
      %2170 = vmatprep.subr.mxu0 0.0
      %2171 = vmatpush1.msra.mxu0 0.0
      %2172 = vmatprep.subr.mxu0 0.0
      %2173 = vmatpush1.msra.mxu0 0.0
      %2174 = vmatprep.subr.mxu0 0.0
      %2175 = vmatpush1.msra.mxu0 0.0
      %2176 = vmatprep.subr.mxu0 0.0
      %2177 = vmatpush1.msra.mxu0 0.0
      %2178 = vmatprep.subr.mxu0 0.0
      %2179 = vmatpush1.msra.mxu0 0.0
      %2180 = vmatprep.subr.mxu0 0.0
      %2181 = vmatpush1.msra.mxu0 0.0
      %2182 = vmatprep.subr.mxu0 0.0
      %2183 = vmatpush1.msra.mxu0 0.0
      %2184 = vmatprep.subr.mxu0 0.0
      %2185 = vmatpush1.msra.mxu0 0.0
      %2186 = vmatprep.subr.mxu0 0.0
      %2187 = vmatpush1.msra.mxu0 0.0
      %2188 = vmatprep.subr.mxu0 0.0
      %2189 = vmatpush1.msra.mxu0 0.0
      %2190 = vmatprep.subr.mxu0 0.0
      %2191 = vmatpush1.msra.mxu0 0.0
      %2192 = vmatprep.subr.mxu0 0.0
      %2193 = vmatpush1.msra.mxu0 0.0
      %2194 = vmatprep.subr.mxu0 0.0
      %2195 = vmatpush1.msra.mxu0 0.0
      %2196 = vmatprep.subr.mxu0 0.0
      %2197 = vmatpush1.msra.mxu0 0.0
      %2198 = vmatprep.subr.mxu0 0.0
      %2199 = vmatpush1.msra.mxu0 0.0
      %2200 = vmatprep.subr.mxu0 0.0
      %2201 = vmatpush1.msra.mxu0 0.0
      %2202 = vmatprep.subr.mxu0 0.0
      %2203 = vmatpush1.msra.mxu0 0.0
      %2204 = vmatprep.subr.mxu0 0.0
      %2205 = vmatpush1.msra.mxu0 0.0
      %2206 = vmatprep.subr.mxu0 0.0
      %2207 = vmatpush1.msra.mxu0 0.0
      %2208 = vmatprep.subr.mxu0 0.0
      %2209 = vmatpush1.msra.mxu0 0.0
      %2210 = vmatprep.subr.mxu0 0.0
      %2211 = vmatpush1.msra.mxu0 0.0
      %2212 = vmatprep.subr.mxu0 0.0
      %2213 = vmatpush1.msra.mxu0 0.0
      %2214 = vmatprep.subr.mxu0 0.0
      %2215 = vmatpush1.msra.mxu0 0.0
      %2216 = vmatprep.subr.mxu0 0.0
      %2217 = vmatpush1.msra.mxu0 0.0
      %2218 = vmatprep.subr.mxu0 0.0
      %2219 = vmatpush1.msra.mxu0 0.0
      %2220 = vmatprep.subr.mxu0 0.0
      %2221 = vmatpush1.msra.mxu0 0.0
      %2222 = vmatprep.subr.mxu0 0.0
      %2223 = vmatpush1.msra.mxu0 0.0
      %2224 = vmatprep.mubr.f32.mxu0 0.0
      %2225 = vmatmul.mubr.f32.gmra.mrb[0].mxu0 %v2158
      %v2226 = vpop.f32.mrb[0].mxu0
      %v2227 = vadd.f32 0.0, %v2226
      %v2228 = vpop.f32.mrb[0].mxu0
      %2229 = vdwg.mxu0
      %2230 = vrot.lane.b32.xlu0 %v1894, 112
      %v2231 = vpop.permute.xlu0 %2230
      %2232 = vrot.lane.b32.xlu0 %v1894, 80
      %v2233 = vpop.permute.xlu0 %2232
      %v2234 = vsel %vm818, %v2231, 0
      %v2236 = vsel %vm818, %v2233, 0
      %2238 = vmatprep.subr.mxu0 0.0
      %2239 = vmatpush1.xpose.msra.mxu0 %v2236
      %2240 = vmatprep.subr.mxu0 0.0
      %2241 = vmatpush1.xpose.msra.mxu0 0.0
      %2242 = vmatprep.subr.mxu0 0.0
      %2243 = vmatpush1.xpose.msra.mxu0 0.0
      %2244 = vmatprep.subr.mxu0 0.0
      %2245 = vmatpush1.xpose.msra.mxu0 0.0
      %2246 = vmatprep.subr.mxu0 0.0
      %2247 = vmatpush1.xpose.msra.mxu0 0.0
      %2248 = vmatprep.subr.mxu0 0.0
      %2249 = vmatpush1.xpose.msra.mxu0 0.0
      %2250 = vmatprep.subr.mxu0 0.0
      %2251 = vmatpush1.xpose.msra.mxu0 0.0
      %2252 = vmatprep.subr.mxu0 0.0
      %2253 = vmatpush1.xpose.msra.mxu0 0.0
      %2254 = vmatprep.subr.mxu0 0.0
      %2255 = vmatpush1.xpose.msra.mxu0 0.0
      %2256 = vmatprep.subr.mxu0 0.0
      %2257 = vmatpush1.xpose.msra.mxu0 0.0
      %2258 = vmatprep.subr.mxu0 0.0
      %2259 = vmatpush1.xpose.msra.mxu0 0.0
      %2260 = vmatprep.subr.mxu0 0.0
      %2261 = vmatpush1.xpose.msra.mxu0 0.0
      %2262 = vmatprep.subr.mxu0 0.0
      %2263 = vmatpush1.xpose.msra.mxu0 0.0
      %2264 = vmatprep.subr.mxu0 0.0
      %2265 = vmatpush1.xpose.msra.mxu0 0.0
      %2266 = vmatprep.subr.mxu0 0.0
      %2267 = vmatpush1.xpose.msra.mxu0 0.0
      %2268 = vmatprep.subr.mxu0 0.0
      %2269 = vmatpush1.xpose.msra.mxu0 0.0
      %2270 = vmatprep.subr.mxu0 0.0
      %2271 = vmatpush1.xpose.msra.mxu0 0.0
      %2272 = vmatprep.subr.mxu0 0.0
      %2273 = vmatpush1.xpose.msra.mxu0 0.0
      %2274 = vmatprep.subr.mxu0 0.0
      %2275 = vmatpush1.xpose.msra.mxu0 0.0
      %2276 = vmatprep.subr.mxu0 0.0
      %2277 = vmatpush1.xpose.msra.mxu0 0.0
      %2278 = vmatprep.subr.mxu0 0.0
      %2279 = vmatpush1.xpose.msra.mxu0 0.0
      %2280 = vmatprep.subr.mxu0 0.0
      %2281 = vmatpush1.xpose.msra.mxu0 0.0
      %2282 = vmatprep.subr.mxu0 0.0
      %2283 = vmatpush1.xpose.msra.mxu0 0.0
      %2284 = vmatprep.subr.mxu0 0.0
      %2285 = vmatpush1.xpose.msra.mxu0 0.0
      %2286 = vmatprep.subr.mxu0 0.0
      %2287 = vmatpush1.xpose.msra.mxu0 0.0
      %2288 = vmatprep.subr.mxu0 0.0
      %2289 = vmatpush1.xpose.msra.mxu0 0.0
      %2290 = vmatprep.subr.mxu0 0.0
      %2291 = vmatpush1.xpose.msra.mxu0 0.0
      %2292 = vmatprep.subr.mxu0 0.0
      %2293 = vmatpush1.xpose.msra.mxu0 0.0
      %2294 = vmatprep.subr.mxu0 0.0
      %2295 = vmatpush1.xpose.msra.mxu0 0.0
      %2296 = vmatprep.subr.mxu0 0.0
      %2297 = vmatpush1.xpose.msra.mxu0 0.0
      %2298 = vmatprep.subr.mxu0 0.0
      %2299 = vmatpush1.xpose.msra.mxu0 0.0
      %2300 = vmatprep.subr.mxu0 0.0
      %2301 = vmatpush1.xpose.msra.mxu0 0.0
      %2302 = vmatprep.mubr.f32.mxu0 0.0
      %2303 = vmatmul.mubr.f32.gmra.mrb[0].mxu0 %v2234
      %v2304 = vpop.f32.mrb[0].mxu0
      %v2305 = vadd.f32 0.0, %v2304
      %v2306 = vpop.f32.mrb[0].mxu0
      %2307 = vdwg.mxu0
      %v2308 = vmul.f32 %v2305, 0.35355338
      %v2309 = vadd.f32 %v2308, %v604
      %v2310 = vsel %vm818, %v2309, -inf
      %2311 = vmax.xlane.f32.xlu0 %v2310
      %v2312 = vpop.xlane.xlu0 %2311
      %v2313 = vsub.f32 %v2309, %v2312
      %v2314 = vmul.f32 %v2313, 1.442695
      %v2315 = vpow.pop %v2314
      %v2316 = vsel %vm818, %v2315, 0.0
      %2317 = vadd.xlane.f32.xlu0 %v2316
      %v2318 = vpop.xlane.xlu0 %2317
      %v2319 = vrcp.pop %v2318
      %v2320 = vmul.f32 %v2315, %v2319
      %2321 = vrot.lane.b32.xlu0 %v1894, 48
      %v2322 = vpop.permute.xlu0 %2321
      %v2325 = vsel %vm818, %v2320, 0
      %2327 = vmatprep.subr.mxu0 0.0
      %2328 = vmatpush1.msra.mxu0 %v2322
      %2329 = vmatprep.subr.mxu0 0.0
      %2330 = vmatpush1.msra.mxu0 0.0
      %2331 = vmatprep.subr.mxu0 0.0
      %2332 = vmatpush1.msra.mxu0 0.0
      %2333 = vmatprep.subr.mxu0 0.0
      %2334 = vmatpush1.msra.mxu0 0.0
      %2335 = vmatprep.subr.mxu0 0.0
      %2336 = vmatpush1.msra.mxu0 0.0
      %2337 = vmatprep.subr.mxu0 0.0
      %2338 = vmatpush1.msra.mxu0 0.0
      %2339 = vmatprep.subr.mxu0 0.0
      %2340 = vmatpush1.msra.mxu0 0.0
      %2341 = vmatprep.subr.mxu0 0.0
      %2342 = vmatpush1.msra.mxu0 0.0
      %2343 = vmatprep.subr.mxu0 0.0
      %2344 = vmatpush1.msra.mxu0 0.0
      %2345 = vmatprep.subr.mxu0 0.0
      %2346 = vmatpush1.msra.mxu0 0.0
      %2347 = vmatprep.subr.mxu0 0.0
      %2348 = vmatpush1.msra.mxu0 0.0
      %2349 = vmatprep.subr.mxu0 0.0
      %2350 = vmatpush1.msra.mxu0 0.0
      %2351 = vmatprep.subr.mxu0 0.0
      %2352 = vmatpush1.msra.mxu0 0.0
      %2353 = vmatprep.subr.mxu0 0.0
      %2354 = vmatpush1.msra.mxu0 0.0
      %2355 = vmatprep.subr.mxu0 0.0
      %2356 = vmatpush1.msra.mxu0 0.0
      %2357 = vmatprep.subr.mxu0 0.0
      %2358 = vmatpush1.msra.mxu0 0.0
      %2359 = vmatprep.subr.mxu0 0.0
      %2360 = vmatpush1.msra.mxu0 0.0
      %2361 = vmatprep.subr.mxu0 0.0
      %2362 = vmatpush1.msra.mxu0 0.0
      %2363 = vmatprep.subr.mxu0 0.0
      %2364 = vmatpush1.msra.mxu0 0.0
      %2365 = vmatprep.subr.mxu0 0.0
      %2366 = vmatpush1.msra.mxu0 0.0
      %2367 = vmatprep.subr.mxu0 0.0
      %2368 = vmatpush1.msra.mxu0 0.0
      %2369 = vmatprep.subr.mxu0 0.0
      %2370 = vmatpush1.msra.mxu0 0.0
      %2371 = vmatprep.subr.mxu0 0.0
      %2372 = vmatpush1.msra.mxu0 0.0
      %2373 = vmatprep.subr.mxu0 0.0
      %2374 = vmatpush1.msra.mxu0 0.0
      %2375 = vmatprep.subr.mxu0 0.0
      %2376 = vmatpush1.msra.mxu0 0.0
      %2377 = vmatprep.subr.mxu0 0.0
      %2378 = vmatpush1.msra.mxu0 0.0
      %2379 = vmatprep.subr.mxu0 0.0
      %2380 = vmatpush1.msra.mxu0 0.0
      %2381 = vmatprep.subr.mxu0 0.0
      %2382 = vmatpush1.msra.mxu0 0.0
      %2383 = vmatprep.subr.mxu0 0.0
      %2384 = vmatpush1.msra.mxu0 0.0
      %2385 = vmatprep.subr.mxu0 0.0
      %2386 = vmatpush1.msra.mxu0 0.0
      %2387 = vmatprep.subr.mxu0 0.0
      %2388 = vmatpush1.msra.mxu0 0.0
      %2389 = vmatprep.subr.mxu0 0.0
      %2390 = vmatpush1.msra.mxu0 0.0
      %2391 = vmatprep.mubr.f32.mxu0 0.0
      %2392 = vmatmul.mubr.f32.gmra.mrb[0].mxu0 %v2325
      %v2393 = vpop.f32.mrb[0].mxu0
      %v2394 = vadd.f32 0.0, %v2393
      %v2395 = vpop.f32.mrb[0].mxu0
      %2396 = vdwg.mxu0
      %2397 = vrot.lane.b32.xlu0 %v1894, 104
      %v2398 = vpop.permute.xlu0 %2397
      %2399 = vrot.lane.b32.xlu0 %v1894, 72
      %v2400 = vpop.permute.xlu0 %2399
      %v2401 = vsel %vm818, %v2398, 0
      %v2403 = vsel %vm818, %v2400, 0
      %2405 = vmatprep.subr.mxu0 0.0
      %2406 = vmatpush1.xpose.msra.mxu0 %v2403
      %2407 = vmatprep.subr.mxu0 0.0
      %2408 = vmatpush1.xpose.msra.mxu0 0.0
      %2409 = vmatprep.subr.mxu0 0.0
      %2410 = vmatpush1.xpose.msra.mxu0 0.0
      %2411 = vmatprep.subr.mxu0 0.0
      %2412 = vmatpush1.xpose.msra.mxu0 0.0
      %2413 = vmatprep.subr.mxu0 0.0
      %2414 = vmatpush1.xpose.msra.mxu0 0.0
      %2415 = vmatprep.subr.mxu0 0.0
      %2416 = vmatpush1.xpose.msra.mxu0 0.0
      %2417 = vmatprep.subr.mxu0 0.0
      %2418 = vmatpush1.xpose.msra.mxu0 0.0
      %2419 = vmatprep.subr.mxu0 0.0
      %2420 = vmatpush1.xpose.msra.mxu0 0.0
      %2421 = vmatprep.subr.mxu0 0.0
      %2422 = vmatpush1.xpose.msra.mxu0 0.0
      %2423 = vmatprep.subr.mxu0 0.0
      %2424 = vmatpush1.xpose.msra.mxu0 0.0
      %2425 = vmatprep.subr.mxu0 0.0
      %2426 = vmatpush1.xpose.msra.mxu0 0.0
      %2427 = vmatprep.subr.mxu0 0.0
      %2428 = vmatpush1.xpose.msra.mxu0 0.0
      %2429 = vmatprep.subr.mxu0 0.0
      %2430 = vmatpush1.xpose.msra.mxu0 0.0
      %2431 = vmatprep.subr.mxu0 0.0
      %2432 = vmatpush1.xpose.msra.mxu0 0.0
      %2433 = vmatprep.subr.mxu0 0.0
      %2434 = vmatpush1.xpose.msra.mxu0 0.0
      %2435 = vmatprep.subr.mxu0 0.0
      %2436 = vmatpush1.xpose.msra.mxu0 0.0
      %2437 = vmatprep.subr.mxu0 0.0
      %2438 = vmatpush1.xpose.msra.mxu0 0.0
      %2439 = vmatprep.subr.mxu0 0.0
      %2440 = vmatpush1.xpose.msra.mxu0 0.0
      %2441 = vmatprep.subr.mxu0 0.0
      %2442 = vmatpush1.xpose.msra.mxu0 0.0
      %2443 = vmatprep.subr.mxu0 0.0
      %2444 = vmatpush1.xpose.msra.mxu0 0.0
      %2445 = vmatprep.subr.mxu0 0.0
      %2446 = vmatpush1.xpose.msra.mxu0 0.0
      %2447 = vmatprep.subr.mxu0 0.0
      %2448 = vmatpush1.xpose.msra.mxu0 0.0
      %2449 = vmatprep.subr.mxu0 0.0
      %2450 = vmatpush1.xpose.msra.mxu0 0.0
      %2451 = vmatprep.subr.mxu0 0.0
      %2452 = vmatpush1.xpose.msra.mxu0 0.0
      %2453 = vmatprep.subr.mxu0 0.0
      %2454 = vmatpush1.xpose.msra.mxu0 0.0
      %2455 = vmatprep.subr.mxu0 0.0
      %2456 = vmatpush1.xpose.msra.mxu0 0.0
      %2457 = vmatprep.subr.mxu0 0.0
      %2458 = vmatpush1.xpose.msra.mxu0 0.0
      %2459 = vmatprep.subr.mxu0 0.0
      %2460 = vmatpush1.xpose.msra.mxu0 0.0
      %2461 = vmatprep.subr.mxu0 0.0
      %2462 = vmatpush1.xpose.msra.mxu0 0.0
      %2463 = vmatprep.subr.mxu0 0.0
      %2464 = vmatpush1.xpose.msra.mxu0 0.0
      %2465 = vmatprep.subr.mxu0 0.0
      %2466 = vmatpush1.xpose.msra.mxu0 0.0
      %2467 = vmatprep.subr.mxu0 0.0
      %2468 = vmatpush1.xpose.msra.mxu0 0.0
      %2469 = vmatprep.mubr.f32.mxu0 0.0
      %2470 = vmatmul.mubr.f32.gmra.mrb[0].mxu0 %v2401
      %v2471 = vpop.f32.mrb[0].mxu0
      %v2472 = vadd.f32 0.0, %v2471
      %v2473 = vpop.f32.mrb[0].mxu0
      %2474 = vdwg.mxu0
      %v2475 = vmul.f32 %v2472, 0.35355338
      %v2476 = vadd.f32 %v2475, %v604
      %v2477 = vsel %vm818, %v2476, -inf
      %2478 = vmax.xlane.f32.xlu0 %v2477
      %v2479 = vpop.xlane.xlu0 %2478
      %v2480 = vsub.f32 %v2476, %v2479
      %v2481 = vmul.f32 %v2480, 1.442695
      %v2482 = vpow.pop %v2481
      %v2483 = vsel %vm818, %v2482, 0.0
      %2484 = vadd.xlane.f32.xlu0 %v2483
      %v2485 = vpop.xlane.xlu0 %2484
      %v2486 = vrcp.pop %v2485
      %v2487 = vmul.f32 %v2482, %v2486
      %2488 = vrot.lane.b32.xlu0 %v1894, 40
      %v2489 = vpop.permute.xlu0 %2488
      %v2492 = vsel %vm818, %v2487, 0
      %2494 = vmatprep.subr.mxu0 0.0
      %2495 = vmatpush1.msra.mxu0 %v2489
      %2496 = vmatprep.subr.mxu0 0.0
      %2497 = vmatpush1.msra.mxu0 0.0
      %2498 = vmatprep.subr.mxu0 0.0
      %2499 = vmatpush1.msra.mxu0 0.0
      %2500 = vmatprep.subr.mxu0 0.0
      %2501 = vmatpush1.msra.mxu0 0.0
      %2502 = vmatprep.subr.mxu0 0.0
      %2503 = vmatpush1.msra.mxu0 0.0
      %2504 = vmatprep.subr.mxu0 0.0
      %2505 = vmatpush1.msra.mxu0 0.0
      %2506 = vmatprep.subr.mxu0 0.0
      %2507 = vmatpush1.msra.mxu0 0.0
      %2508 = vmatprep.subr.mxu0 0.0
      %2509 = vmatpush1.msra.mxu0 0.0
      %2510 = vmatprep.subr.mxu0 0.0
      %2511 = vmatpush1.msra.mxu0 0.0
      %2512 = vmatprep.subr.mxu0 0.0
      %2513 = vmatpush1.msra.mxu0 0.0
      %2514 = vmatprep.subr.mxu0 0.0
      %2515 = vmatpush1.msra.mxu0 0.0
      %2516 = vmatprep.subr.mxu0 0.0
      %2517 = vmatpush1.msra.mxu0 0.0
      %2518 = vmatprep.subr.mxu0 0.0
      %2519 = vmatpush1.msra.mxu0 0.0
      %2520 = vmatprep.subr.mxu0 0.0
      %2521 = vmatpush1.msra.mxu0 0.0
      %2522 = vmatprep.subr.mxu0 0.0
      %2523 = vmatpush1.msra.mxu0 0.0
      %2524 = vmatprep.subr.mxu0 0.0
      %2525 = vmatpush1.msra.mxu0 0.0
      %2526 = vmatprep.subr.mxu0 0.0
      %2527 = vmatpush1.msra.mxu0 0.0
      %2528 = vmatprep.subr.mxu0 0.0
      %2529 = vmatpush1.msra.mxu0 0.0
      %2530 = vmatprep.subr.mxu0 0.0
      %2531 = vmatpush1.msra.mxu0 0.0
      %2532 = vmatprep.subr.mxu0 0.0
      %2533 = vmatpush1.msra.mxu0 0.0
      %2534 = vmatprep.subr.mxu0 0.0
      %2535 = vmatpush1.msra.mxu0 0.0
      %2536 = vmatprep.subr.mxu0 0.0
      %2537 = vmatpush1.msra.mxu0 0.0
      %2538 = vmatprep.subr.mxu0 0.0
      %2539 = vmatpush1.msra.mxu0 0.0
      %2540 = vmatprep.subr.mxu0 0.0
      %2541 = vmatpush1.msra.mxu0 0.0
      %2542 = vmatprep.subr.mxu0 0.0
      %2543 = vmatpush1.msra.mxu0 0.0
      %2544 = vmatprep.subr.mxu0 0.0
      %2545 = vmatpush1.msra.mxu0 0.0
      %2546 = vmatprep.subr.mxu0 0.0
      %2547 = vmatpush1.msra.mxu0 0.0
      %2548 = vmatprep.subr.mxu0 0.0
      %2549 = vmatpush1.msra.mxu0 0.0
      %2550 = vmatprep.subr.mxu0 0.0
      %2551 = vmatpush1.msra.mxu0 0.0
      %2552 = vmatprep.subr.mxu0 0.0
      %2553 = vmatpush1.msra.mxu0 0.0
      %2554 = vmatprep.subr.mxu0 0.0
      %2555 = vmatpush1.msra.mxu0 0.0
      %2556 = vmatprep.subr.mxu0 0.0
      %2557 = vmatpush1.msra.mxu0 0.0
      %2558 = vmatprep.mubr.f32.mxu0 0.0
      %2559 = vmatmul.mubr.f32.gmra.mrb[0].mxu0 %v2492
      %v2560 = vpop.f32.mrb[0].mxu0
      %v2561 = vadd.f32 0.0, %v2560
      %v2562 = vpop.f32.mrb[0].mxu0
      %2563 = vdwg.mxu0
      %2565 = vrot.lane.b32.xlu0 %v2227, 8
      %v2566 = vpop.permute.xlu0 %2565
      %2569 = vrot.lane.b32.xlu0 %v2394, 16
      %v2570 = vpop.permute.xlu0 %2569
      %2573 = vrot.lane.b32.xlu0 %v2561, 24
      %v2574 = vpop.permute.xlu0 %2573
      %v2576 = vsel %vm818, %v2060, %v2566
      %v2577 = vsel %vm1496, %v2576, %v2570
      %v2578 = vsel %vm1498, %v2577, %v2574
      %s2579 = scalar_lea.vmem %s7, 32
      %v2580 = vld [vmem:[%s2579] sm:$0xff]
      %v2581 = vld [vmem:[%s2579 + $0x8] sm:$0xff]
      %v2582 = vld [vmem:[%s2579 + $0x10] sm:$0xff]
      %v2583 = vld [vmem:[%s2579 + $0x18] sm:$0xff]
      %v2585 = vsel %vm708, %v2578, 0
      %2587 = vmatprep.subr.mxu0 0.0
      %2588 = vmatpush1.msra.mxu0 %v2580
      %2589 = vmatprep.subr.mxu0 0.0
      %2590 = vmatpush1.msra.mxu0 %v2581
      %2591 = vmatprep.subr.mxu0 0.0
      %2592 = vmatpush1.msra.mxu0 %v2582
      %2593 = vmatprep.subr.mxu0 0.0
      %2594 = vmatpush1.msra.mxu0 %v2583
      %2595 = vmatprep.subr.mxu0 0.0
      %2596 = vmatpush1.msra.mxu0 0.0
      %2597 = vmatprep.subr.mxu0 0.0
      %2598 = vmatpush1.msra.mxu0 0.0
      %2599 = vmatprep.subr.mxu0 0.0
      %2600 = vmatpush1.msra.mxu0 0.0
      %2601 = vmatprep.subr.mxu0 0.0
      %2602 = vmatpush1.msra.mxu0 0.0
      %2603 = vmatprep.subr.mxu0 0.0
      %2604 = vmatpush1.msra.mxu0 0.0
      %2605 = vmatprep.subr.mxu0 0.0
      %2606 = vmatpush1.msra.mxu0 0.0
      %2607 = vmatprep.subr.mxu0 0.0
      %2608 = vmatpush1.msra.mxu0 0.0
      %2609 = vmatprep.subr.mxu0 0.0
      %2610 = vmatpush1.msra.mxu0 0.0
      %2611 = vmatprep.subr.mxu0 0.0
      %2612 = vmatpush1.msra.mxu0 0.0
      %2613 = vmatprep.subr.mxu0 0.0
      %2614 = vmatpush1.msra.mxu0 0.0
      %2615 = vmatprep.subr.mxu0 0.0
      %2616 = vmatpush1.msra.mxu0 0.0
      %2617 = vmatprep.subr.mxu0 0.0
      %2618 = vmatpush1.msra.mxu0 0.0
      %2619 = vmatprep.subr.mxu0 0.0
      %2620 = vmatpush1.msra.mxu0 0.0
      %2621 = vmatprep.subr.mxu0 0.0
      %2622 = vmatpush1.msra.mxu0 0.0
      %2623 = vmatprep.subr.mxu0 0.0
      %2624 = vmatpush1.msra.mxu0 0.0
      %2625 = vmatprep.subr.mxu0 0.0
      %2626 = vmatpush1.msra.mxu0 0.0
      %2627 = vmatprep.subr.mxu0 0.0
      %2628 = vmatpush1.msra.mxu0 0.0
      %2629 = vmatprep.subr.mxu0 0.0
      %2630 = vmatpush1.msra.mxu0 0.0
      %2631 = vmatprep.subr.mxu0 0.0
      %2632 = vmatpush1.msra.mxu0 0.0
      %2633 = vmatprep.subr.mxu0 0.0
      %2634 = vmatpush1.msra.mxu0 0.0
      %2635 = vmatprep.subr.mxu0 0.0
      %2636 = vmatpush1.msra.mxu0 0.0
      %2637 = vmatprep.subr.mxu0 0.0
      %2638 = vmatpush1.msra.mxu0 0.0
      %2639 = vmatprep.subr.mxu0 0.0
      %2640 = vmatpush1.msra.mxu0 0.0
      %2641 = vmatprep.subr.mxu0 0.0
      %2642 = vmatpush1.msra.mxu0 0.0
      %2643 = vmatprep.subr.mxu0 0.0
      %2644 = vmatpush1.msra.mxu0 0.0
      %2645 = vmatprep.subr.mxu0 0.0
      %2646 = vmatpush1.msra.mxu0 0.0
      %2647 = vmatprep.subr.mxu0 0.0
      %2648 = vmatpush1.msra.mxu0 0.0
      %2649 = vmatprep.subr.mxu0 0.0
      %2650 = vmatpush1.msra.mxu0 0.0
      %2651 = vmatprep.mubr.f32.mxu0 0.0
      %2652 = vmatmul.mubr.f32.gmra.mrb[0].mxu0 %v2585
      %v2653 = vpop.f32.mrb[0].mxu0
      %v2654 = vadd.f32 0.0, %v2653
      %v2655 = vpop.f32.mrb[0].mxu0
      %2656 = vdwg.mxu0
      %v2657 = vadd.f32 %v1788, %v2654
      %v2658 = vld [vmem:[%s8 + $0x1] sm:$0x1]
      %v2659 = vlaneseq
      %v2660 = vshrl.u32 %v2659, 7
      %v2661 = vsub.s32 0, %v2660
      %v2662 = vrot.slane %v2658, %v2661
      %v2663 = vadd.f32 %v2657, %v2662
      %v2664 = vld [vmem:[%s9 + $0x1] sm:$0x1]
      %v2665 = vld [vmem:[%s10 + $0x1] sm:$0x1]
      %v2666 = vsel %vm708, %v2663, 0.0
      %2667 = vadd.xlane.f32.xlu0 %v2666
      %v2668 = vpop.xlane.xlu0 %2667
      %v2669 = vmul.f32 %v2668, %v712
      %v2670 = vsub.f32 %v2663, %v2669
      %v2671 = vmul.f32 %v2670, %v2670
      %v2672 = vsel %vm708, %v2671, 0.0
      %2673 = vadd.xlane.f32.xlu0 %v2672
      %v2674 = vpop.xlane.xlu0 %2673
      %v2675 = vmul.f32 %v2674, %v712
      %v2676 = vadd.f32 %v2675, 1e-12
      %v2677 = vrsqrt.pop %v2676
      %v2678 = vmul.f32 %v2670, %v2677
      %v2679 = vlaneseq
      %v2680 = vshrl.u32 %v2679, 7
      %v2681 = vsub.s32 0, %v2680
      %v2682 = vrot.slane %v2664, %v2681
      %v2683 = vmul.f32 %v2678, %v2682
      %v2684 = vlaneseq
      %v2685 = vshrl.u32 %v2684, 7
      %v2686 = vsub.s32 0, %v2685
      %v2687 = vrot.slane %v2665, %v2686
      %v2688 = vadd.f32 %v2683, %v2687
      %s2689 = scalar_lea.vmem %s11, 32
      %v2690 = vld [vmem:[%s2689] sm:$0xff]
      %v2691 = vld [vmem:[%s2689 + $0x8] sm:$0xff]
      %v2692 = vld [vmem:[%s2689 + $0x10] sm:$0xff]
      %v2693 = vld [vmem:[%s2689 + $0x18] sm:$0xff]
      %v2694 = vld [vmem:[%s12 + $0x1] sm:$0x1]
      %v2695 = vlaneseq
      %v2696 = vshrl.u32 %v2695, 7
      %v2697 = vsub.s32 0, %v2696
      %v2698 = vrot.slane %v2694, %v2697
      %v2700 = vsel %vm708, %v2688, 0
      %2702 = vmatprep.subr.mxu0 0.0
      %2703 = vmatpush1.msra.mxu0 %v2690
      %2704 = vmatprep.subr.mxu0 0.0
      %2705 = vmatpush1.msra.mxu0 %v2691
      %2706 = vmatprep.subr.mxu0 0.0
      %2707 = vmatpush1.msra.mxu0 %v2692
      %2708 = vmatprep.subr.mxu0 0.0
      %2709 = vmatpush1.msra.mxu0 %v2693
      %2710 = vmatprep.subr.mxu0 0.0
      %2711 = vmatpush1.msra.mxu0 0.0
      %2712 = vmatprep.subr.mxu0 0.0
      %2713 = vmatpush1.msra.mxu0 0.0
      %2714 = vmatprep.subr.mxu0 0.0
      %2715 = vmatpush1.msra.mxu0 0.0
      %2716 = vmatprep.subr.mxu0 0.0
      %2717 = vmatpush1.msra.mxu0 0.0
      %2718 = vmatprep.subr.mxu0 0.0
      %2719 = vmatpush1.msra.mxu0 0.0
      %2720 = vmatprep.subr.mxu0 0.0
      %2721 = vmatpush1.msra.mxu0 0.0
      %2722 = vmatprep.subr.mxu0 0.0
      %2723 = vmatpush1.msra.mxu0 0.0
      %2724 = vmatprep.subr.mxu0 0.0
      %2725 = vmatpush1.msra.mxu0 0.0
      %2726 = vmatprep.subr.mxu0 0.0
      %2727 = vmatpush1.msra.mxu0 0.0
      %2728 = vmatprep.subr.mxu0 0.0
      %2729 = vmatpush1.msra.mxu0 0.0
      %2730 = vmatprep.subr.mxu0 0.0
      %2731 = vmatpush1.msra.mxu0 0.0
      %2732 = vmatprep.subr.mxu0 0.0
      %2733 = vmatpush1.msra.mxu0 0.0
      %2734 = vmatprep.subr.mxu0 0.0
      %2735 = vmatpush1.msra.mxu0 0.0
      %2736 = vmatprep.subr.mxu0 0.0
      %2737 = vmatpush1.msra.mxu0 0.0
      %2738 = vmatprep.subr.mxu0 0.0
      %2739 = vmatpush1.msra.mxu0 0.0
      %2740 = vmatprep.subr.mxu0 0.0
      %2741 = vmatpush1.msra.mxu0 0.0
      %2742 = vmatprep.subr.mxu0 0.0
      %2743 = vmatpush1.msra.mxu0 0.0
      %2744 = vmatprep.subr.mxu0 0.0
      %2745 = vmatpush1.msra.mxu0 0.0
      %2746 = vmatprep.subr.mxu0 0.0
      %2747 = vmatpush1.msra.mxu0 0.0
      %2748 = vmatprep.subr.mxu0 0.0
      %2749 = vmatpush1.msra.mxu0 0.0
      %2750 = vmatprep.subr.mxu0 0.0
      %2751 = vmatpush1.msra.mxu0 0.0
      %2752 = vmatprep.subr.mxu0 0.0
      %2753 = vmatpush1.msra.mxu0 0.0
      %2754 = vmatprep.subr.mxu0 0.0
      %2755 = vmatpush1.msra.mxu0 0.0
      %2756 = vmatprep.subr.mxu0 0.0
      %2757 = vmatpush1.msra.mxu0 0.0
      %2758 = vmatprep.subr.mxu0 0.0
      %2759 = vmatpush1.msra.mxu0 0.0
      %2760 = vmatprep.subr.mxu0 0.0
      %2761 = vmatpush1.msra.mxu0 0.0
      %2762 = vmatprep.subr.mxu0 0.0
      %2763 = vmatpush1.msra.mxu0 0.0
      %2764 = vmatprep.subr.mxu0 0.0
      %2765 = vmatpush1.msra.mxu0 0.0
      %2766 = vmatprep.mubr.f32.mxu0 0.0
      %2767 = vmatmul.mubr.f32.gmra.mrb[0].mxu0 %v2700
      %v2768 = vpop.f32.mrb[0].mxu0
      %v2769 = vadd.f32 %v2698, %v2768
      %v2770 = vpop.f32.mrb[0].mxu0
      %2771 = vdwg.mxu0
      %v2772 = vmul.f32 %v2769, 0.5
      %v2773 = vmul.f32 %v2769, 0.70710677
      %v2774 = verf.f32.pop %v2773
      %v2775 = vadd.f32 %v2774, 1.0
      %v2776 = vmul.f32 %v2772, %v2775
      %s2777 = scalar_lea.vmem %s13, 128
      %v2778 = vld [vmem:[%s2777] sm:$0xff]
      %v2779 = vld [vmem:[%s2777 + $0x8] sm:$0xff]
      %v2780 = vld [vmem:[%s2777 + $0x10] sm:$0xff]
      %v2781 = vld [vmem:[%s2777 + $0x18] sm:$0xff]
      %v2782 = vld [vmem:[%s2777 + $0x20] sm:$0xff]
      %v2783 = vld [vmem:[%s2777 + $0x28] sm:$0xff]
      %v2784 = vld [vmem:[%s2777 + $0x30] sm:$0xff]
      %v2785 = vld [vmem:[%s2777 + $0x38] sm:$0xff]
      %v2786 = vld [vmem:[%s2777 + $0x40] sm:$0xff]
      %v2787 = vld [vmem:[%s2777 + $0x48] sm:$0xff]
      %v2788 = vld [vmem:[%s2777 + $0x50] sm:$0xff]
      %v2789 = vld [vmem:[%s2777 + $0x58] sm:$0xff]
      %v2790 = vld [vmem:[%s2777 + $0x60] sm:$0xff]
      %v2791 = vld [vmem:[%s2777 + $0x68] sm:$0xff]
      %v2792 = vld [vmem:[%s2777 + $0x70] sm:$0xff]
      %v2793 = vld [vmem:[%s2777 + $0x78] sm:$0xff]
      %2794 = vmatprep.subr.mxu0 0.0
      %2795 = vmatpush1.msra.mxu0 %v2778
      %2796 = vmatprep.subr.mxu0 0.0
      %2797 = vmatpush1.msra.mxu0 %v2779
      %2798 = vmatprep.subr.mxu0 0.0
      %2799 = vmatpush1.msra.mxu0 %v2780
      %2800 = vmatprep.subr.mxu0 0.0
      %2801 = vmatpush1.msra.mxu0 %v2781
      %2802 = vmatprep.subr.mxu0 0.0
      %2803 = vmatpush1.msra.mxu0 %v2782
      %2804 = vmatprep.subr.mxu0 0.0
      %2805 = vmatpush1.msra.mxu0 %v2783
      %2806 = vmatprep.subr.mxu0 0.0
      %2807 = vmatpush1.msra.mxu0 %v2784
      %2808 = vmatprep.subr.mxu0 0.0
      %2809 = vmatpush1.msra.mxu0 %v2785
      %2810 = vmatprep.subr.mxu0 0.0
      %2811 = vmatpush1.msra.mxu0 %v2786
      %2812 = vmatprep.subr.mxu0 0.0
      %2813 = vmatpush1.msra.mxu0 %v2787
      %2814 = vmatprep.subr.mxu0 0.0
      %2815 = vmatpush1.msra.mxu0 %v2788
      %2816 = vmatprep.subr.mxu0 0.0
      %2817 = vmatpush1.msra.mxu0 %v2789
      %2818 = vmatprep.subr.mxu0 0.0
      %2819 = vmatpush1.msra.mxu0 %v2790
      %2820 = vmatprep.subr.mxu0 0.0
      %2821 = vmatpush1.msra.mxu0 %v2791
      %2822 = vmatprep.subr.mxu0 0.0
      %2823 = vmatpush1.msra.mxu0 %v2792
      %2824 = vmatprep.subr.mxu0 0.0
      %2825 = vmatpush1.msra.mxu0 %v2793
      %2826 = vmatprep.subr.mxu0 0.0
      %2827 = vmatpush1.msra.mxu0 0.0
      %2828 = vmatprep.subr.mxu0 0.0
      %2829 = vmatpush1.msra.mxu0 0.0
      %2830 = vmatprep.subr.mxu0 0.0
      %2831 = vmatpush1.msra.mxu0 0.0
      %2832 = vmatprep.subr.mxu0 0.0
      %2833 = vmatpush1.msra.mxu0 0.0
      %2834 = vmatprep.subr.mxu0 0.0
      %2835 = vmatpush1.msra.mxu0 0.0
      %2836 = vmatprep.subr.mxu0 0.0
      %2837 = vmatpush1.msra.mxu0 0.0
      %2838 = vmatprep.subr.mxu0 0.0
      %2839 = vmatpush1.msra.mxu0 0.0
      %2840 = vmatprep.subr.mxu0 0.0
      %2841 = vmatpush1.msra.mxu0 0.0
      %2842 = vmatprep.subr.mxu0 0.0
      %2843 = vmatpush1.msra.mxu0 0.0
      %2844 = vmatprep.subr.mxu0 0.0
      %2845 = vmatpush1.msra.mxu0 0.0
      %2846 = vmatprep.subr.mxu0 0.0
      %2847 = vmatpush1.msra.mxu0 0.0
      %2848 = vmatprep.subr.mxu0 0.0
      %2849 = vmatpush1.msra.mxu0 0.0
      %2850 = vmatprep.subr.mxu0 0.0
      %2851 = vmatpush1.msra.mxu0 0.0
      %2852 = vmatprep.subr.mxu0 0.0
      %2853 = vmatpush1.msra.mxu0 0.0
      %2854 = vmatprep.subr.mxu0 0.0
      %2855 = vmatpush1.msra.mxu0 0.0
      %2856 = vmatprep.subr.mxu0 0.0
      %2857 = vmatpush1.msra.mxu0 0.0
      %2858 = vmatprep.mubr.f32.mxu0 0.0
      %2859 = vmatmul.mubr.f32.gmra.mrb[0].mxu0 %v2776
      %v2860 = vpop.f32.mrb[0].mxu0
      %v2861 = vadd.f32 0.0, %v2860
      %v2862 = vpop.f32.mrb[0].mxu0
      %2863 = vdwg.mxu0
      %v2864 = vadd.f32 %v2663, %v2861
      %v2865 = vld [vmem:[%s14 + $0x1] sm:$0x1]
      %v2866 = vlaneseq
      %v2867 = vshrl.u32 %v2866, 7
      %v2868 = vsub.s32 0, %v2867
      %v2869 = vrot.slane %v2865, %v2868
      %v2870 = vadd.f32 %v2864, %v2869
      %v2871 = vld [vmem:[%s15] sm:$0x1]
      %v2872 = vld [vmem:[%s16] sm:$0x1]
      %v2873 = vsel %vm708, %v2870, 0.0
      %2874 = vadd.xlane.f32.xlu0 %v2873
      %v2875 = vpop.xlane.xlu0 %2874
      %v2876 = vmul.f32 %v2875, %v712
      %v2877 = vsub.f32 %v2870, %v2876
      %v2878 = vmul.f32 %v2877, %v2877
      %v2879 = vsel %vm708, %v2878, 0.0
      %2880 = vadd.xlane.f32.xlu0 %v2879
      %v2881 = vpop.xlane.xlu0 %2880
      %v2882 = vmul.f32 %v2881, %v712
      %v2883 = vadd.f32 %v2882, 1e-12
      %v2884 = vrsqrt.pop %v2883
      %v2885 = vmul.f32 %v2877, %v2884
      %v2887 = vlaneseq
      %v2888 = vshrl.u32 %v2887, 7
      %v2889 = vsub.s32 0, %v2888
      %v2890 = vrot.slane %v2871, %v2889
      %v2892 = vmul.f32 %v2885, %v2890
      %v2894 = vlaneseq
      %v2895 = vshrl.u32 %v2894, 7
      %v2896 = vsub.s32 0, %v2895
      %v2897 = vrot.slane %v2872, %v2896
      %v2899 = vadd.f32 %v2892, %v2897
      %v2900 = vld [vmem:[%s17] sm:$0xff]
      %v2901 = vld [vmem:[%s17 + $0x8] sm:$0xff]
      %v2902 = vld [vmem:[%s17 + $0x10] sm:$0xff]
      %v2903 = vld [vmem:[%s17 + $0x18] sm:$0xff]
      %v2904 = vld [vmem:[%s18] sm:$0x1]
      %v2906 = vsel %vm708, %v2899, 0
      %2908 = vmatprep.subr.mxu0 0.0
      %2909 = vmatpush1.msra.mxu0 %v2900
      %2910 = vmatprep.subr.mxu0 0.0
      %2911 = vmatpush1.msra.mxu0 %v2901
      %2912 = vmatprep.subr.mxu0 0.0
      %2913 = vmatpush1.msra.mxu0 %v2902
      %2914 = vmatprep.subr.mxu0 0.0
      %2915 = vmatpush1.msra.mxu0 %v2903
      %2916 = vmatprep.subr.mxu0 0.0
      %2917 = vmatpush1.msra.mxu0 0.0
      %2918 = vmatprep.subr.mxu0 0.0
      %2919 = vmatpush1.msra.mxu0 0.0
      %2920 = vmatprep.subr.mxu0 0.0
      %2921 = vmatpush1.msra.mxu0 0.0
      %2922 = vmatprep.subr.mxu0 0.0
      %2923 = vmatpush1.msra.mxu0 0.0
      %2924 = vmatprep.subr.mxu0 0.0
      %2925 = vmatpush1.msra.mxu0 0.0
      %2926 = vmatprep.subr.mxu0 0.0
      %2927 = vmatpush1.msra.mxu0 0.0
      %2928 = vmatprep.subr.mxu0 0.0
      %2929 = vmatpush1.msra.mxu0 0.0
      %2930 = vmatprep.subr.mxu0 0.0
      %2931 = vmatpush1.msra.mxu0 0.0
      %2932 = vmatprep.subr.mxu0 0.0
      %2933 = vmatpush1.msra.mxu0 0.0
      %2934 = vmatprep.subr.mxu0 0.0
      %2935 = vmatpush1.msra.mxu0 0.0
      %2936 = vmatprep.subr.mxu0 0.0
      %2937 = vmatpush1.msra.mxu0 0.0
      %2938 = vmatprep.subr.mxu0 0.0
      %2939 = vmatpush1.msra.mxu0 0.0
      %2940 = vmatprep.subr.mxu0 0.0
      %2941 = vmatpush1.msra.mxu0 0.0
      %2942 = vmatprep.subr.mxu0 0.0
      %2943 = vmatpush1.msra.mxu0 0.0
      %2944 = vmatprep.subr.mxu0 0.0
      %2945 = vmatpush1.msra.mxu0 0.0
      %2946 = vmatprep.subr.mxu0 0.0
      %2947 = vmatpush1.msra.mxu0 0.0
      %2948 = vmatprep.subr.mxu0 0.0
      %2949 = vmatpush1.msra.mxu0 0.0
      %2950 = vmatprep.subr.mxu0 0.0
      %2951 = vmatpush1.msra.mxu0 0.0
      %2952 = vmatprep.subr.mxu0 0.0
      %2953 = vmatpush1.msra.mxu0 0.0
      %2954 = vmatprep.subr.mxu0 0.0
      %2955 = vmatpush1.msra.mxu0 0.0
      %2956 = vmatprep.subr.mxu0 0.0
      %2957 = vmatpush1.msra.mxu0 0.0
      %2958 = vmatprep.subr.mxu0 0.0
      %2959 = vmatpush1.msra.mxu0 0.0
      %2960 = vmatprep.subr.mxu0 0.0
      %2961 = vmatpush1.msra.mxu0 0.0
      %2962 = vmatprep.subr.mxu0 0.0
      %2963 = vmatpush1.msra.mxu0 0.0
      %2964 = vmatprep.subr.mxu0 0.0
      %2965 = vmatpush1.msra.mxu0 0.0
      %2966 = vmatprep.subr.mxu0 0.0
      %2967 = vmatpush1.msra.mxu0 0.0
      %2968 = vmatprep.subr.mxu0 0.0
      %2969 = vmatpush1.msra.mxu0 0.0
      %2970 = vmatprep.subr.mxu0 0.0
      %2971 = vmatpush1.msra.mxu0 0.0
      %2972 = vmatprep.mubr.f32.mxu0 0.0
      %2973 = vmatmul.mubr.f32.gmra.mrb[0].mxu0 %v2906
      %v2974 = vpop.f32.mrb[0].mxu0
      %v2975 = vadd.f32 %v2904, %v2974
      %v2976 = vpop.f32.mrb[0].mxu0
      %2977 = vdwg.mxu0
      %v2978 = vlaneseq
      %v2979 = vshrl.u32 %v2978, 7
      %v2980 = vsub.s32 0, %v2979
      %v2981 = vrot.slane %v2975, %v2980
      %2982 = vst [vmem:[%s600] sm:$0xff] %v2981
      %p2983 = scmp.lt.s32.totalorder %s30, 1
      %s2984 = scalar_select %p2983, %s30, 1
      %s2985 = smul.addr %s2984, 8
      %s2986 = scalar_lea.vmem %s19, %s2985
      // Predicated region
      $region97: #{vit_model_forward.1} parent=95 // pred_check
        %p2987 = pneg %p452
      $region98: #{vit_model_forward.1} parent=95 // pred_check_branch
        %2989 = sbr.rel (%p2987) target = $region100
      $region99: #{vit_model_forward.1} parent=95 // pred_region
        _
      $region100: #{vit_model_forward.1} parent=95 // pred_fallthru
        _
    $region96: #{vit_model_forward.1} parent=5 // pred_fallthru
      _
    %p2990 = scmp.le.s32.totalorder 2, %s25
    // Predicated region
    $region101: #{vit_model_forward.1} parent=5 // pred_check
      %p2991 = pneg %p2990
    $region102: #{vit_model_forward.1} parent=5 // pred_check_branch
      %2993 = sbr.rel (%p2991) target = $region104
    $region103: #{vit_model_forward.1} parent=5 // pred_region
      %s2994 = ssub.s32 %s25, 2
      // Predicated region
      $region105: #{vit_model_forward.1} parent=103 // pred_check
        %p2995 = pneg %p458
      $region106: #{vit_model_forward.1} parent=103 // pred_check_branch
        %2997 = sbr.rel (%p2995) target = $region108
      $region107: #{vit_model_forward.1} parent=103 // pred_region
        %p2998 = scmp.lt.s32.totalorder %s31, 1
        %s2999 = scalar_select %p2998, %s31, 1
        %s3000 = smul.addr %s2999, 8
        %s3001 = scalar_lea.vmem %s19, %s3000
      $region108: #{vit_model_forward.1} parent=103 // pred_fallthru
        _
    $region104: #{vit_model_forward.1} parent=5 // pred_fallthru
      _
  $region6: #{vit_model_forward.1} parent=0 // loop_footer
    %s29 = sadd.s32 1, %s25
  $region7: #{vit_model_forward.1} parent=0 // loop_footer_branch
    %24 = sbr.rel target = $region3
  $region8: #{vit_model_forward.1} parent=0 // loop_exit
    _

</llo_original>
